<compile_context>
chip_gen: v5e
topology: v5e:2x2
jax: 0.10.0
libtpu: 0.0.40
codegen_flags: <defaults>
</compile_context>

<pallas_src>
import jax
import jax.numpy as jnp
from jax.experimental import pallas as pl
from jax.experimental.pallas import tpu as pltpu

NUM_PREDS = 1
NUM_FEAT = 18                       # CFG['num_features_test']
SEQ = NUM_PREDS * NUM_FEAT          # 18
C1 = 12
C2 = 4
POOLED = (NUM_FEAT * C2) // 2       # 36  (Linear input features)
EPS = 1e-5                          # BatchNorm1d default eps

# Offsets into the packed parameter vector (theta), all static.
O_W1, O_B1, O_G1, O_BE1 = 0, 12, 24, 36          # conv1 w/b, bn1 gamma/beta  (12 each)
O_W2 = 48                                        # conv2 weight, row-major (4, 12)
O_B2, O_G2, O_BE2 = 96, 100, 104                 # conv2 bias, bn2 gamma/beta (4 each)
O_BOUT = 108                                     # linear output bias (scalar)
THETA_LEN = 109


def _elu(x):
    # ELU(alpha=1): x if x > 0 else exp(x) - 1   (clamp arg so exp never overflows)
    return jnp.where(x > 0, x, jnp.exp(jnp.minimum(x, 0.0)) - 1.0)


def _sum_all(a):
    # Full (sublane + lane) reduction done in two explicit steps -> (1, 1).
    return jnp.sum(jnp.sum(a, axis=1, keepdims=True), axis=0, keepdims=True)


def student_kernel(theta_ref, x_ref, weff_ref, out_ref):
    """theta: (109,) SMEM; x: (SEQ, B) VMEM; weff: (SEQ, C2) VMEM; out: (1, B) VMEM."""
    xv = x_ref[...]                                   # (SEQ, B), lanes = batch
    batch = xv.shape[1]
    inv_n = 1.0 / float(SEQ * batch)                  # BN divisor (biased variance)

    # ---- Conv1d(1 -> 12, k=1) + ELU: per-channel scalar FMA (scalars from SMEM) ----
    h1 = []
    for c in range(C1):
        a = theta_ref[O_W1 + c] * xv + theta_ref[O_B1 + c]
        h1.append(_elu(a))                            # (SEQ, B) per channel

    # ---- BatchNorm1d(12), training-mode batch stats (one-pass sum / sum-of-squares) ----
    for c in range(C1):
        hc = h1[c]
        s = _sum_all(hc)                              # (1, 1)
        q = _sum_all(hc * hc)                         # (1, 1)
        m = s * inv_n
        v = jnp.maximum(q * inv_n - m * m, 0.0)
        scale = jax.lax.rsqrt(v + EPS) * theta_ref[O_G1 + c]
        shift = theta_ref[O_BE1 + c] - m * scale
        h1[c] = hc * scale + shift

    # ---- Conv1d(12 -> 4, k=1) + ELU: 48 scalar-broadcast VPU FMAs ----
    h2 = []
    for o in range(C2):
        t = theta_ref[O_W2 + o * C1] * h1[0]
        for c in range(1, C1):
            t = t + theta_ref[O_W2 + o * C1 + c] * h1[c]
        h2.append(_elu(t + theta_ref[O_B2 + o]))      # (SEQ, B) per channel

    # ---- BatchNorm1d(4) ----
    for o in range(C2):
        hc = h2[o]
        s = _sum_all(hc)
        q = _sum_all(hc * hc)
        m = s * inv_n
        v = jnp.maximum(q * inv_n - m * m, 0.0)
        scale = jax.lax.rsqrt(v + EPS) * theta_ref[O_G2 + o]
        shift = theta_ref[O_BE2 + o] - m * scale
        h2[o] = hc * scale + shift

    # ---- Flatten -> AvgPool1d(2) -> Linear(36, 1) folded into weff ----
    # out[b] = sum_{o,l} weff[l, o] * h2[o][l, b] + bout   (sublane reduction -> (1, B))
    acc = jnp.sum(h2[0] * weff_ref[:, 0:1], axis=0, keepdims=True)
    for o in range(1, C2):
        acc = acc + jnp.sum(h2[o] * weff_ref[:, o:o + 1], axis=0, keepdims=True)

    out_ref[...] = jax.nn.sigmoid(acc + theta_ref[O_BOUT])   # (1, B), lane-dense


def student_forward(x, params):
    """x: (B, 18) float32 -> (B, 1) float32."""
    B = x.shape[0]
    xt = x.astype(jnp.float32).T                      # (18, B): batch on lanes

    # Pack every tiny per-channel parameter into ONE SMEM-resident vector.
    theta = jnp.concatenate([
        params["conv1_w"][:, 0, 0].reshape(-1),       # (12,)
        params["conv1_b"].reshape(-1),                # (12,)
        params["bn1_g"].reshape(-1),                  # (12,)
        params["bn1_b"].reshape(-1),                  # (12,)
        params["conv2_w"][:, :, 0].reshape(-1),       # (48,) row-major (o, c)
        params["conv2_b"].reshape(-1),                # (4,)
        params["bn2_g"].reshape(-1),                  # (4,)
        params["bn2_b"].reshape(-1),                  # (4,)
        params["out_b"].reshape(-1),                  # (1,)
    ]).astype(jnp.float32)
    assert theta.shape == (THETA_LEN,)

    # Fold Flatten -> AvgPool1d(2) -> Linear(36,1) into a (SEQ, C2) pattern:
    # flattened index f = c*SEQ + l, pooled index f//2 = c*(SEQ//2) + l//2 (SEQ even),
    # so out = sum_{l,c} 0.5 * Wout[c*(SEQ//2) + l//2] * h2[b, c, l] + bout.
    wout = params["out_w"].reshape(POOLED)            # (36,)
    l_idx = jnp.arange(SEQ)
    c_idx = jnp.arange(C2)
    pooled_idx = c_idx[None, :] * (SEQ // 2) + (l_idx[:, None] // 2)   # (SEQ, C2)
    weff = (0.5 * wout[pooled_idx]).astype(jnp.float32)                # (18, 4)

    # VMEM sizing: ~(C1 + C2) live (SEQ, B) tiles plus temporaries, generously padded.
    pad_b = ((B + 127) // 128) * 128
    pad_seq = ((SEQ + 7) // 8) * 8
    est = (C1 + C2 + 16) * pad_seq * pad_b * 4
    vmem_limit = int(min(48 * 1024 * 1024, max(8 * 1024 * 1024, 3 * est)))

    out = pl.pallas_call(
        student_kernel,
        out_shape=jax.ShapeDtypeStruct((1, B), jnp.float32),
        in_specs=[
            pl.BlockSpec(memory_space=pltpu.MemorySpace.SMEM),   # theta (packed scalars)
            pl.BlockSpec(memory_space=pltpu.MemorySpace.VMEM),   # x^T  (SEQ, B)
            pl.BlockSpec(memory_space=pltpu.MemorySpace.VMEM),   # weff (SEQ, C2)
        ],
        out_specs=pl.BlockSpec(memory_space=pltpu.MemorySpace.VMEM),
        compiler_params=pltpu.CompilerParams(vmem_limit_bytes=vmem_limit),
    )(theta, xt, weff)
    return out.reshape(B, 1)


def student_reference(x, params):
    """Pure-JAX reference mirroring the PyTorch module (NCL conv layout)."""
    B = x.shape[0]
    y = x.reshape(B, 1, SEQ)
    w1 = params["conv1_w"][:, :, 0]                   # (12, 1)
    y = jnp.einsum("oi,bil->bol", w1, y) + params["conv1_b"][None, :, None]
    y = jnp.where(y > 0, y, jnp.exp(jnp.minimum(y, 0.0)) - 1.0)
    m = y.mean(axis=(0, 2), keepdims=True)
    v = ((y - m) ** 2).mean(axis=(0, 2), keepdims=True)
    y = (y - m) / jnp.sqrt(v + EPS) * params["bn1_g"][None, :, None] + params["bn1_b"][None, :, None]
    w2 = params["conv2_w"][:, :, 0]                   # (4, 12)
    y = jnp.einsum("oi,bil->bol", w2, y) + params["conv2_b"][None, :, None]
    y = jnp.where(y > 0, y, jnp.exp(jnp.minimum(y, 0.0)) - 1.0)
    m = y.mean(axis=(0, 2), keepdims=True)
    v = ((y - m) ** 2).mean(axis=(0, 2), keepdims=True)
    y = (y - m) / jnp.sqrt(v + EPS) * params["bn2_g"][None, :, None] + params["bn2_b"][None, :, None]
    yf = y.reshape(B, C2 * SEQ)                       # channel-major flatten (B, 72)
    yp = 0.5 * (yf[:, 0::2] + yf[:, 1::2])            # AvgPool1d(2) on (B, 1, 72) -> (B, 36)
    out = yp @ params["out_w"].T + params["out_b"][None, :]
    return jax.nn.sigmoid(out)


def init_params(key):
    ks = jax.random.split(key, 8)
    return {
        "conv1_w": 0.3 * jax.random.normal(ks[0], (C1, 1, NUM_PREDS), jnp.float32),
        "conv1_b": 0.1 * jax.random.normal(ks[1], (C1,), jnp.float32),
        "bn1_g": 1.0 + 0.1 * jax.random.normal(ks[2], (C1,), jnp.float32),
        "bn1_b": 0.1 * jax.random.normal(ks[3], (C1,), jnp.float32),
        "conv2_w": 0.3 * jax.random.normal(ks[4], (C2, C1, 1), jnp.float32),
        "conv2_b": 0.1 * jax.random.normal(ks[5], (C2,), jnp.float32),
        "bn2_g": 1.0 + 0.1 * jax.random.normal(ks[6], (C2,), jnp.float32),
        "bn2_b": jnp.zeros((C2,), jnp.float32),
        "out_w": 0.3 * jax.random.normal(ks[7], (1, POOLED), jnp.float32),
        "out_b": jnp.zeros((1,), jnp.float32),
    }


if __name__ == "__main__":
    key = jax.random.PRNGKey(0)
    k_param, k_x = jax.random.split(key)
    params = init_params(k_param)

    B = 8
    x = jax.random.normal(k_x, (B, NUM_PREDS * NUM_FEAT), jnp.float32)   # (8, 18)

    out = student_forward(x, params)
    out = jax.block_until_ready(out)

    ref = student_reference(x, params)
    assert out.shape == (B, 1)
    assert jnp.allclose(out, ref, rtol=1e-4, atol=1e-5), (out, ref)
    print("KERNEL_OK")
</pallas_src>

<mosaic_0001>
module attributes {stable_mosaic.version = 11 : i64} {
  func.func @student_kernel(%arg0: memref<109xf32, #tpu.memory_space<smem>>, %arg1: memref<18x8xf32, #tpu.memory_space<vmem>>, %arg2: memref<18x4xf32, #tpu.memory_space<vmem>>, %arg3: memref<1x8xf32, #tpu.memory_space<vmem>>) attributes {dimension_semantics = [], scalar_prefetch = 0 : i64, scratch_operands = 0 : i64, tpu.core_type = #tpu.core_type<tc>} {
    %c0 = arith.constant 0 : index
    %c0_0 = arith.constant 0 : index
    %0 = vector.load %arg1[%c0, %c0_0] : memref<18x8xf32, #tpu.memory_space<vmem>>, vector<18x8xf32>
    %c0_1 = arith.constant 0 : index
    %1 = memref.load %arg0[%c0_1] : memref<109xf32, #tpu.memory_space<smem>>
    %2 = vector.broadcast %1 : f32 to vector<18x8xf32>
    %3 = arith.mulf %2, %0 : vector<18x8xf32>
    %c12 = arith.constant 12 : index
    %4 = memref.load %arg0[%c12] : memref<109xf32, #tpu.memory_space<smem>>
    %5 = vector.broadcast %4 : f32 to vector<18x8xf32>
    %6 = arith.addf %3, %5 : vector<18x8xf32>
    %cst = arith.constant 0.000000e+00 : f32
    %7 = vector.broadcast %cst : f32 to vector<18x8xf32>
    %8 = arith.cmpf ogt, %6, %7 : vector<18x8xf32>
    %cst_2 = arith.constant 0.000000e+00 : f32
    %9 = vector.broadcast %cst_2 : f32 to vector<18x8xf32>
    %10 = arith.minimumf %6, %9 : vector<18x8xf32>
    %11 = math.exp %10 : vector<18x8xf32>
    %cst_3 = arith.constant 1.000000e+00 : f32
    %12 = vector.broadcast %cst_3 : f32 to vector<18x8xf32>
    %13 = arith.subf %11, %12 : vector<18x8xf32>
    %14 = arith.select %8, %6, %13 : vector<18x8xi1>, vector<18x8xf32>
    %c1 = arith.constant 1 : index
    %15 = memref.load %arg0[%c1] : memref<109xf32, #tpu.memory_space<smem>>
    %16 = vector.broadcast %15 : f32 to vector<18x8xf32>
    %17 = arith.mulf %16, %0 : vector<18x8xf32>
    %c13 = arith.constant 13 : index
    %18 = memref.load %arg0[%c13] : memref<109xf32, #tpu.memory_space<smem>>
    %19 = vector.broadcast %18 : f32 to vector<18x8xf32>
    %20 = arith.addf %17, %19 : vector<18x8xf32>
    %cst_4 = arith.constant 0.000000e+00 : f32
    %21 = vector.broadcast %cst_4 : f32 to vector<18x8xf32>
    %22 = arith.cmpf ogt, %20, %21 : vector<18x8xf32>
    %cst_5 = arith.constant 0.000000e+00 : f32
    %23 = vector.broadcast %cst_5 : f32 to vector<18x8xf32>
    %24 = arith.minimumf %20, %23 : vector<18x8xf32>
    %25 = math.exp %24 : vector<18x8xf32>
    %cst_6 = arith.constant 1.000000e+00 : f32
    %26 = vector.broadcast %cst_6 : f32 to vector<18x8xf32>
    %27 = arith.subf %25, %26 : vector<18x8xf32>
    %28 = arith.select %22, %20, %27 : vector<18x8xi1>, vector<18x8xf32>
    %c2 = arith.constant 2 : index
    %29 = memref.load %arg0[%c2] : memref<109xf32, #tpu.memory_space<smem>>
    %30 = vector.broadcast %29 : f32 to vector<18x8xf32>
    %31 = arith.mulf %30, %0 : vector<18x8xf32>
    %c14 = arith.constant 14 : index
    %32 = memref.load %arg0[%c14] : memref<109xf32, #tpu.memory_space<smem>>
    %33 = vector.broadcast %32 : f32 to vector<18x8xf32>
    %34 = arith.addf %31, %33 : vector<18x8xf32>
    %cst_7 = arith.constant 0.000000e+00 : f32
    %35 = vector.broadcast %cst_7 : f32 to vector<18x8xf32>
    %36 = arith.cmpf ogt, %34, %35 : vector<18x8xf32>
    %cst_8 = arith.constant 0.000000e+00 : f32
    %37 = vector.broadcast %cst_8 : f32 to vector<18x8xf32>
    %38 = arith.minimumf %34, %37 : vector<18x8xf32>
    %39 = math.exp %38 : vector<18x8xf32>
    %cst_9 = arith.constant 1.000000e+00 : f32
    %40 = vector.broadcast %cst_9 : f32 to vector<18x8xf32>
    %41 = arith.subf %39, %40 : vector<18x8xf32>
    %42 = arith.select %36, %34, %41 : vector<18x8xi1>, vector<18x8xf32>
    %c3 = arith.constant 3 : index
    %43 = memref.load %arg0[%c3] : memref<109xf32, #tpu.memory_space<smem>>
    %44 = vector.broadcast %43 : f32 to vector<18x8xf32>
    %45 = arith.mulf %44, %0 : vector<18x8xf32>
    %c15 = arith.constant 15 : index
    %46 = memref.load %arg0[%c15] : memref<109xf32, #tpu.memory_space<smem>>
    %47 = vector.broadcast %46 : f32 to vector<18x8xf32>
    %48 = arith.addf %45, %47 : vector<18x8xf32>
    %cst_10 = arith.constant 0.000000e+00 : f32
    %49 = vector.broadcast %cst_10 : f32 to vector<18x8xf32>
    %50 = arith.cmpf ogt, %48, %49 : vector<18x8xf32>
    %cst_11 = arith.constant 0.000000e+00 : f32
    %51 = vector.broadcast %cst_11 : f32 to vector<18x8xf32>
    %52 = arith.minimumf %48, %51 : vector<18x8xf32>
    %53 = math.exp %52 : vector<18x8xf32>
    %cst_12 = arith.constant 1.000000e+00 : f32
    %54 = vector.broadcast %cst_12 : f32 to vector<18x8xf32>
    %55 = arith.subf %53, %54 : vector<18x8xf32>
    %56 = arith.select %50, %48, %55 : vector<18x8xi1>, vector<18x8xf32>
    %c4 = arith.constant 4 : index
    %57 = memref.load %arg0[%c4] : memref<109xf32, #tpu.memory_space<smem>>
    %58 = vector.broadcast %57 : f32 to vector<18x8xf32>
    %59 = arith.mulf %58, %0 : vector<18x8xf32>
    %c16 = arith.constant 16 : index
    %60 = memref.load %arg0[%c16] : memref<109xf32, #tpu.memory_space<smem>>
    %61 = vector.broadcast %60 : f32 to vector<18x8xf32>
    %62 = arith.addf %59, %61 : vector<18x8xf32>
    %cst_13 = arith.constant 0.000000e+00 : f32
    %63 = vector.broadcast %cst_13 : f32 to vector<18x8xf32>
    %64 = arith.cmpf ogt, %62, %63 : vector<18x8xf32>
    %cst_14 = arith.constant 0.000000e+00 : f32
    %65 = vector.broadcast %cst_14 : f32 to vector<18x8xf32>
    %66 = arith.minimumf %62, %65 : vector<18x8xf32>
    %67 = math.exp %66 : vector<18x8xf32>
    %cst_15 = arith.constant 1.000000e+00 : f32
    %68 = vector.broadcast %cst_15 : f32 to vector<18x8xf32>
    %69 = arith.subf %67, %68 : vector<18x8xf32>
    %70 = arith.select %64, %62, %69 : vector<18x8xi1>, vector<18x8xf32>
    %c5 = arith.constant 5 : index
    %71 = memref.load %arg0[%c5] : memref<109xf32, #tpu.memory_space<smem>>
    %72 = vector.broadcast %71 : f32 to vector<18x8xf32>
    %73 = arith.mulf %72, %0 : vector<18x8xf32>
    %c17 = arith.constant 17 : index
    %74 = memref.load %arg0[%c17] : memref<109xf32, #tpu.memory_space<smem>>
    %75 = vector.broadcast %74 : f32 to vector<18x8xf32>
    %76 = arith.addf %73, %75 : vector<18x8xf32>
    %cst_16 = arith.constant 0.000000e+00 : f32
    %77 = vector.broadcast %cst_16 : f32 to vector<18x8xf32>
    %78 = arith.cmpf ogt, %76, %77 : vector<18x8xf32>
    %cst_17 = arith.constant 0.000000e+00 : f32
    %79 = vector.broadcast %cst_17 : f32 to vector<18x8xf32>
    %80 = arith.minimumf %76, %79 : vector<18x8xf32>
    %81 = math.exp %80 : vector<18x8xf32>
    %cst_18 = arith.constant 1.000000e+00 : f32
    %82 = vector.broadcast %cst_18 : f32 to vector<18x8xf32>
    %83 = arith.subf %81, %82 : vector<18x8xf32>
    %84 = arith.select %78, %76, %83 : vector<18x8xi1>, vector<18x8xf32>
    %c6 = arith.constant 6 : index
    %85 = memref.load %arg0[%c6] : memref<109xf32, #tpu.memory_space<smem>>
    %86 = vector.broadcast %85 : f32 to vector<18x8xf32>
    %87 = arith.mulf %86, %0 : vector<18x8xf32>
    %c18 = arith.constant 18 : index
    %88 = memref.load %arg0[%c18] : memref<109xf32, #tpu.memory_space<smem>>
    %89 = vector.broadcast %88 : f32 to vector<18x8xf32>
    %90 = arith.addf %87, %89 : vector<18x8xf32>
    %cst_19 = arith.constant 0.000000e+00 : f32
    %91 = vector.broadcast %cst_19 : f32 to vector<18x8xf32>
    %92 = arith.cmpf ogt, %90, %91 : vector<18x8xf32>
    %cst_20 = arith.constant 0.000000e+00 : f32
    %93 = vector.broadcast %cst_20 : f32 to vector<18x8xf32>
    %94 = arith.minimumf %90, %93 : vector<18x8xf32>
    %95 = math.exp %94 : vector<18x8xf32>
    %cst_21 = arith.constant 1.000000e+00 : f32
    %96 = vector.broadcast %cst_21 : f32 to vector<18x8xf32>
    %97 = arith.subf %95, %96 : vector<18x8xf32>
    %98 = arith.select %92, %90, %97 : vector<18x8xi1>, vector<18x8xf32>
    %c7 = arith.constant 7 : index
    %99 = memref.load %arg0[%c7] : memref<109xf32, #tpu.memory_space<smem>>
    %100 = vector.broadcast %99 : f32 to vector<18x8xf32>
    %101 = arith.mulf %100, %0 : vector<18x8xf32>
    %c19 = arith.constant 19 : index
    %102 = memref.load %arg0[%c19] : memref<109xf32, #tpu.memory_space<smem>>
    %103 = vector.broadcast %102 : f32 to vector<18x8xf32>
    %104 = arith.addf %101, %103 : vector<18x8xf32>
    %cst_22 = arith.constant 0.000000e+00 : f32
    %105 = vector.broadcast %cst_22 : f32 to vector<18x8xf32>
    %106 = arith.cmpf ogt, %104, %105 : vector<18x8xf32>
    %cst_23 = arith.constant 0.000000e+00 : f32
    %107 = vector.broadcast %cst_23 : f32 to vector<18x8xf32>
    %108 = arith.minimumf %104, %107 : vector<18x8xf32>
    %109 = math.exp %108 : vector<18x8xf32>
    %cst_24 = arith.constant 1.000000e+00 : f32
    %110 = vector.broadcast %cst_24 : f32 to vector<18x8xf32>
    %111 = arith.subf %109, %110 : vector<18x8xf32>
    %112 = arith.select %106, %104, %111 : vector<18x8xi1>, vector<18x8xf32>
    %c8 = arith.constant 8 : index
    %113 = memref.load %arg0[%c8] : memref<109xf32, #tpu.memory_space<smem>>
    %114 = vector.broadcast %113 : f32 to vector<18x8xf32>
    %115 = arith.mulf %114, %0 : vector<18x8xf32>
    %c20 = arith.constant 20 : index
    %116 = memref.load %arg0[%c20] : memref<109xf32, #tpu.memory_space<smem>>
    %117 = vector.broadcast %116 : f32 to vector<18x8xf32>
    %118 = arith.addf %115, %117 : vector<18x8xf32>
    %cst_25 = arith.constant 0.000000e+00 : f32
    %119 = vector.broadcast %cst_25 : f32 to vector<18x8xf32>
    %120 = arith.cmpf ogt, %118, %119 : vector<18x8xf32>
    %cst_26 = arith.constant 0.000000e+00 : f32
    %121 = vector.broadcast %cst_26 : f32 to vector<18x8xf32>
    %122 = arith.minimumf %118, %121 : vector<18x8xf32>
    %123 = math.exp %122 : vector<18x8xf32>
    %cst_27 = arith.constant 1.000000e+00 : f32
    %124 = vector.broadcast %cst_27 : f32 to vector<18x8xf32>
    %125 = arith.subf %123, %124 : vector<18x8xf32>
    %126 = arith.select %120, %118, %125 : vector<18x8xi1>, vector<18x8xf32>
    %c9 = arith.constant 9 : index
    %127 = memref.load %arg0[%c9] : memref<109xf32, #tpu.memory_space<smem>>
    %128 = vector.broadcast %127 : f32 to vector<18x8xf32>
    %129 = arith.mulf %128, %0 : vector<18x8xf32>
    %c21 = arith.constant 21 : index
    %130 = memref.load %arg0[%c21] : memref<109xf32, #tpu.memory_space<smem>>
    %131 = vector.broadcast %130 : f32 to vector<18x8xf32>
    %132 = arith.addf %129, %131 : vector<18x8xf32>
    %cst_28 = arith.constant 0.000000e+00 : f32
    %133 = vector.broadcast %cst_28 : f32 to vector<18x8xf32>
    %134 = arith.cmpf ogt, %132, %133 : vector<18x8xf32>
    %cst_29 = arith.constant 0.000000e+00 : f32
    %135 = vector.broadcast %cst_29 : f32 to vector<18x8xf32>
    %136 = arith.minimumf %132, %135 : vector<18x8xf32>
    %137 = math.exp %136 : vector<18x8xf32>
    %cst_30 = arith.constant 1.000000e+00 : f32
    %138 = vector.broadcast %cst_30 : f32 to vector<18x8xf32>
    %139 = arith.subf %137, %138 : vector<18x8xf32>
    %140 = arith.select %134, %132, %139 : vector<18x8xi1>, vector<18x8xf32>
    %c10 = arith.constant 10 : index
    %141 = memref.load %arg0[%c10] : memref<109xf32, #tpu.memory_space<smem>>
    %142 = vector.broadcast %141 : f32 to vector<18x8xf32>
    %143 = arith.mulf %142, %0 : vector<18x8xf32>
    %c22 = arith.constant 22 : index
    %144 = memref.load %arg0[%c22] : memref<109xf32, #tpu.memory_space<smem>>
    %145 = vector.broadcast %144 : f32 to vector<18x8xf32>
    %146 = arith.addf %143, %145 : vector<18x8xf32>
    %cst_31 = arith.constant 0.000000e+00 : f32
    %147 = vector.broadcast %cst_31 : f32 to vector<18x8xf32>
    %148 = arith.cmpf ogt, %146, %147 : vector<18x8xf32>
    %cst_32 = arith.constant 0.000000e+00 : f32
    %149 = vector.broadcast %cst_32 : f32 to vector<18x8xf32>
    %150 = arith.minimumf %146, %149 : vector<18x8xf32>
    %151 = math.exp %150 : vector<18x8xf32>
    %cst_33 = arith.constant 1.000000e+00 : f32
    %152 = vector.broadcast %cst_33 : f32 to vector<18x8xf32>
    %153 = arith.subf %151, %152 : vector<18x8xf32>
    %154 = arith.select %148, %146, %153 : vector<18x8xi1>, vector<18x8xf32>
    %c11 = arith.constant 11 : index
    %155 = memref.load %arg0[%c11] : memref<109xf32, #tpu.memory_space<smem>>
    %156 = vector.broadcast %155 : f32 to vector<18x8xf32>
    %157 = arith.mulf %156, %0 : vector<18x8xf32>
    %c23 = arith.constant 23 : index
    %158 = memref.load %arg0[%c23] : memref<109xf32, #tpu.memory_space<smem>>
    %159 = vector.broadcast %158 : f32 to vector<18x8xf32>
    %160 = arith.addf %157, %159 : vector<18x8xf32>
    %cst_34 = arith.constant 0.000000e+00 : f32
    %161 = vector.broadcast %cst_34 : f32 to vector<18x8xf32>
    %162 = arith.cmpf ogt, %160, %161 : vector<18x8xf32>
    %cst_35 = arith.constant 0.000000e+00 : f32
    %163 = vector.broadcast %cst_35 : f32 to vector<18x8xf32>
    %164 = arith.minimumf %160, %163 : vector<18x8xf32>
    %165 = math.exp %164 : vector<18x8xf32>
    %cst_36 = arith.constant 1.000000e+00 : f32
    %166 = vector.broadcast %cst_36 : f32 to vector<18x8xf32>
    %167 = arith.subf %165, %166 : vector<18x8xf32>
    %168 = arith.select %162, %160, %167 : vector<18x8xi1>, vector<18x8xf32>
    %cst_37 = arith.constant dense<0.000000e+00> : vector<18xf32>
    %169 = vector.multi_reduction <add>, %14, %cst_37 [1] : vector<18x8xf32> to vector<18xf32>
    %170 = vector.shape_cast %169 : vector<18xf32> to vector<18x1xf32>
    %cst_38 = arith.constant dense<0.000000e+00> : vector<1xf32>
    %171 = vector.multi_reduction <add>, %170, %cst_38 [0] : vector<18x1xf32> to vector<1xf32>
    %172 = vector.shape_cast %171 : vector<1xf32> to vector<1x1xf32>
    %173 = arith.mulf %14, %14 : vector<18x8xf32>
    %cst_39 = arith.constant dense<0.000000e+00> : vector<18xf32>
    %174 = vector.multi_reduction <add>, %173, %cst_39 [1] : vector<18x8xf32> to vector<18xf32>
    %175 = vector.shape_cast %174 : vector<18xf32> to vector<18x1xf32>
    %cst_40 = arith.constant dense<0.000000e+00> : vector<1xf32>
    %176 = vector.multi_reduction <add>, %175, %cst_40 [0] : vector<18x1xf32> to vector<1xf32>
    %177 = vector.shape_cast %176 : vector<1xf32> to vector<1x1xf32>
    %cst_41 = arith.constant 0.0069444445 : f32
    %178 = vector.broadcast %cst_41 : f32 to vector<1x1xf32>
    %179 = arith.mulf %172, %178 : vector<1x1xf32>
    %cst_42 = arith.constant 0.0069444445 : f32
    %180 = vector.broadcast %cst_42 : f32 to vector<1x1xf32>
    %181 = arith.mulf %177, %180 : vector<1x1xf32>
    %182 = arith.mulf %179, %179 : vector<1x1xf32>
    %183 = arith.subf %181, %182 : vector<1x1xf32>
    %cst_43 = arith.constant 0.000000e+00 : f32
    %184 = vector.broadcast %cst_43 : f32 to vector<1x1xf32>
    %185 = arith.maximumf %183, %184 : vector<1x1xf32>
    %cst_44 = arith.constant 9.99999974E-6 : f32
    %186 = vector.broadcast %cst_44 : f32 to vector<1x1xf32>
    %187 = arith.addf %185, %186 : vector<1x1xf32>
    %188 = math.rsqrt %187 : vector<1x1xf32>
    %c24 = arith.constant 24 : index
    %189 = memref.load %arg0[%c24] : memref<109xf32, #tpu.memory_space<smem>>
    %190 = vector.broadcast %189 : f32 to vector<1x1xf32>
    %191 = arith.mulf %188, %190 : vector<1x1xf32>
    %c36 = arith.constant 36 : index
    %192 = memref.load %arg0[%c36] : memref<109xf32, #tpu.memory_space<smem>>
    %193 = arith.mulf %179, %191 : vector<1x1xf32>
    %194 = vector.broadcast %192 : f32 to vector<1x1xf32>
    %195 = arith.subf %194, %193 : vector<1x1xf32>
    %196 = vector.broadcast %191 : vector<1x1xf32> to vector<18x8xf32>
    %197 = arith.mulf %14, %196 : vector<18x8xf32>
    %198 = vector.broadcast %195 : vector<1x1xf32> to vector<18x8xf32>
    %199 = arith.addf %197, %198 : vector<18x8xf32>
    %cst_45 = arith.constant dense<0.000000e+00> : vector<18xf32>
    %200 = vector.multi_reduction <add>, %28, %cst_45 [1] : vector<18x8xf32> to vector<18xf32>
    %201 = vector.shape_cast %200 : vector<18xf32> to vector<18x1xf32>
    %cst_46 = arith.constant dense<0.000000e+00> : vector<1xf32>
    %202 = vector.multi_reduction <add>, %201, %cst_46 [0] : vector<18x1xf32> to vector<1xf32>
    %203 = vector.shape_cast %202 : vector<1xf32> to vector<1x1xf32>
    %204 = arith.mulf %28, %28 : vector<18x8xf32>
    %cst_47 = arith.constant dense<0.000000e+00> : vector<18xf32>
    %205 = vector.multi_reduction <add>, %204, %cst_47 [1] : vector<18x8xf32> to vector<18xf32>
    %206 = vector.shape_cast %205 : vector<18xf32> to vector<18x1xf32>
    %cst_48 = arith.constant dense<0.000000e+00> : vector<1xf32>
    %207 = vector.multi_reduction <add>, %206, %cst_48 [0] : vector<18x1xf32> to vector<1xf32>
    %208 = vector.shape_cast %207 : vector<1xf32> to vector<1x1xf32>
    %cst_49 = arith.constant 0.0069444445 : f32
    %209 = vector.broadcast %cst_49 : f32 to vector<1x1xf32>
    %210 = arith.mulf %203, %209 : vector<1x1xf32>
    %cst_50 = arith.constant 0.0069444445 : f32
    %211 = vector.broadcast %cst_50 : f32 to vector<1x1xf32>
    %212 = arith.mulf %208, %211 : vector<1x1xf32>
    %213 = arith.mulf %210, %210 : vector<1x1xf32>
    %214 = arith.subf %212, %213 : vector<1x1xf32>
    %cst_51 = arith.constant 0.000000e+00 : f32
    %215 = vector.broadcast %cst_51 : f32 to vector<1x1xf32>
    %216 = arith.maximumf %214, %215 : vector<1x1xf32>
    %cst_52 = arith.constant 9.99999974E-6 : f32
    %217 = vector.broadcast %cst_52 : f32 to vector<1x1xf32>
    %218 = arith.addf %216, %217 : vector<1x1xf32>
    %219 = math.rsqrt %218 : vector<1x1xf32>
    %c25 = arith.constant 25 : index
    %220 = memref.load %arg0[%c25] : memref<109xf32, #tpu.memory_space<smem>>
    %221 = vector.broadcast %220 : f32 to vector<1x1xf32>
    %222 = arith.mulf %219, %221 : vector<1x1xf32>
    %c37 = arith.constant 37 : index
    %223 = memref.load %arg0[%c37] : memref<109xf32, #tpu.memory_space<smem>>
    %224 = arith.mulf %210, %222 : vector<1x1xf32>
    %225 = vector.broadcast %223 : f32 to vector<1x1xf32>
    %226 = arith.subf %225, %224 : vector<1x1xf32>
    %227 = vector.broadcast %222 : vector<1x1xf32> to vector<18x8xf32>
    %228 = arith.mulf %28, %227 : vector<18x8xf32>
    %229 = vector.broadcast %226 : vector<1x1xf32> to vector<18x8xf32>
    %230 = arith.addf %228, %229 : vector<18x8xf32>
    %cst_53 = arith.constant dense<0.000000e+00> : vector<18xf32>
    %231 = vector.multi_reduction <add>, %42, %cst_53 [1] : vector<18x8xf32> to vector<18xf32>
    %232 = vector.shape_cast %231 : vector<18xf32> to vector<18x1xf32>
    %cst_54 = arith.constant dense<0.000000e+00> : vector<1xf32>
    %233 = vector.multi_reduction <add>, %232, %cst_54 [0] : vector<18x1xf32> to vector<1xf32>
    %234 = vector.shape_cast %233 : vector<1xf32> to vector<1x1xf32>
    %235 = arith.mulf %42, %42 : vector<18x8xf32>
    %cst_55 = arith.constant dense<0.000000e+00> : vector<18xf32>
    %236 = vector.multi_reduction <add>, %235, %cst_55 [1] : vector<18x8xf32> to vector<18xf32>
    %237 = vector.shape_cast %236 : vector<18xf32> to vector<18x1xf32>
    %cst_56 = arith.constant dense<0.000000e+00> : vector<1xf32>
    %238 = vector.multi_reduction <add>, %237, %cst_56 [0] : vector<18x1xf32> to vector<1xf32>
    %239 = vector.shape_cast %238 : vector<1xf32> to vector<1x1xf32>
    %cst_57 = arith.constant 0.0069444445 : f32
    %240 = vector.broadcast %cst_57 : f32 to vector<1x1xf32>
    %241 = arith.mulf %234, %240 : vector<1x1xf32>
    %cst_58 = arith.constant 0.0069444445 : f32
    %242 = vector.broadcast %cst_58 : f32 to vector<1x1xf32>
    %243 = arith.mulf %239, %242 : vector<1x1xf32>
    %244 = arith.mulf %241, %241 : vector<1x1xf32>
    %245 = arith.subf %243, %244 : vector<1x1xf32>
    %cst_59 = arith.constant 0.000000e+00 : f32
    %246 = vector.broadcast %cst_59 : f32 to vector<1x1xf32>
    %247 = arith.maximumf %245, %246 : vector<1x1xf32>
    %cst_60 = arith.constant 9.99999974E-6 : f32
    %248 = vector.broadcast %cst_60 : f32 to vector<1x1xf32>
    %249 = arith.addf %247, %248 : vector<1x1xf32>
    %250 = math.rsqrt %249 : vector<1x1xf32>
    %c26 = arith.constant 26 : index
    %251 = memref.load %arg0[%c26] : memref<109xf32, #tpu.memory_space<smem>>
    %252 = vector.broadcast %251 : f32 to vector<1x1xf32>
    %253 = arith.mulf %250, %252 : vector<1x1xf32>
    %c38 = arith.constant 38 : index
    %254 = memref.load %arg0[%c38] : memref<109xf32, #tpu.memory_space<smem>>
    %255 = arith.mulf %241, %253 : vector<1x1xf32>
    %256 = vector.broadcast %254 : f32 to vector<1x1xf32>
    %257 = arith.subf %256, %255 : vector<1x1xf32>
    %258 = vector.broadcast %253 : vector<1x1xf32> to vector<18x8xf32>
    %259 = arith.mulf %42, %258 : vector<18x8xf32>
    %260 = vector.broadcast %257 : vector<1x1xf32> to vector<18x8xf32>
    %261 = arith.addf %259, %260 : vector<18x8xf32>
    %cst_61 = arith.constant dense<0.000000e+00> : vector<18xf32>
    %262 = vector.multi_reduction <add>, %56, %cst_61 [1] : vector<18x8xf32> to vector<18xf32>
    %263 = vector.shape_cast %262 : vector<18xf32> to vector<18x1xf32>
    %cst_62 = arith.constant dense<0.000000e+00> : vector<1xf32>
    %264 = vector.multi_reduction <add>, %263, %cst_62 [0] : vector<18x1xf32> to vector<1xf32>
    %265 = vector.shape_cast %264 : vector<1xf32> to vector<1x1xf32>
    %266 = arith.mulf %56, %56 : vector<18x8xf32>
    %cst_63 = arith.constant dense<0.000000e+00> : vector<18xf32>
    %267 = vector.multi_reduction <add>, %266, %cst_63 [1] : vector<18x8xf32> to vector<18xf32>
    %268 = vector.shape_cast %267 : vector<18xf32> to vector<18x1xf32>
    %cst_64 = arith.constant dense<0.000000e+00> : vector<1xf32>
    %269 = vector.multi_reduction <add>, %268, %cst_64 [0] : vector<18x1xf32> to vector<1xf32>
    %270 = vector.shape_cast %269 : vector<1xf32> to vector<1x1xf32>
    %cst_65 = arith.constant 0.0069444445 : f32
    %271 = vector.broadcast %cst_65 : f32 to vector<1x1xf32>
    %272 = arith.mulf %265, %271 : vector<1x1xf32>
    %cst_66 = arith.constant 0.0069444445 : f32
    %273 = vector.broadcast %cst_66 : f32 to vector<1x1xf32>
    %274 = arith.mulf %270, %273 : vector<1x1xf32>
    %275 = arith.mulf %272, %272 : vector<1x1xf32>
    %276 = arith.subf %274, %275 : vector<1x1xf32>
    %cst_67 = arith.constant 0.000000e+00 : f32
    %277 = vector.broadcast %cst_67 : f32 to vector<1x1xf32>
    %278 = arith.maximumf %276, %277 : vector<1x1xf32>
    %cst_68 = arith.constant 9.99999974E-6 : f32
    %279 = vector.broadcast %cst_68 : f32 to vector<1x1xf32>
    %280 = arith.addf %278, %279 : vector<1x1xf32>
    %281 = math.rsqrt %280 : vector<1x1xf32>
    %c27 = arith.constant 27 : index
    %282 = memref.load %arg0[%c27] : memref<109xf32, #tpu.memory_space<smem>>
    %283 = vector.broadcast %282 : f32 to vector<1x1xf32>
    %284 = arith.mulf %281, %283 : vector<1x1xf32>
    %c39 = arith.constant 39 : index
    %285 = memref.load %arg0[%c39] : memref<109xf32, #tpu.memory_space<smem>>
    %286 = arith.mulf %272, %284 : vector<1x1xf32>
    %287 = vector.broadcast %285 : f32 to vector<1x1xf32>
    %288 = arith.subf %287, %286 : vector<1x1xf32>
    %289 = vector.broadcast %284 : vector<1x1xf32> to vector<18x8xf32>
    %290 = arith.mulf %56, %289 : vector<18x8xf32>
    %291 = vector.broadcast %288 : vector<1x1xf32> to vector<18x8xf32>
    %292 = arith.addf %290, %291 : vector<18x8xf32>
    %cst_69 = arith.constant dense<0.000000e+00> : vector<18xf32>
    %293 = vector.multi_reduction <add>, %70, %cst_69 [1] : vector<18x8xf32> to vector<18xf32>
    %294 = vector.shape_cast %293 : vector<18xf32> to vector<18x1xf32>
    %cst_70 = arith.constant dense<0.000000e+00> : vector<1xf32>
    %295 = vector.multi_reduction <add>, %294, %cst_70 [0] : vector<18x1xf32> to vector<1xf32>
    %296 = vector.shape_cast %295 : vector<1xf32> to vector<1x1xf32>
    %297 = arith.mulf %70, %70 : vector<18x8xf32>
    %cst_71 = arith.constant dense<0.000000e+00> : vector<18xf32>
    %298 = vector.multi_reduction <add>, %297, %cst_71 [1] : vector<18x8xf32> to vector<18xf32>
    %299 = vector.shape_cast %298 : vector<18xf32> to vector<18x1xf32>
    %cst_72 = arith.constant dense<0.000000e+00> : vector<1xf32>
    %300 = vector.multi_reduction <add>, %299, %cst_72 [0] : vector<18x1xf32> to vector<1xf32>
    %301 = vector.shape_cast %300 : vector<1xf32> to vector<1x1xf32>
    %cst_73 = arith.constant 0.0069444445 : f32
    %302 = vector.broadcast %cst_73 : f32 to vector<1x1xf32>
    %303 = arith.mulf %296, %302 : vector<1x1xf32>
    %cst_74 = arith.constant 0.0069444445 : f32
    %304 = vector.broadcast %cst_74 : f32 to vector<1x1xf32>
    %305 = arith.mulf %301, %304 : vector<1x1xf32>
    %306 = arith.mulf %303, %303 : vector<1x1xf32>
    %307 = arith.subf %305, %306 : vector<1x1xf32>
    %cst_75 = arith.constant 0.000000e+00 : f32
    %308 = vector.broadcast %cst_75 : f32 to vector<1x1xf32>
    %309 = arith.maximumf %307, %308 : vector<1x1xf32>
    %cst_76 = arith.constant 9.99999974E-6 : f32
    %310 = vector.broadcast %cst_76 : f32 to vector<1x1xf32>
    %311 = arith.addf %309, %310 : vector<1x1xf32>
    %312 = math.rsqrt %311 : vector<1x1xf32>
    %c28 = arith.constant 28 : index
    %313 = memref.load %arg0[%c28] : memref<109xf32, #tpu.memory_space<smem>>
    %314 = vector.broadcast %313 : f32 to vector<1x1xf32>
    %315 = arith.mulf %312, %314 : vector<1x1xf32>
    %c40 = arith.constant 40 : index
    %316 = memref.load %arg0[%c40] : memref<109xf32, #tpu.memory_space<smem>>
    %317 = arith.mulf %303, %315 : vector<1x1xf32>
    %318 = vector.broadcast %316 : f32 to vector<1x1xf32>
    %319 = arith.subf %318, %317 : vector<1x1xf32>
    %320 = vector.broadcast %315 : vector<1x1xf32> to vector<18x8xf32>
    %321 = arith.mulf %70, %320 : vector<18x8xf32>
    %322 = vector.broadcast %319 : vector<1x1xf32> to vector<18x8xf32>
    %323 = arith.addf %321, %322 : vector<18x8xf32>
    %cst_77 = arith.constant dense<0.000000e+00> : vector<18xf32>
    %324 = vector.multi_reduction <add>, %84, %cst_77 [1] : vector<18x8xf32> to vector<18xf32>
    %325 = vector.shape_cast %324 : vector<18xf32> to vector<18x1xf32>
    %cst_78 = arith.constant dense<0.000000e+00> : vector<1xf32>
    %326 = vector.multi_reduction <add>, %325, %cst_78 [0] : vector<18x1xf32> to vector<1xf32>
    %327 = vector.shape_cast %326 : vector<1xf32> to vector<1x1xf32>
    %328 = arith.mulf %84, %84 : vector<18x8xf32>
    %cst_79 = arith.constant dense<0.000000e+00> : vector<18xf32>
    %329 = vector.multi_reduction <add>, %328, %cst_79 [1] : vector<18x8xf32> to vector<18xf32>
    %330 = vector.shape_cast %329 : vector<18xf32> to vector<18x1xf32>
    %cst_80 = arith.constant dense<0.000000e+00> : vector<1xf32>
    %331 = vector.multi_reduction <add>, %330, %cst_80 [0] : vector<18x1xf32> to vector<1xf32>
    %332 = vector.shape_cast %331 : vector<1xf32> to vector<1x1xf32>
    %cst_81 = arith.constant 0.0069444445 : f32
    %333 = vector.broadcast %cst_81 : f32 to vector<1x1xf32>
    %334 = arith.mulf %327, %333 : vector<1x1xf32>
    %cst_82 = arith.constant 0.0069444445 : f32
    %335 = vector.broadcast %cst_82 : f32 to vector<1x1xf32>
    %336 = arith.mulf %332, %335 : vector<1x1xf32>
    %337 = arith.mulf %334, %334 : vector<1x1xf32>
    %338 = arith.subf %336, %337 : vector<1x1xf32>
    %cst_83 = arith.constant 0.000000e+00 : f32
    %339 = vector.broadcast %cst_83 : f32 to vector<1x1xf32>
    %340 = arith.maximumf %338, %339 : vector<1x1xf32>
    %cst_84 = arith.constant 9.99999974E-6 : f32
    %341 = vector.broadcast %cst_84 : f32 to vector<1x1xf32>
    %342 = arith.addf %340, %341 : vector<1x1xf32>
    %343 = math.rsqrt %342 : vector<1x1xf32>
    %c29 = arith.constant 29 : index
    %344 = memref.load %arg0[%c29] : memref<109xf32, #tpu.memory_space<smem>>
    %345 = vector.broadcast %344 : f32 to vector<1x1xf32>
    %346 = arith.mulf %343, %345 : vector<1x1xf32>
    %c41 = arith.constant 41 : index
    %347 = memref.load %arg0[%c41] : memref<109xf32, #tpu.memory_space<smem>>
    %348 = arith.mulf %334, %346 : vector<1x1xf32>
    %349 = vector.broadcast %347 : f32 to vector<1x1xf32>
    %350 = arith.subf %349, %348 : vector<1x1xf32>
    %351 = vector.broadcast %346 : vector<1x1xf32> to vector<18x8xf32>
    %352 = arith.mulf %84, %351 : vector<18x8xf32>
    %353 = vector.broadcast %350 : vector<1x1xf32> to vector<18x8xf32>
    %354 = arith.addf %352, %353 : vector<18x8xf32>
    %cst_85 = arith.constant dense<0.000000e+00> : vector<18xf32>
    %355 = vector.multi_reduction <add>, %98, %cst_85 [1] : vector<18x8xf32> to vector<18xf32>
    %356 = vector.shape_cast %355 : vector<18xf32> to vector<18x1xf32>
    %cst_86 = arith.constant dense<0.000000e+00> : vector<1xf32>
    %357 = vector.multi_reduction <add>, %356, %cst_86 [0] : vector<18x1xf32> to vector<1xf32>
    %358 = vector.shape_cast %357 : vector<1xf32> to vector<1x1xf32>
    %359 = arith.mulf %98, %98 : vector<18x8xf32>
    %cst_87 = arith.constant dense<0.000000e+00> : vector<18xf32>
    %360 = vector.multi_reduction <add>, %359, %cst_87 [1] : vector<18x8xf32> to vector<18xf32>
    %361 = vector.shape_cast %360 : vector<18xf32> to vector<18x1xf32>
    %cst_88 = arith.constant dense<0.000000e+00> : vector<1xf32>
    %362 = vector.multi_reduction <add>, %361, %cst_88 [0] : vector<18x1xf32> to vector<1xf32>
    %363 = vector.shape_cast %362 : vector<1xf32> to vector<1x1xf32>
    %cst_89 = arith.constant 0.0069444445 : f32
    %364 = vector.broadcast %cst_89 : f32 to vector<1x1xf32>
    %365 = arith.mulf %358, %364 : vector<1x1xf32>
    %cst_90 = arith.constant 0.0069444445 : f32
    %366 = vector.broadcast %cst_90 : f32 to vector<1x1xf32>
    %367 = arith.mulf %363, %366 : vector<1x1xf32>
    %368 = arith.mulf %365, %365 : vector<1x1xf32>
    %369 = arith.subf %367, %368 : vector<1x1xf32>
    %cst_91 = arith.constant 0.000000e+00 : f32
    %370 = vector.broadcast %cst_91 : f32 to vector<1x1xf32>
    %371 = arith.maximumf %369, %370 : vector<1x1xf32>
    %cst_92 = arith.constant 9.99999974E-6 : f32
    %372 = vector.broadcast %cst_92 : f32 to vector<1x1xf32>
    %373 = arith.addf %371, %372 : vector<1x1xf32>
    %374 = math.rsqrt %373 : vector<1x1xf32>
    %c30 = arith.constant 30 : index
    %375 = memref.load %arg0[%c30] : memref<109xf32, #tpu.memory_space<smem>>
    %376 = vector.broadcast %375 : f32 to vector<1x1xf32>
    %377 = arith.mulf %374, %376 : vector<1x1xf32>
    %c42 = arith.constant 42 : index
    %378 = memref.load %arg0[%c42] : memref<109xf32, #tpu.memory_space<smem>>
    %379 = arith.mulf %365, %377 : vector<1x1xf32>
    %380 = vector.broadcast %378 : f32 to vector<1x1xf32>
    %381 = arith.subf %380, %379 : vector<1x1xf32>
    %382 = vector.broadcast %377 : vector<1x1xf32> to vector<18x8xf32>
    %383 = arith.mulf %98, %382 : vector<18x8xf32>
    %384 = vector.broadcast %381 : vector<1x1xf32> to vector<18x8xf32>
    %385 = arith.addf %383, %384 : vector<18x8xf32>
    %cst_93 = arith.constant dense<0.000000e+00> : vector<18xf32>
    %386 = vector.multi_reduction <add>, %112, %cst_93 [1] : vector<18x8xf32> to vector<18xf32>
    %387 = vector.shape_cast %386 : vector<18xf32> to vector<18x1xf32>
    %cst_94 = arith.constant dense<0.000000e+00> : vector<1xf32>
    %388 = vector.multi_reduction <add>, %387, %cst_94 [0] : vector<18x1xf32> to vector<1xf32>
    %389 = vector.shape_cast %388 : vector<1xf32> to vector<1x1xf32>
    %390 = arith.mulf %112, %112 : vector<18x8xf32>
    %cst_95 = arith.constant dense<0.000000e+00> : vector<18xf32>
    %391 = vector.multi_reduction <add>, %390, %cst_95 [1] : vector<18x8xf32> to vector<18xf32>
    %392 = vector.shape_cast %391 : vector<18xf32> to vector<18x1xf32>
    %cst_96 = arith.constant dense<0.000000e+00> : vector<1xf32>
    %393 = vector.multi_reduction <add>, %392, %cst_96 [0] : vector<18x1xf32> to vector<1xf32>
    %394 = vector.shape_cast %393 : vector<1xf32> to vector<1x1xf32>
    %cst_97 = arith.constant 0.0069444445 : f32
    %395 = vector.broadcast %cst_97 : f32 to vector<1x1xf32>
    %396 = arith.mulf %389, %395 : vector<1x1xf32>
    %cst_98 = arith.constant 0.0069444445 : f32
    %397 = vector.broadcast %cst_98 : f32 to vector<1x1xf32>
    %398 = arith.mulf %394, %397 : vector<1x1xf32>
    %399 = arith.mulf %396, %396 : vector<1x1xf32>
    %400 = arith.subf %398, %399 : vector<1x1xf32>
    %cst_99 = arith.constant 0.000000e+00 : f32
    %401 = vector.broadcast %cst_99 : f32 to vector<1x1xf32>
    %402 = arith.maximumf %400, %401 : vector<1x1xf32>
    %cst_100 = arith.constant 9.99999974E-6 : f32
    %403 = vector.broadcast %cst_100 : f32 to vector<1x1xf32>
    %404 = arith.addf %402, %403 : vector<1x1xf32>
    %405 = math.rsqrt %404 : vector<1x1xf32>
    %c31 = arith.constant 31 : index
    %406 = memref.load %arg0[%c31] : memref<109xf32, #tpu.memory_space<smem>>
    %407 = vector.broadcast %406 : f32 to vector<1x1xf32>
    %408 = arith.mulf %405, %407 : vector<1x1xf32>
    %c43 = arith.constant 43 : index
    %409 = memref.load %arg0[%c43] : memref<109xf32, #tpu.memory_space<smem>>
    %410 = arith.mulf %396, %408 : vector<1x1xf32>
    %411 = vector.broadcast %409 : f32 to vector<1x1xf32>
    %412 = arith.subf %411, %410 : vector<1x1xf32>
    %413 = vector.broadcast %408 : vector<1x1xf32> to vector<18x8xf32>
    %414 = arith.mulf %112, %413 : vector<18x8xf32>
    %415 = vector.broadcast %412 : vector<1x1xf32> to vector<18x8xf32>
    %416 = arith.addf %414, %415 : vector<18x8xf32>
    %cst_101 = arith.constant dense<0.000000e+00> : vector<18xf32>
    %417 = vector.multi_reduction <add>, %126, %cst_101 [1] : vector<18x8xf32> to vector<18xf32>
    %418 = vector.shape_cast %417 : vector<18xf32> to vector<18x1xf32>
    %cst_102 = arith.constant dense<0.000000e+00> : vector<1xf32>
    %419 = vector.multi_reduction <add>, %418, %cst_102 [0] : vector<18x1xf32> to vector<1xf32>
    %420 = vector.shape_cast %419 : vector<1xf32> to vector<1x1xf32>
    %421 = arith.mulf %126, %126 : vector<18x8xf32>
    %cst_103 = arith.constant dense<0.000000e+00> : vector<18xf32>
    %422 = vector.multi_reduction <add>, %421, %cst_103 [1] : vector<18x8xf32> to vector<18xf32>
    %423 = vector.shape_cast %422 : vector<18xf32> to vector<18x1xf32>
    %cst_104 = arith.constant dense<0.000000e+00> : vector<1xf32>
    %424 = vector.multi_reduction <add>, %423, %cst_104 [0] : vector<18x1xf32> to vector<1xf32>
    %425 = vector.shape_cast %424 : vector<1xf32> to vector<1x1xf32>
    %cst_105 = arith.constant 0.0069444445 : f32
    %426 = vector.broadcast %cst_105 : f32 to vector<1x1xf32>
    %427 = arith.mulf %420, %426 : vector<1x1xf32>
    %cst_106 = arith.constant 0.0069444445 : f32
    %428 = vector.broadcast %cst_106 : f32 to vector<1x1xf32>
    %429 = arith.mulf %425, %428 : vector<1x1xf32>
    %430 = arith.mulf %427, %427 : vector<1x1xf32>
    %431 = arith.subf %429, %430 : vector<1x1xf32>
    %cst_107 = arith.constant 0.000000e+00 : f32
    %432 = vector.broadcast %cst_107 : f32 to vector<1x1xf32>
    %433 = arith.maximumf %431, %432 : vector<1x1xf32>
    %cst_108 = arith.constant 9.99999974E-6 : f32
    %434 = vector.broadcast %cst_108 : f32 to vector<1x1xf32>
    %435 = arith.addf %433, %434 : vector<1x1xf32>
    %436 = math.rsqrt %435 : vector<1x1xf32>
    %c32 = arith.constant 32 : index
    %437 = memref.load %arg0[%c32] : memref<109xf32, #tpu.memory_space<smem>>
    %438 = vector.broadcast %437 : f32 to vector<1x1xf32>
    %439 = arith.mulf %436, %438 : vector<1x1xf32>
    %c44 = arith.constant 44 : index
    %440 = memref.load %arg0[%c44] : memref<109xf32, #tpu.memory_space<smem>>
    %441 = arith.mulf %427, %439 : vector<1x1xf32>
    %442 = vector.broadcast %440 : f32 to vector<1x1xf32>
    %443 = arith.subf %442, %441 : vector<1x1xf32>
    %444 = vector.broadcast %439 : vector<1x1xf32> to vector<18x8xf32>
    %445 = arith.mulf %126, %444 : vector<18x8xf32>
    %446 = vector.broadcast %443 : vector<1x1xf32> to vector<18x8xf32>
    %447 = arith.addf %445, %446 : vector<18x8xf32>
    %cst_109 = arith.constant dense<0.000000e+00> : vector<18xf32>
    %448 = vector.multi_reduction <add>, %140, %cst_109 [1] : vector<18x8xf32> to vector<18xf32>
    %449 = vector.shape_cast %448 : vector<18xf32> to vector<18x1xf32>
    %cst_110 = arith.constant dense<0.000000e+00> : vector<1xf32>
    %450 = vector.multi_reduction <add>, %449, %cst_110 [0] : vector<18x1xf32> to vector<1xf32>
    %451 = vector.shape_cast %450 : vector<1xf32> to vector<1x1xf32>
    %452 = arith.mulf %140, %140 : vector<18x8xf32>
    %cst_111 = arith.constant dense<0.000000e+00> : vector<18xf32>
    %453 = vector.multi_reduction <add>, %452, %cst_111 [1] : vector<18x8xf32> to vector<18xf32>
    %454 = vector.shape_cast %453 : vector<18xf32> to vector<18x1xf32>
    %cst_112 = arith.constant dense<0.000000e+00> : vector<1xf32>
    %455 = vector.multi_reduction <add>, %454, %cst_112 [0] : vector<18x1xf32> to vector<1xf32>
    %456 = vector.shape_cast %455 : vector<1xf32> to vector<1x1xf32>
    %cst_113 = arith.constant 0.0069444445 : f32
    %457 = vector.broadcast %cst_113 : f32 to vector<1x1xf32>
    %458 = arith.mulf %451, %457 : vector<1x1xf32>
    %cst_114 = arith.constant 0.0069444445 : f32
    %459 = vector.broadcast %cst_114 : f32 to vector<1x1xf32>
    %460 = arith.mulf %456, %459 : vector<1x1xf32>
    %461 = arith.mulf %458, %458 : vector<1x1xf32>
    %462 = arith.subf %460, %461 : vector<1x1xf32>
    %cst_115 = arith.constant 0.000000e+00 : f32
    %463 = vector.broadcast %cst_115 : f32 to vector<1x1xf32>
    %464 = arith.maximumf %462, %463 : vector<1x1xf32>
    %cst_116 = arith.constant 9.99999974E-6 : f32
    %465 = vector.broadcast %cst_116 : f32 to vector<1x1xf32>
    %466 = arith.addf %464, %465 : vector<1x1xf32>
    %467 = math.rsqrt %466 : vector<1x1xf32>
    %c33 = arith.constant 33 : index
    %468 = memref.load %arg0[%c33] : memref<109xf32, #tpu.memory_space<smem>>
    %469 = vector.broadcast %468 : f32 to vector<1x1xf32>
    %470 = arith.mulf %467, %469 : vector<1x1xf32>
    %c45 = arith.constant 45 : index
    %471 = memref.load %arg0[%c45] : memref<109xf32, #tpu.memory_space<smem>>
    %472 = arith.mulf %458, %470 : vector<1x1xf32>
    %473 = vector.broadcast %471 : f32 to vector<1x1xf32>
    %474 = arith.subf %473, %472 : vector<1x1xf32>
    %475 = vector.broadcast %470 : vector<1x1xf32> to vector<18x8xf32>
    %476 = arith.mulf %140, %475 : vector<18x8xf32>
    %477 = vector.broadcast %474 : vector<1x1xf32> to vector<18x8xf32>
    %478 = arith.addf %476, %477 : vector<18x8xf32>
    %cst_117 = arith.constant dense<0.000000e+00> : vector<18xf32>
    %479 = vector.multi_reduction <add>, %154, %cst_117 [1] : vector<18x8xf32> to vector<18xf32>
    %480 = vector.shape_cast %479 : vector<18xf32> to vector<18x1xf32>
    %cst_118 = arith.constant dense<0.000000e+00> : vector<1xf32>
    %481 = vector.multi_reduction <add>, %480, %cst_118 [0] : vector<18x1xf32> to vector<1xf32>
    %482 = vector.shape_cast %481 : vector<1xf32> to vector<1x1xf32>
    %483 = arith.mulf %154, %154 : vector<18x8xf32>
    %cst_119 = arith.constant dense<0.000000e+00> : vector<18xf32>
    %484 = vector.multi_reduction <add>, %483, %cst_119 [1] : vector<18x8xf32> to vector<18xf32>
    %485 = vector.shape_cast %484 : vector<18xf32> to vector<18x1xf32>
    %cst_120 = arith.constant dense<0.000000e+00> : vector<1xf32>
    %486 = vector.multi_reduction <add>, %485, %cst_120 [0] : vector<18x1xf32> to vector<1xf32>
    %487 = vector.shape_cast %486 : vector<1xf32> to vector<1x1xf32>
    %cst_121 = arith.constant 0.0069444445 : f32
    %488 = vector.broadcast %cst_121 : f32 to vector<1x1xf32>
    %489 = arith.mulf %482, %488 : vector<1x1xf32>
    %cst_122 = arith.constant 0.0069444445 : f32
    %490 = vector.broadcast %cst_122 : f32 to vector<1x1xf32>
    %491 = arith.mulf %487, %490 : vector<1x1xf32>
    %492 = arith.mulf %489, %489 : vector<1x1xf32>
    %493 = arith.subf %491, %492 : vector<1x1xf32>
    %cst_123 = arith.constant 0.000000e+00 : f32
    %494 = vector.broadcast %cst_123 : f32 to vector<1x1xf32>
    %495 = arith.maximumf %493, %494 : vector<1x1xf32>
    %cst_124 = arith.constant 9.99999974E-6 : f32
    %496 = vector.broadcast %cst_124 : f32 to vector<1x1xf32>
    %497 = arith.addf %495, %496 : vector<1x1xf32>
    %498 = math.rsqrt %497 : vector<1x1xf32>
    %c34 = arith.constant 34 : index
    %499 = memref.load %arg0[%c34] : memref<109xf32, #tpu.memory_space<smem>>
    %500 = vector.broadcast %499 : f32 to vector<1x1xf32>
    %501 = arith.mulf %498, %500 : vector<1x1xf32>
    %c46 = arith.constant 46 : index
    %502 = memref.load %arg0[%c46] : memref<109xf32, #tpu.memory_space<smem>>
    %503 = arith.mulf %489, %501 : vector<1x1xf32>
    %504 = vector.broadcast %502 : f32 to vector<1x1xf32>
    %505 = arith.subf %504, %503 : vector<1x1xf32>
    %506 = vector.broadcast %501 : vector<1x1xf32> to vector<18x8xf32>
    %507 = arith.mulf %154, %506 : vector<18x8xf32>
    %508 = vector.broadcast %505 : vector<1x1xf32> to vector<18x8xf32>
    %509 = arith.addf %507, %508 : vector<18x8xf32>
    %cst_125 = arith.constant dense<0.000000e+00> : vector<18xf32>
    %510 = vector.multi_reduction <add>, %168, %cst_125 [1] : vector<18x8xf32> to vector<18xf32>
    %511 = vector.shape_cast %510 : vector<18xf32> to vector<18x1xf32>
    %cst_126 = arith.constant dense<0.000000e+00> : vector<1xf32>
    %512 = vector.multi_reduction <add>, %511, %cst_126 [0] : vector<18x1xf32> to vector<1xf32>
    %513 = vector.shape_cast %512 : vector<1xf32> to vector<1x1xf32>
    %514 = arith.mulf %168, %168 : vector<18x8xf32>
    %cst_127 = arith.constant dense<0.000000e+00> : vector<18xf32>
    %515 = vector.multi_reduction <add>, %514, %cst_127 [1] : vector<18x8xf32> to vector<18xf32>
    %516 = vector.shape_cast %515 : vector<18xf32> to vector<18x1xf32>
    %cst_128 = arith.constant dense<0.000000e+00> : vector<1xf32>
    %517 = vector.multi_reduction <add>, %516, %cst_128 [0] : vector<18x1xf32> to vector<1xf32>
    %518 = vector.shape_cast %517 : vector<1xf32> to vector<1x1xf32>
    %cst_129 = arith.constant 0.0069444445 : f32
    %519 = vector.broadcast %cst_129 : f32 to vector<1x1xf32>
    %520 = arith.mulf %513, %519 : vector<1x1xf32>
    %cst_130 = arith.constant 0.0069444445 : f32
    %521 = vector.broadcast %cst_130 : f32 to vector<1x1xf32>
    %522 = arith.mulf %518, %521 : vector<1x1xf32>
    %523 = arith.mulf %520, %520 : vector<1x1xf32>
    %524 = arith.subf %522, %523 : vector<1x1xf32>
    %cst_131 = arith.constant 0.000000e+00 : f32
    %525 = vector.broadcast %cst_131 : f32 to vector<1x1xf32>
    %526 = arith.maximumf %524, %525 : vector<1x1xf32>
    %cst_132 = arith.constant 9.99999974E-6 : f32
    %527 = vector.broadcast %cst_132 : f32 to vector<1x1xf32>
    %528 = arith.addf %526, %527 : vector<1x1xf32>
    %529 = math.rsqrt %528 : vector<1x1xf32>
    %c35 = arith.constant 35 : index
    %530 = memref.load %arg0[%c35] : memref<109xf32, #tpu.memory_space<smem>>
    %531 = vector.broadcast %530 : f32 to vector<1x1xf32>
    %532 = arith.mulf %529, %531 : vector<1x1xf32>
    %c47 = arith.constant 47 : index
    %533 = memref.load %arg0[%c47] : memref<109xf32, #tpu.memory_space<smem>>
    %534 = arith.mulf %520, %532 : vector<1x1xf32>
    %535 = vector.broadcast %533 : f32 to vector<1x1xf32>
    %536 = arith.subf %535, %534 : vector<1x1xf32>
    %537 = vector.broadcast %532 : vector<1x1xf32> to vector<18x8xf32>
    %538 = arith.mulf %168, %537 : vector<18x8xf32>
    %539 = vector.broadcast %536 : vector<1x1xf32> to vector<18x8xf32>
    %540 = arith.addf %538, %539 : vector<18x8xf32>
    %c48 = arith.constant 48 : index
    %541 = memref.load %arg0[%c48] : memref<109xf32, #tpu.memory_space<smem>>
    %542 = vector.broadcast %541 : f32 to vector<18x8xf32>
    %543 = arith.mulf %542, %199 : vector<18x8xf32>
    %c49 = arith.constant 49 : index
    %544 = memref.load %arg0[%c49] : memref<109xf32, #tpu.memory_space<smem>>
    %545 = vector.broadcast %544 : f32 to vector<18x8xf32>
    %546 = arith.mulf %545, %230 : vector<18x8xf32>
    %547 = arith.addf %543, %546 : vector<18x8xf32>
    %c50 = arith.constant 50 : index
    %548 = memref.load %arg0[%c50] : memref<109xf32, #tpu.memory_space<smem>>
    %549 = vector.broadcast %548 : f32 to vector<18x8xf32>
    %550 = arith.mulf %549, %261 : vector<18x8xf32>
    %551 = arith.addf %547, %550 : vector<18x8xf32>
    %c51 = arith.constant 51 : index
    %552 = memref.load %arg0[%c51] : memref<109xf32, #tpu.memory_space<smem>>
    %553 = vector.broadcast %552 : f32 to vector<18x8xf32>
    %554 = arith.mulf %553, %292 : vector<18x8xf32>
    %555 = arith.addf %551, %554 : vector<18x8xf32>
    %c52 = arith.constant 52 : index
    %556 = memref.load %arg0[%c52] : memref<109xf32, #tpu.memory_space<smem>>
    %557 = vector.broadcast %556 : f32 to vector<18x8xf32>
    %558 = arith.mulf %557, %323 : vector<18x8xf32>
    %559 = arith.addf %555, %558 : vector<18x8xf32>
    %c53 = arith.constant 53 : index
    %560 = memref.load %arg0[%c53] : memref<109xf32, #tpu.memory_space<smem>>
    %561 = vector.broadcast %560 : f32 to vector<18x8xf32>
    %562 = arith.mulf %561, %354 : vector<18x8xf32>
    %563 = arith.addf %559, %562 : vector<18x8xf32>
    %c54 = arith.constant 54 : index
    %564 = memref.load %arg0[%c54] : memref<109xf32, #tpu.memory_space<smem>>
    %565 = vector.broadcast %564 : f32 to vector<18x8xf32>
    %566 = arith.mulf %565, %385 : vector<18x8xf32>
    %567 = arith.addf %563, %566 : vector<18x8xf32>
    %c55 = arith.constant 55 : index
    %568 = memref.load %arg0[%c55] : memref<109xf32, #tpu.memory_space<smem>>
    %569 = vector.broadcast %568 : f32 to vector<18x8xf32>
    %570 = arith.mulf %569, %416 : vector<18x8xf32>
    %571 = arith.addf %567, %570 : vector<18x8xf32>
    %c56 = arith.constant 56 : index
    %572 = memref.load %arg0[%c56] : memref<109xf32, #tpu.memory_space<smem>>
    %573 = vector.broadcast %572 : f32 to vector<18x8xf32>
    %574 = arith.mulf %573, %447 : vector<18x8xf32>
    %575 = arith.addf %571, %574 : vector<18x8xf32>
    %c57 = arith.constant 57 : index
    %576 = memref.load %arg0[%c57] : memref<109xf32, #tpu.memory_space<smem>>
    %577 = vector.broadcast %576 : f32 to vector<18x8xf32>
    %578 = arith.mulf %577, %478 : vector<18x8xf32>
    %579 = arith.addf %575, %578 : vector<18x8xf32>
    %c58 = arith.constant 58 : index
    %580 = memref.load %arg0[%c58] : memref<109xf32, #tpu.memory_space<smem>>
    %581 = vector.broadcast %580 : f32 to vector<18x8xf32>
    %582 = arith.mulf %581, %509 : vector<18x8xf32>
    %583 = arith.addf %579, %582 : vector<18x8xf32>
    %c59 = arith.constant 59 : index
    %584 = memref.load %arg0[%c59] : memref<109xf32, #tpu.memory_space<smem>>
    %585 = vector.broadcast %584 : f32 to vector<18x8xf32>
    %586 = arith.mulf %585, %540 : vector<18x8xf32>
    %587 = arith.addf %583, %586 : vector<18x8xf32>
    %c96 = arith.constant 96 : index
    %588 = memref.load %arg0[%c96] : memref<109xf32, #tpu.memory_space<smem>>
    %589 = vector.broadcast %588 : f32 to vector<18x8xf32>
    %590 = arith.addf %587, %589 : vector<18x8xf32>
    %cst_133 = arith.constant 0.000000e+00 : f32
    %591 = vector.broadcast %cst_133 : f32 to vector<18x8xf32>
    %592 = arith.cmpf ogt, %590, %591 : vector<18x8xf32>
    %cst_134 = arith.constant 0.000000e+00 : f32
    %593 = vector.broadcast %cst_134 : f32 to vector<18x8xf32>
    %594 = arith.minimumf %590, %593 : vector<18x8xf32>
    %595 = math.exp %594 : vector<18x8xf32>
    %cst_135 = arith.constant 1.000000e+00 : f32
    %596 = vector.broadcast %cst_135 : f32 to vector<18x8xf32>
    %597 = arith.subf %595, %596 : vector<18x8xf32>
    %598 = arith.select %592, %590, %597 : vector<18x8xi1>, vector<18x8xf32>
    %c60 = arith.constant 60 : index
    %599 = memref.load %arg0[%c60] : memref<109xf32, #tpu.memory_space<smem>>
    %600 = vector.broadcast %599 : f32 to vector<18x8xf32>
    %601 = arith.mulf %600, %199 : vector<18x8xf32>
    %c61 = arith.constant 61 : index
    %602 = memref.load %arg0[%c61] : memref<109xf32, #tpu.memory_space<smem>>
    %603 = vector.broadcast %602 : f32 to vector<18x8xf32>
    %604 = arith.mulf %603, %230 : vector<18x8xf32>
    %605 = arith.addf %601, %604 : vector<18x8xf32>
    %c62 = arith.constant 62 : index
    %606 = memref.load %arg0[%c62] : memref<109xf32, #tpu.memory_space<smem>>
    %607 = vector.broadcast %606 : f32 to vector<18x8xf32>
    %608 = arith.mulf %607, %261 : vector<18x8xf32>
    %609 = arith.addf %605, %608 : vector<18x8xf32>
    %c63 = arith.constant 63 : index
    %610 = memref.load %arg0[%c63] : memref<109xf32, #tpu.memory_space<smem>>
    %611 = vector.broadcast %610 : f32 to vector<18x8xf32>
    %612 = arith.mulf %611, %292 : vector<18x8xf32>
    %613 = arith.addf %609, %612 : vector<18x8xf32>
    %c64 = arith.constant 64 : index
    %614 = memref.load %arg0[%c64] : memref<109xf32, #tpu.memory_space<smem>>
    %615 = vector.broadcast %614 : f32 to vector<18x8xf32>
    %616 = arith.mulf %615, %323 : vector<18x8xf32>
    %617 = arith.addf %613, %616 : vector<18x8xf32>
    %c65 = arith.constant 65 : index
    %618 = memref.load %arg0[%c65] : memref<109xf32, #tpu.memory_space<smem>>
    %619 = vector.broadcast %618 : f32 to vector<18x8xf32>
    %620 = arith.mulf %619, %354 : vector<18x8xf32>
    %621 = arith.addf %617, %620 : vector<18x8xf32>
    %c66 = arith.constant 66 : index
    %622 = memref.load %arg0[%c66] : memref<109xf32, #tpu.memory_space<smem>>
    %623 = vector.broadcast %622 : f32 to vector<18x8xf32>
    %624 = arith.mulf %623, %385 : vector<18x8xf32>
    %625 = arith.addf %621, %624 : vector<18x8xf32>
    %c67 = arith.constant 67 : index
    %626 = memref.load %arg0[%c67] : memref<109xf32, #tpu.memory_space<smem>>
    %627 = vector.broadcast %626 : f32 to vector<18x8xf32>
    %628 = arith.mulf %627, %416 : vector<18x8xf32>
    %629 = arith.addf %625, %628 : vector<18x8xf32>
    %c68 = arith.constant 68 : index
    %630 = memref.load %arg0[%c68] : memref<109xf32, #tpu.memory_space<smem>>
    %631 = vector.broadcast %630 : f32 to vector<18x8xf32>
    %632 = arith.mulf %631, %447 : vector<18x8xf32>
    %633 = arith.addf %629, %632 : vector<18x8xf32>
    %c69 = arith.constant 69 : index
    %634 = memref.load %arg0[%c69] : memref<109xf32, #tpu.memory_space<smem>>
    %635 = vector.broadcast %634 : f32 to vector<18x8xf32>
    %636 = arith.mulf %635, %478 : vector<18x8xf32>
    %637 = arith.addf %633, %636 : vector<18x8xf32>
    %c70 = arith.constant 70 : index
    %638 = memref.load %arg0[%c70] : memref<109xf32, #tpu.memory_space<smem>>
    %639 = vector.broadcast %638 : f32 to vector<18x8xf32>
    %640 = arith.mulf %639, %509 : vector<18x8xf32>
    %641 = arith.addf %637, %640 : vector<18x8xf32>
    %c71 = arith.constant 71 : index
    %642 = memref.load %arg0[%c71] : memref<109xf32, #tpu.memory_space<smem>>
    %643 = vector.broadcast %642 : f32 to vector<18x8xf32>
    %644 = arith.mulf %643, %540 : vector<18x8xf32>
    %645 = arith.addf %641, %644 : vector<18x8xf32>
    %c97 = arith.constant 97 : index
    %646 = memref.load %arg0[%c97] : memref<109xf32, #tpu.memory_space<smem>>
    %647 = vector.broadcast %646 : f32 to vector<18x8xf32>
    %648 = arith.addf %645, %647 : vector<18x8xf32>
    %cst_136 = arith.constant 0.000000e+00 : f32
    %649 = vector.broadcast %cst_136 : f32 to vector<18x8xf32>
    %650 = arith.cmpf ogt, %648, %649 : vector<18x8xf32>
    %cst_137 = arith.constant 0.000000e+00 : f32
    %651 = vector.broadcast %cst_137 : f32 to vector<18x8xf32>
    %652 = arith.minimumf %648, %651 : vector<18x8xf32>
    %653 = math.exp %652 : vector<18x8xf32>
    %cst_138 = arith.constant 1.000000e+00 : f32
    %654 = vector.broadcast %cst_138 : f32 to vector<18x8xf32>
    %655 = arith.subf %653, %654 : vector<18x8xf32>
    %656 = arith.select %650, %648, %655 : vector<18x8xi1>, vector<18x8xf32>
    %c72 = arith.constant 72 : index
    %657 = memref.load %arg0[%c72] : memref<109xf32, #tpu.memory_space<smem>>
    %658 = vector.broadcast %657 : f32 to vector<18x8xf32>
    %659 = arith.mulf %658, %199 : vector<18x8xf32>
    %c73 = arith.constant 73 : index
    %660 = memref.load %arg0[%c73] : memref<109xf32, #tpu.memory_space<smem>>
    %661 = vector.broadcast %660 : f32 to vector<18x8xf32>
    %662 = arith.mulf %661, %230 : vector<18x8xf32>
    %663 = arith.addf %659, %662 : vector<18x8xf32>
    %c74 = arith.constant 74 : index
    %664 = memref.load %arg0[%c74] : memref<109xf32, #tpu.memory_space<smem>>
    %665 = vector.broadcast %664 : f32 to vector<18x8xf32>
    %666 = arith.mulf %665, %261 : vector<18x8xf32>
    %667 = arith.addf %663, %666 : vector<18x8xf32>
    %c75 = arith.constant 75 : index
    %668 = memref.load %arg0[%c75] : memref<109xf32, #tpu.memory_space<smem>>
    %669 = vector.broadcast %668 : f32 to vector<18x8xf32>
    %670 = arith.mulf %669, %292 : vector<18x8xf32>
    %671 = arith.addf %667, %670 : vector<18x8xf32>
    %c76 = arith.constant 76 : index
    %672 = memref.load %arg0[%c76] : memref<109xf32, #tpu.memory_space<smem>>
    %673 = vector.broadcast %672 : f32 to vector<18x8xf32>
    %674 = arith.mulf %673, %323 : vector<18x8xf32>
    %675 = arith.addf %671, %674 : vector<18x8xf32>
    %c77 = arith.constant 77 : index
    %676 = memref.load %arg0[%c77] : memref<109xf32, #tpu.memory_space<smem>>
    %677 = vector.broadcast %676 : f32 to vector<18x8xf32>
    %678 = arith.mulf %677, %354 : vector<18x8xf32>
    %679 = arith.addf %675, %678 : vector<18x8xf32>
    %c78 = arith.constant 78 : index
    %680 = memref.load %arg0[%c78] : memref<109xf32, #tpu.memory_space<smem>>
    %681 = vector.broadcast %680 : f32 to vector<18x8xf32>
    %682 = arith.mulf %681, %385 : vector<18x8xf32>
    %683 = arith.addf %679, %682 : vector<18x8xf32>
    %c79 = arith.constant 79 : index
    %684 = memref.load %arg0[%c79] : memref<109xf32, #tpu.memory_space<smem>>
    %685 = vector.broadcast %684 : f32 to vector<18x8xf32>
    %686 = arith.mulf %685, %416 : vector<18x8xf32>
    %687 = arith.addf %683, %686 : vector<18x8xf32>
    %c80 = arith.constant 80 : index
    %688 = memref.load %arg0[%c80] : memref<109xf32, #tpu.memory_space<smem>>
    %689 = vector.broadcast %688 : f32 to vector<18x8xf32>
    %690 = arith.mulf %689, %447 : vector<18x8xf32>
    %691 = arith.addf %687, %690 : vector<18x8xf32>
    %c81 = arith.constant 81 : index
    %692 = memref.load %arg0[%c81] : memref<109xf32, #tpu.memory_space<smem>>
    %693 = vector.broadcast %692 : f32 to vector<18x8xf32>
    %694 = arith.mulf %693, %478 : vector<18x8xf32>
    %695 = arith.addf %691, %694 : vector<18x8xf32>
    %c82 = arith.constant 82 : index
    %696 = memref.load %arg0[%c82] : memref<109xf32, #tpu.memory_space<smem>>
    %697 = vector.broadcast %696 : f32 to vector<18x8xf32>
    %698 = arith.mulf %697, %509 : vector<18x8xf32>
    %699 = arith.addf %695, %698 : vector<18x8xf32>
    %c83 = arith.constant 83 : index
    %700 = memref.load %arg0[%c83] : memref<109xf32, #tpu.memory_space<smem>>
    %701 = vector.broadcast %700 : f32 to vector<18x8xf32>
    %702 = arith.mulf %701, %540 : vector<18x8xf32>
    %703 = arith.addf %699, %702 : vector<18x8xf32>
    %c98 = arith.constant 98 : index
    %704 = memref.load %arg0[%c98] : memref<109xf32, #tpu.memory_space<smem>>
    %705 = vector.broadcast %704 : f32 to vector<18x8xf32>
    %706 = arith.addf %703, %705 : vector<18x8xf32>
    %cst_139 = arith.constant 0.000000e+00 : f32
    %707 = vector.broadcast %cst_139 : f32 to vector<18x8xf32>
    %708 = arith.cmpf ogt, %706, %707 : vector<18x8xf32>
    %cst_140 = arith.constant 0.000000e+00 : f32
    %709 = vector.broadcast %cst_140 : f32 to vector<18x8xf32>
    %710 = arith.minimumf %706, %709 : vector<18x8xf32>
    %711 = math.exp %710 : vector<18x8xf32>
    %cst_141 = arith.constant 1.000000e+00 : f32
    %712 = vector.broadcast %cst_141 : f32 to vector<18x8xf32>
    %713 = arith.subf %711, %712 : vector<18x8xf32>
    %714 = arith.select %708, %706, %713 : vector<18x8xi1>, vector<18x8xf32>
    %c84 = arith.constant 84 : index
    %715 = memref.load %arg0[%c84] : memref<109xf32, #tpu.memory_space<smem>>
    %716 = vector.broadcast %715 : f32 to vector<18x8xf32>
    %717 = arith.mulf %716, %199 : vector<18x8xf32>
    %c85 = arith.constant 85 : index
    %718 = memref.load %arg0[%c85] : memref<109xf32, #tpu.memory_space<smem>>
    %719 = vector.broadcast %718 : f32 to vector<18x8xf32>
    %720 = arith.mulf %719, %230 : vector<18x8xf32>
    %721 = arith.addf %717, %720 : vector<18x8xf32>
    %c86 = arith.constant 86 : index
    %722 = memref.load %arg0[%c86] : memref<109xf32, #tpu.memory_space<smem>>
    %723 = vector.broadcast %722 : f32 to vector<18x8xf32>
    %724 = arith.mulf %723, %261 : vector<18x8xf32>
    %725 = arith.addf %721, %724 : vector<18x8xf32>
    %c87 = arith.constant 87 : index
    %726 = memref.load %arg0[%c87] : memref<109xf32, #tpu.memory_space<smem>>
    %727 = vector.broadcast %726 : f32 to vector<18x8xf32>
    %728 = arith.mulf %727, %292 : vector<18x8xf32>
    %729 = arith.addf %725, %728 : vector<18x8xf32>
    %c88 = arith.constant 88 : index
    %730 = memref.load %arg0[%c88] : memref<109xf32, #tpu.memory_space<smem>>
    %731 = vector.broadcast %730 : f32 to vector<18x8xf32>
    %732 = arith.mulf %731, %323 : vector<18x8xf32>
    %733 = arith.addf %729, %732 : vector<18x8xf32>
    %c89 = arith.constant 89 : index
    %734 = memref.load %arg0[%c89] : memref<109xf32, #tpu.memory_space<smem>>
    %735 = vector.broadcast %734 : f32 to vector<18x8xf32>
    %736 = arith.mulf %735, %354 : vector<18x8xf32>
    %737 = arith.addf %733, %736 : vector<18x8xf32>
    %c90 = arith.constant 90 : index
    %738 = memref.load %arg0[%c90] : memref<109xf32, #tpu.memory_space<smem>>
    %739 = vector.broadcast %738 : f32 to vector<18x8xf32>
    %740 = arith.mulf %739, %385 : vector<18x8xf32>
    %741 = arith.addf %737, %740 : vector<18x8xf32>
    %c91 = arith.constant 91 : index
    %742 = memref.load %arg0[%c91] : memref<109xf32, #tpu.memory_space<smem>>
    %743 = vector.broadcast %742 : f32 to vector<18x8xf32>
    %744 = arith.mulf %743, %416 : vector<18x8xf32>
    %745 = arith.addf %741, %744 : vector<18x8xf32>
    %c92 = arith.constant 92 : index
    %746 = memref.load %arg0[%c92] : memref<109xf32, #tpu.memory_space<smem>>
    %747 = vector.broadcast %746 : f32 to vector<18x8xf32>
    %748 = arith.mulf %747, %447 : vector<18x8xf32>
    %749 = arith.addf %745, %748 : vector<18x8xf32>
    %c93 = arith.constant 93 : index
    %750 = memref.load %arg0[%c93] : memref<109xf32, #tpu.memory_space<smem>>
    %751 = vector.broadcast %750 : f32 to vector<18x8xf32>
    %752 = arith.mulf %751, %478 : vector<18x8xf32>
    %753 = arith.addf %749, %752 : vector<18x8xf32>
    %c94 = arith.constant 94 : index
    %754 = memref.load %arg0[%c94] : memref<109xf32, #tpu.memory_space<smem>>
    %755 = vector.broadcast %754 : f32 to vector<18x8xf32>
    %756 = arith.mulf %755, %509 : vector<18x8xf32>
    %757 = arith.addf %753, %756 : vector<18x8xf32>
    %c95 = arith.constant 95 : index
    %758 = memref.load %arg0[%c95] : memref<109xf32, #tpu.memory_space<smem>>
    %759 = vector.broadcast %758 : f32 to vector<18x8xf32>
    %760 = arith.mulf %759, %540 : vector<18x8xf32>
    %761 = arith.addf %757, %760 : vector<18x8xf32>
    %c99 = arith.constant 99 : index
    %762 = memref.load %arg0[%c99] : memref<109xf32, #tpu.memory_space<smem>>
    %763 = vector.broadcast %762 : f32 to vector<18x8xf32>
    %764 = arith.addf %761, %763 : vector<18x8xf32>
    %cst_142 = arith.constant 0.000000e+00 : f32
    %765 = vector.broadcast %cst_142 : f32 to vector<18x8xf32>
    %766 = arith.cmpf ogt, %764, %765 : vector<18x8xf32>
    %cst_143 = arith.constant 0.000000e+00 : f32
    %767 = vector.broadcast %cst_143 : f32 to vector<18x8xf32>
    %768 = arith.minimumf %764, %767 : vector<18x8xf32>
    %769 = math.exp %768 : vector<18x8xf32>
    %cst_144 = arith.constant 1.000000e+00 : f32
    %770 = vector.broadcast %cst_144 : f32 to vector<18x8xf32>
    %771 = arith.subf %769, %770 : vector<18x8xf32>
    %772 = arith.select %766, %764, %771 : vector<18x8xi1>, vector<18x8xf32>
    %cst_145 = arith.constant dense<0.000000e+00> : vector<18xf32>
    %773 = vector.multi_reduction <add>, %598, %cst_145 [1] : vector<18x8xf32> to vector<18xf32>
    %774 = vector.shape_cast %773 : vector<18xf32> to vector<18x1xf32>
    %cst_146 = arith.constant dense<0.000000e+00> : vector<1xf32>
    %775 = vector.multi_reduction <add>, %774, %cst_146 [0] : vector<18x1xf32> to vector<1xf32>
    %776 = vector.shape_cast %775 : vector<1xf32> to vector<1x1xf32>
    %777 = arith.mulf %598, %598 : vector<18x8xf32>
    %cst_147 = arith.constant dense<0.000000e+00> : vector<18xf32>
    %778 = vector.multi_reduction <add>, %777, %cst_147 [1] : vector<18x8xf32> to vector<18xf32>
    %779 = vector.shape_cast %778 : vector<18xf32> to vector<18x1xf32>
    %cst_148 = arith.constant dense<0.000000e+00> : vector<1xf32>
    %780 = vector.multi_reduction <add>, %779, %cst_148 [0] : vector<18x1xf32> to vector<1xf32>
    %781 = vector.shape_cast %780 : vector<1xf32> to vector<1x1xf32>
    %cst_149 = arith.constant 0.0069444445 : f32
    %782 = vector.broadcast %cst_149 : f32 to vector<1x1xf32>
    %783 = arith.mulf %776, %782 : vector<1x1xf32>
    %cst_150 = arith.constant 0.0069444445 : f32
    %784 = vector.broadcast %cst_150 : f32 to vector<1x1xf32>
    %785 = arith.mulf %781, %784 : vector<1x1xf32>
    %786 = arith.mulf %783, %783 : vector<1x1xf32>
    %787 = arith.subf %785, %786 : vector<1x1xf32>
    %cst_151 = arith.constant 0.000000e+00 : f32
    %788 = vector.broadcast %cst_151 : f32 to vector<1x1xf32>
    %789 = arith.maximumf %787, %788 : vector<1x1xf32>
    %cst_152 = arith.constant 9.99999974E-6 : f32
    %790 = vector.broadcast %cst_152 : f32 to vector<1x1xf32>
    %791 = arith.addf %789, %790 : vector<1x1xf32>
    %792 = math.rsqrt %791 : vector<1x1xf32>
    %c100 = arith.constant 100 : index
    %793 = memref.load %arg0[%c100] : memref<109xf32, #tpu.memory_space<smem>>
    %794 = vector.broadcast %793 : f32 to vector<1x1xf32>
    %795 = arith.mulf %792, %794 : vector<1x1xf32>
    %c104 = arith.constant 104 : index
    %796 = memref.load %arg0[%c104] : memref<109xf32, #tpu.memory_space<smem>>
    %797 = arith.mulf %783, %795 : vector<1x1xf32>
    %798 = vector.broadcast %796 : f32 to vector<1x1xf32>
    %799 = arith.subf %798, %797 : vector<1x1xf32>
    %800 = vector.broadcast %795 : vector<1x1xf32> to vector<18x8xf32>
    %801 = arith.mulf %598, %800 : vector<18x8xf32>
    %802 = vector.broadcast %799 : vector<1x1xf32> to vector<18x8xf32>
    %803 = arith.addf %801, %802 : vector<18x8xf32>
    %cst_153 = arith.constant dense<0.000000e+00> : vector<18xf32>
    %804 = vector.multi_reduction <add>, %656, %cst_153 [1] : vector<18x8xf32> to vector<18xf32>
    %805 = vector.shape_cast %804 : vector<18xf32> to vector<18x1xf32>
    %cst_154 = arith.constant dense<0.000000e+00> : vector<1xf32>
    %806 = vector.multi_reduction <add>, %805, %cst_154 [0] : vector<18x1xf32> to vector<1xf32>
    %807 = vector.shape_cast %806 : vector<1xf32> to vector<1x1xf32>
    %808 = arith.mulf %656, %656 : vector<18x8xf32>
    %cst_155 = arith.constant dense<0.000000e+00> : vector<18xf32>
    %809 = vector.multi_reduction <add>, %808, %cst_155 [1] : vector<18x8xf32> to vector<18xf32>
    %810 = vector.shape_cast %809 : vector<18xf32> to vector<18x1xf32>
    %cst_156 = arith.constant dense<0.000000e+00> : vector<1xf32>
    %811 = vector.multi_reduction <add>, %810, %cst_156 [0] : vector<18x1xf32> to vector<1xf32>
    %812 = vector.shape_cast %811 : vector<1xf32> to vector<1x1xf32>
    %cst_157 = arith.constant 0.0069444445 : f32
    %813 = vector.broadcast %cst_157 : f32 to vector<1x1xf32>
    %814 = arith.mulf %807, %813 : vector<1x1xf32>
    %cst_158 = arith.constant 0.0069444445 : f32
    %815 = vector.broadcast %cst_158 : f32 to vector<1x1xf32>
    %816 = arith.mulf %812, %815 : vector<1x1xf32>
    %817 = arith.mulf %814, %814 : vector<1x1xf32>
    %818 = arith.subf %816, %817 : vector<1x1xf32>
    %cst_159 = arith.constant 0.000000e+00 : f32
    %819 = vector.broadcast %cst_159 : f32 to vector<1x1xf32>
    %820 = arith.maximumf %818, %819 : vector<1x1xf32>
    %cst_160 = arith.constant 9.99999974E-6 : f32
    %821 = vector.broadcast %cst_160 : f32 to vector<1x1xf32>
    %822 = arith.addf %820, %821 : vector<1x1xf32>
    %823 = math.rsqrt %822 : vector<1x1xf32>
    %c101 = arith.constant 101 : index
    %824 = memref.load %arg0[%c101] : memref<109xf32, #tpu.memory_space<smem>>
    %825 = vector.broadcast %824 : f32 to vector<1x1xf32>
    %826 = arith.mulf %823, %825 : vector<1x1xf32>
    %c105 = arith.constant 105 : index
    %827 = memref.load %arg0[%c105] : memref<109xf32, #tpu.memory_space<smem>>
    %828 = arith.mulf %814, %826 : vector<1x1xf32>
    %829 = vector.broadcast %827 : f32 to vector<1x1xf32>
    %830 = arith.subf %829, %828 : vector<1x1xf32>
    %831 = vector.broadcast %826 : vector<1x1xf32> to vector<18x8xf32>
    %832 = arith.mulf %656, %831 : vector<18x8xf32>
    %833 = vector.broadcast %830 : vector<1x1xf32> to vector<18x8xf32>
    %834 = arith.addf %832, %833 : vector<18x8xf32>
    %cst_161 = arith.constant dense<0.000000e+00> : vector<18xf32>
    %835 = vector.multi_reduction <add>, %714, %cst_161 [1] : vector<18x8xf32> to vector<18xf32>
    %836 = vector.shape_cast %835 : vector<18xf32> to vector<18x1xf32>
    %cst_162 = arith.constant dense<0.000000e+00> : vector<1xf32>
    %837 = vector.multi_reduction <add>, %836, %cst_162 [0] : vector<18x1xf32> to vector<1xf32>
    %838 = vector.shape_cast %837 : vector<1xf32> to vector<1x1xf32>
    %839 = arith.mulf %714, %714 : vector<18x8xf32>
    %cst_163 = arith.constant dense<0.000000e+00> : vector<18xf32>
    %840 = vector.multi_reduction <add>, %839, %cst_163 [1] : vector<18x8xf32> to vector<18xf32>
    %841 = vector.shape_cast %840 : vector<18xf32> to vector<18x1xf32>
    %cst_164 = arith.constant dense<0.000000e+00> : vector<1xf32>
    %842 = vector.multi_reduction <add>, %841, %cst_164 [0] : vector<18x1xf32> to vector<1xf32>
    %843 = vector.shape_cast %842 : vector<1xf32> to vector<1x1xf32>
    %cst_165 = arith.constant 0.0069444445 : f32
    %844 = vector.broadcast %cst_165 : f32 to vector<1x1xf32>
    %845 = arith.mulf %838, %844 : vector<1x1xf32>
    %cst_166 = arith.constant 0.0069444445 : f32
    %846 = vector.broadcast %cst_166 : f32 to vector<1x1xf32>
    %847 = arith.mulf %843, %846 : vector<1x1xf32>
    %848 = arith.mulf %845, %845 : vector<1x1xf32>
    %849 = arith.subf %847, %848 : vector<1x1xf32>
    %cst_167 = arith.constant 0.000000e+00 : f32
    %850 = vector.broadcast %cst_167 : f32 to vector<1x1xf32>
    %851 = arith.maximumf %849, %850 : vector<1x1xf32>
    %cst_168 = arith.constant 9.99999974E-6 : f32
    %852 = vector.broadcast %cst_168 : f32 to vector<1x1xf32>
    %853 = arith.addf %851, %852 : vector<1x1xf32>
    %854 = math.rsqrt %853 : vector<1x1xf32>
    %c102 = arith.constant 102 : index
    %855 = memref.load %arg0[%c102] : memref<109xf32, #tpu.memory_space<smem>>
    %856 = vector.broadcast %855 : f32 to vector<1x1xf32>
    %857 = arith.mulf %854, %856 : vector<1x1xf32>
    %c106 = arith.constant 106 : index
    %858 = memref.load %arg0[%c106] : memref<109xf32, #tpu.memory_space<smem>>
    %859 = arith.mulf %845, %857 : vector<1x1xf32>
    %860 = vector.broadcast %858 : f32 to vector<1x1xf32>
    %861 = arith.subf %860, %859 : vector<1x1xf32>
    %862 = vector.broadcast %857 : vector<1x1xf32> to vector<18x8xf32>
    %863 = arith.mulf %714, %862 : vector<18x8xf32>
    %864 = vector.broadcast %861 : vector<1x1xf32> to vector<18x8xf32>
    %865 = arith.addf %863, %864 : vector<18x8xf32>
    %cst_169 = arith.constant dense<0.000000e+00> : vector<18xf32>
    %866 = vector.multi_reduction <add>, %772, %cst_169 [1] : vector<18x8xf32> to vector<18xf32>
    %867 = vector.shape_cast %866 : vector<18xf32> to vector<18x1xf32>
    %cst_170 = arith.constant dense<0.000000e+00> : vector<1xf32>
    %868 = vector.multi_reduction <add>, %867, %cst_170 [0] : vector<18x1xf32> to vector<1xf32>
    %869 = vector.shape_cast %868 : vector<1xf32> to vector<1x1xf32>
    %870 = arith.mulf %772, %772 : vector<18x8xf32>
    %cst_171 = arith.constant dense<0.000000e+00> : vector<18xf32>
    %871 = vector.multi_reduction <add>, %870, %cst_171 [1] : vector<18x8xf32> to vector<18xf32>
    %872 = vector.shape_cast %871 : vector<18xf32> to vector<18x1xf32>
    %cst_172 = arith.constant dense<0.000000e+00> : vector<1xf32>
    %873 = vector.multi_reduction <add>, %872, %cst_172 [0] : vector<18x1xf32> to vector<1xf32>
    %874 = vector.shape_cast %873 : vector<1xf32> to vector<1x1xf32>
    %cst_173 = arith.constant 0.0069444445 : f32
    %875 = vector.broadcast %cst_173 : f32 to vector<1x1xf32>
    %876 = arith.mulf %869, %875 : vector<1x1xf32>
    %cst_174 = arith.constant 0.0069444445 : f32
    %877 = vector.broadcast %cst_174 : f32 to vector<1x1xf32>
    %878 = arith.mulf %874, %877 : vector<1x1xf32>
    %879 = arith.mulf %876, %876 : vector<1x1xf32>
    %880 = arith.subf %878, %879 : vector<1x1xf32>
    %cst_175 = arith.constant 0.000000e+00 : f32
    %881 = vector.broadcast %cst_175 : f32 to vector<1x1xf32>
    %882 = arith.maximumf %880, %881 : vector<1x1xf32>
    %cst_176 = arith.constant 9.99999974E-6 : f32
    %883 = vector.broadcast %cst_176 : f32 to vector<1x1xf32>
    %884 = arith.addf %882, %883 : vector<1x1xf32>
    %885 = math.rsqrt %884 : vector<1x1xf32>
    %c103 = arith.constant 103 : index
    %886 = memref.load %arg0[%c103] : memref<109xf32, #tpu.memory_space<smem>>
    %887 = vector.broadcast %886 : f32 to vector<1x1xf32>
    %888 = arith.mulf %885, %887 : vector<1x1xf32>
    %c107 = arith.constant 107 : index
    %889 = memref.load %arg0[%c107] : memref<109xf32, #tpu.memory_space<smem>>
    %890 = arith.mulf %876, %888 : vector<1x1xf32>
    %891 = vector.broadcast %889 : f32 to vector<1x1xf32>
    %892 = arith.subf %891, %890 : vector<1x1xf32>
    %893 = vector.broadcast %888 : vector<1x1xf32> to vector<18x8xf32>
    %894 = arith.mulf %772, %893 : vector<18x8xf32>
    %895 = vector.broadcast %892 : vector<1x1xf32> to vector<18x8xf32>
    %896 = arith.addf %894, %895 : vector<18x8xf32>
    %c0_177 = arith.constant 0 : index
    %c0_178 = arith.constant 0 : index
    %897 = vector.load %arg2[%c0_177, %c0_178] : memref<18x4xf32, #tpu.memory_space<vmem>>, vector<18x1xf32>
    %898 = vector.broadcast %897 : vector<18x1xf32> to vector<18x8xf32>
    %899 = arith.mulf %803, %898 : vector<18x8xf32>
    %cst_179 = arith.constant dense<0.000000e+00> : vector<8xf32>
    %900 = vector.multi_reduction <add>, %899, %cst_179 [0] : vector<18x8xf32> to vector<8xf32>
    %901 = vector.shape_cast %900 : vector<8xf32> to vector<1x8xf32>
    %c0_180 = arith.constant 0 : index
    %c1_181 = arith.constant 1 : index
    %902 = vector.load %arg2[%c0_180, %c1_181] : memref<18x4xf32, #tpu.memory_space<vmem>>, vector<18x1xf32>
    %903 = vector.broadcast %902 : vector<18x1xf32> to vector<18x8xf32>
    %904 = arith.mulf %834, %903 : vector<18x8xf32>
    %cst_182 = arith.constant dense<0.000000e+00> : vector<8xf32>
    %905 = vector.multi_reduction <add>, %904, %cst_182 [0] : vector<18x8xf32> to vector<8xf32>
    %906 = vector.shape_cast %905 : vector<8xf32> to vector<1x8xf32>
    %907 = arith.addf %901, %906 : vector<1x8xf32>
    %c0_183 = arith.constant 0 : index
    %c2_184 = arith.constant 2 : index
    %908 = vector.load %arg2[%c0_183, %c2_184] : memref<18x4xf32, #tpu.memory_space<vmem>>, vector<18x1xf32>
    %909 = vector.broadcast %908 : vector<18x1xf32> to vector<18x8xf32>
    %910 = arith.mulf %865, %909 : vector<18x8xf32>
    %cst_185 = arith.constant dense<0.000000e+00> : vector<8xf32>
    %911 = vector.multi_reduction <add>, %910, %cst_185 [0] : vector<18x8xf32> to vector<8xf32>
    %912 = vector.shape_cast %911 : vector<8xf32> to vector<1x8xf32>
    %913 = arith.addf %907, %912 : vector<1x8xf32>
    %c0_186 = arith.constant 0 : index
    %c3_187 = arith.constant 3 : index
    %914 = vector.load %arg2[%c0_186, %c3_187] : memref<18x4xf32, #tpu.memory_space<vmem>>, vector<18x1xf32>
    %915 = vector.broadcast %914 : vector<18x1xf32> to vector<18x8xf32>
    %916 = arith.mulf %896, %915 : vector<18x8xf32>
    %cst_188 = arith.constant dense<0.000000e+00> : vector<8xf32>
    %917 = vector.multi_reduction <add>, %916, %cst_188 [0] : vector<18x8xf32> to vector<8xf32>
    %918 = vector.shape_cast %917 : vector<8xf32> to vector<1x8xf32>
    %919 = arith.addf %913, %918 : vector<1x8xf32>
    %c108 = arith.constant 108 : index
    %920 = memref.load %arg0[%c108] : memref<109xf32, #tpu.memory_space<smem>>
    %921 = vector.broadcast %920 : f32 to vector<1x8xf32>
    %922 = arith.addf %919, %921 : vector<1x8xf32>
    %923 = arith.negf %922 : vector<1x8xf32>
    %924 = math.exp %923 : vector<1x8xf32>
    %cst_189 = arith.constant 1.000000e+00 : f32
    %925 = vector.broadcast %cst_189 : f32 to vector<1x8xf32>
    %926 = arith.addf %925, %924 : vector<1x8xf32>
    %927 = arith.divf %925, %926 : vector<1x8xf32>
    %c0_190 = arith.constant 0 : index
    %c0_191 = arith.constant 0 : index
    %928 = vector.load %arg3[%c0_190, %c0_191] : memref<1x8xf32, #tpu.memory_space<vmem>>, vector<1x8xf32>
    tpu.vector_store %arg3[%c0_190, %c0_191], %927 {strides = array<i32>} : memref<1x8xf32, #tpu.memory_space<vmem>>, vector<1x8xf32>,
    return
  }
}

</mosaic_0001>

<llo_original>
// kernel: tpu_custom_call.1
$region0: #{tpu_custom_call.1}
  #allocation0 [shape = 'u32[]', space=smem, size = 0x4, offset = 0x4, fixed_abs, tag = 'smem constant byte address 0x4 - core index']
  #allocation1 [shape = 'u32[72,128]{1,0:T(1,128)}', space=vmem, size = 0x9000, scoped, tag = 'internal scratch']
  %s0 = inlined_call_operand.vmem [shape: f32[109], index: 0, kind: input, shape index: {}]
  %s1 = inlined_call_operand.vmem [shape: f32[18,8], index: 1, kind: input, shape index: {}]
  %s2 = inlined_call_operand.vmem [shape: f32[18,4], index: 2, kind: input, shape index: {}]
  %s3 = inlined_call_operand.hbm [shape: f32[1,8], index: 3, kind: output, shape index: {}]
  %s4 = sld [smem:[#allocation0]]
  $region26: #{tpu_custom_call.1} parent=0
    _
  %s6 = ssub.s32 1, %s4
  %s7 = scalar_select 0, %s6, %s4
  $region1: #{tpu_custom_call.1} parent=0
    #allocation2 [shape = 'u8[512]{0}', space=smem, size = 0x200, scoped, tag = 'input window, operand 0, single buffered']
    #allocation3 [shape = 's32[1]{0}', space=sflag, size = 0x4, scoped, tag = 'scoped memory for tpu_custom_call.1']
    #allocation4 [shape = 's32[1]{0}', space=sflag, size = 0x4, scoped, tag = 'scoped memory for tpu_custom_call.1']
    #allocation5 [shape = 'u8[512]{0}', space=vmem, size = 0x400, scoped, tag = 'output window, operand 0, single buffered']
    %8 = vsyncpa [#allocation4], 0
    %9 = vsyncpa [#allocation3], 0
    // Predicated region
    $region2: #{tpu_custom_call.1} parent=1 // pred_check
      _
    $region3: #{tpu_custom_call.1} parent=1 // pred_check_branch
      %11 = sbr.rel (0) target = $region5
    $region4: #{tpu_custom_call.1} parent=1 // pred_region
      %13 = vsyncadd [#allocation4], 0
      %s15 = sshll.u32 %s0, 4
      %s16 = int_to_ptr.vmem [resolvable:$true] %s15
      %18 = dma.vmem_to_smem %s16, 16, [#allocation2], [#allocation4]
    $region5: #{tpu_custom_call.1} parent=1 // pred_fallthru
      _
    // Predicated region
    $region6: #{tpu_custom_call.1} parent=1 // pred_check
      _
    $region7: #{tpu_custom_call.1} parent=1 // pred_check_branch
      %20 = sbr.rel (0) target = $region9
    $region8: #{tpu_custom_call.1} parent=1 // pred_region
      _
    $region9: #{tpu_custom_call.1} parent=1 // pred_fallthru
      _
    // Predicated region
    $region10: #{tpu_custom_call.1} parent=1 // pred_check
      _
    $region11: #{tpu_custom_call.1} parent=1 // pred_check_branch
      %22 = sbr.rel (0) target = $region13
    $region12: #{tpu_custom_call.1} parent=1 // pred_region
      _
    $region13: #{tpu_custom_call.1} parent=1 // pred_fallthru
      _
    // Predicated region
    $region14: #{tpu_custom_call.1} parent=1 // pred_check
      _
    $region15: #{tpu_custom_call.1} parent=1 // pred_check_branch
      %24 = sbr.rel (0) target = $region17
    $region16: #{tpu_custom_call.1} parent=1 // pred_region
      %26 = dma.done [#allocation4], 16
    $region17: #{tpu_custom_call.1} parent=1 // pred_fallthru
      _
    %27 = sfence
    %v28 = vld [vmem:[%s1] sm:$0xff]
    %v29 = vld [vmem:[%s1 + $0x8] sm:$0xff]
    %v30 = vld [vmem:[%s1 + $0x10] sm:$0x3]
    %s31 = sld [smem:[#allocation2]]
    %v32 = vstv %s31
    %v33 = vmul.f32 %v32, %v28
    %v34 = vmul.f32 %v32, %v29
    %v35 = vmul.f32 %v32, %v30
    %s36 = sld [smem:[#allocation2 + $0xc]]
    %v37 = vstv %s36
    %v38 = vadd.f32 %v33, %v37
    %v39 = vadd.f32 %v34, %v37
    %v40 = vadd.f32 %v35, %v37
    %vm41 = vcmp.gt.f32.partialorder %v38, 0.0
    %vm42 = vcmp.gt.f32.partialorder %v39, 0.0
    %vm43 = vcmp.gt.f32.partialorder %v40, 0.0
    %v44 = vmin.f32 %v38, 0.0
    %v45 = vmin.f32 %v39, 0.0
    %v46 = vmin.f32 %v40, 0.0
    %v47 = vmul.f32 %v44, 1.442695
    %v48 = vpow.pop %v47
    %v49 = vmul.f32 %v45, 1.442695
    %v50 = vpow.pop %v49
    %v51 = vmul.f32 %v46, 1.442695
    %v52 = vpow.pop %v51
    %v53 = vsub.f32 %v48, 1.0
    %v54 = vsub.f32 %v50, 1.0
    %v55 = vsub.f32 %v52, 1.0
    %v56 = vsel %vm41, %v38, %v53
    %v57 = vsel %vm42, %v39, %v54
    %v58 = vsel %vm43, %v40, %v55
    %s59 = sld [smem:[#allocation2 + $0x1]]
    %v60 = vstv %s59
    %v61 = vmul.f32 %v60, %v28
    %v62 = vmul.f32 %v60, %v29
    %v63 = vmul.f32 %v60, %v30
    %s64 = sld [smem:[#allocation2 + $0xd]]
    %v65 = vstv %s64
    %v66 = vadd.f32 %v61, %v65
    %v67 = vadd.f32 %v62, %v65
    %v68 = vadd.f32 %v63, %v65
    %vm69 = vcmp.gt.f32.partialorder %v66, 0.0
    %vm70 = vcmp.gt.f32.partialorder %v67, 0.0
    %vm71 = vcmp.gt.f32.partialorder %v68, 0.0
    %v72 = vmin.f32 %v66, 0.0
    %v73 = vmin.f32 %v67, 0.0
    %v74 = vmin.f32 %v68, 0.0
    %v75 = vmul.f32 %v72, 1.442695
    %v76 = vpow.pop %v75
    %v77 = vmul.f32 %v73, 1.442695
    %v78 = vpow.pop %v77
    %v79 = vmul.f32 %v74, 1.442695
    %v80 = vpow.pop %v79
    %v81 = vsub.f32 %v76, 1.0
    %v82 = vsub.f32 %v78, 1.0
    %v83 = vsub.f32 %v80, 1.0
    %v84 = vsel %vm69, %v66, %v81
    %v85 = vsel %vm70, %v67, %v82
    %v86 = vsel %vm71, %v68, %v83
    %s87 = sld [smem:[#allocation2 + $0x2]]
    %v88 = vstv %s87
    %v89 = vmul.f32 %v88, %v28
    %v90 = vmul.f32 %v88, %v29
    %v91 = vmul.f32 %v88, %v30
    %s92 = sld [smem:[#allocation2 + $0xe]]
    %v93 = vstv %s92
    %v94 = vadd.f32 %v89, %v93
    %v95 = vadd.f32 %v90, %v93
    %v96 = vadd.f32 %v91, %v93
    %vm97 = vcmp.gt.f32.partialorder %v94, 0.0
    %vm98 = vcmp.gt.f32.partialorder %v95, 0.0
    %vm99 = vcmp.gt.f32.partialorder %v96, 0.0
    %v100 = vmin.f32 %v94, 0.0
    %v101 = vmin.f32 %v95, 0.0
    %v102 = vmin.f32 %v96, 0.0
    %v103 = vmul.f32 %v100, 1.442695
    %v104 = vpow.pop %v103
    %v105 = vmul.f32 %v101, 1.442695
    %v106 = vpow.pop %v105
    %v107 = vmul.f32 %v102, 1.442695
    %v108 = vpow.pop %v107
    %v109 = vsub.f32 %v104, 1.0
    %v110 = vsub.f32 %v106, 1.0
    %v111 = vsub.f32 %v108, 1.0
    %v112 = vsel %vm97, %v94, %v109
    %v113 = vsel %vm98, %v95, %v110
    %v114 = vsel %vm99, %v96, %v111
    %s115 = sld [smem:[#allocation2 + $0x3]]
    %v116 = vstv %s115
    %v117 = vmul.f32 %v116, %v28
    %v118 = vmul.f32 %v116, %v29
    %v119 = vmul.f32 %v116, %v30
    %s120 = sld [smem:[#allocation2 + $0xf]]
    %v121 = vstv %s120
    %v122 = vadd.f32 %v117, %v121
    %v123 = vadd.f32 %v118, %v121
    %v124 = vadd.f32 %v119, %v121
    %vm125 = vcmp.gt.f32.partialorder %v122, 0.0
    %vm126 = vcmp.gt.f32.partialorder %v123, 0.0
    %vm127 = vcmp.gt.f32.partialorder %v124, 0.0
    %v128 = vmin.f32 %v122, 0.0
    %v129 = vmin.f32 %v123, 0.0
    %v130 = vmin.f32 %v124, 0.0
    %v131 = vmul.f32 %v128, 1.442695
    %v132 = vpow.pop %v131
    %v133 = vmul.f32 %v129, 1.442695
    %v134 = vpow.pop %v133
    %v135 = vmul.f32 %v130, 1.442695
    %v136 = vpow.pop %v135
    %v137 = vsub.f32 %v132, 1.0
    %v138 = vsub.f32 %v134, 1.0
    %v139 = vsub.f32 %v136, 1.0
    %v140 = vsel %vm125, %v122, %v137
    %v141 = vsel %vm126, %v123, %v138
    %v142 = vsel %vm127, %v124, %v139
    %s143 = sld [smem:[#allocation2 + $0x4]]
    %v144 = vstv %s143
    %v145 = vmul.f32 %v144, %v28
    %v146 = vmul.f32 %v144, %v29
    %v147 = vmul.f32 %v144, %v30
    %s148 = sld [smem:[#allocation2 + $0x10]]
    %v149 = vstv %s148
    %v150 = vadd.f32 %v145, %v149
    %v151 = vadd.f32 %v146, %v149
    %v152 = vadd.f32 %v147, %v149
    %vm153 = vcmp.gt.f32.partialorder %v150, 0.0
    %vm154 = vcmp.gt.f32.partialorder %v151, 0.0
    %vm155 = vcmp.gt.f32.partialorder %v152, 0.0
    %v156 = vmin.f32 %v150, 0.0
    %v157 = vmin.f32 %v151, 0.0
    %v158 = vmin.f32 %v152, 0.0
    %v159 = vmul.f32 %v156, 1.442695
    %v160 = vpow.pop %v159
    %v161 = vmul.f32 %v157, 1.442695
    %v162 = vpow.pop %v161
    %v163 = vmul.f32 %v158, 1.442695
    %v164 = vpow.pop %v163
    %v165 = vsub.f32 %v160, 1.0
    %v166 = vsub.f32 %v162, 1.0
    %v167 = vsub.f32 %v164, 1.0
    %v168 = vsel %vm153, %v150, %v165
    %v169 = vsel %vm154, %v151, %v166
    %v170 = vsel %vm155, %v152, %v167
    %s171 = sld [smem:[#allocation2 + $0x5]]
    %v172 = vstv %s171
    %v173 = vmul.f32 %v172, %v28
    %v174 = vmul.f32 %v172, %v29
    %v175 = vmul.f32 %v172, %v30
    %s176 = sld [smem:[#allocation2 + $0x11]]
    %v177 = vstv %s176
    %v178 = vadd.f32 %v173, %v177
    %v179 = vadd.f32 %v174, %v177
    %v180 = vadd.f32 %v175, %v177
    %vm181 = vcmp.gt.f32.partialorder %v178, 0.0
    %vm182 = vcmp.gt.f32.partialorder %v179, 0.0
    %vm183 = vcmp.gt.f32.partialorder %v180, 0.0
    %v184 = vmin.f32 %v178, 0.0
    %v185 = vmin.f32 %v179, 0.0
    %v186 = vmin.f32 %v180, 0.0
    %v187 = vmul.f32 %v184, 1.442695
    %v188 = vpow.pop %v187
    %v189 = vmul.f32 %v185, 1.442695
    %v190 = vpow.pop %v189
    %v191 = vmul.f32 %v186, 1.442695
    %v192 = vpow.pop %v191
    %v193 = vsub.f32 %v188, 1.0
    %v194 = vsub.f32 %v190, 1.0
    %v195 = vsub.f32 %v192, 1.0
    %v196 = vsel %vm181, %v178, %v193
    %v197 = vsel %vm182, %v179, %v194
    %v198 = vsel %vm183, %v180, %v195
    %s199 = sld [smem:[#allocation2 + $0x6]]
    %v200 = vstv %s199
    %v201 = vmul.f32 %v200, %v28
    %v202 = vmul.f32 %v200, %v29
    %v203 = vmul.f32 %v200, %v30
    %s204 = sld [smem:[#allocation2 + $0x12]]
    %v205 = vstv %s204
    %v206 = vadd.f32 %v201, %v205
    %v207 = vadd.f32 %v202, %v205
    %v208 = vadd.f32 %v203, %v205
    %vm209 = vcmp.gt.f32.partialorder %v206, 0.0
    %vm210 = vcmp.gt.f32.partialorder %v207, 0.0
    %vm211 = vcmp.gt.f32.partialorder %v208, 0.0
    %v212 = vmin.f32 %v206, 0.0
    %v213 = vmin.f32 %v207, 0.0
    %v214 = vmin.f32 %v208, 0.0
    %v215 = vmul.f32 %v212, 1.442695
    %v216 = vpow.pop %v215
    %v217 = vmul.f32 %v213, 1.442695
    %v218 = vpow.pop %v217
    %v219 = vmul.f32 %v214, 1.442695
    %v220 = vpow.pop %v219
    %v221 = vsub.f32 %v216, 1.0
    %v222 = vsub.f32 %v218, 1.0
    %v223 = vsub.f32 %v220, 1.0
    %v224 = vsel %vm209, %v206, %v221
    %v225 = vsel %vm210, %v207, %v222
    %v226 = vsel %vm211, %v208, %v223
    %s227 = sld [smem:[#allocation2 + $0x7]]
    %v228 = vstv %s227
    %v229 = vmul.f32 %v228, %v28
    %v230 = vmul.f32 %v228, %v29
    %v231 = vmul.f32 %v228, %v30
    %s232 = sld [smem:[#allocation2 + $0x13]]
    %v233 = vstv %s232
    %v234 = vadd.f32 %v229, %v233
    %v235 = vadd.f32 %v230, %v233
    %v236 = vadd.f32 %v231, %v233
    %vm237 = vcmp.gt.f32.partialorder %v234, 0.0
    %vm238 = vcmp.gt.f32.partialorder %v235, 0.0
    %vm239 = vcmp.gt.f32.partialorder %v236, 0.0
    %v240 = vmin.f32 %v234, 0.0
    %v241 = vmin.f32 %v235, 0.0
    %v242 = vmin.f32 %v236, 0.0
    %v243 = vmul.f32 %v240, 1.442695
    %v244 = vpow.pop %v243
    %v245 = vmul.f32 %v241, 1.442695
    %v246 = vpow.pop %v245
    %v247 = vmul.f32 %v242, 1.442695
    %v248 = vpow.pop %v247
    %v249 = vsub.f32 %v244, 1.0
    %v250 = vsub.f32 %v246, 1.0
    %v251 = vsub.f32 %v248, 1.0
    %v252 = vsel %vm237, %v234, %v249
    %v253 = vsel %vm238, %v235, %v250
    %v254 = vsel %vm239, %v236, %v251
    %s255 = sld [smem:[#allocation2 + $0x8]]
    %v256 = vstv %s255
    %v257 = vmul.f32 %v256, %v28
    %v258 = vmul.f32 %v256, %v29
    %v259 = vmul.f32 %v256, %v30
    %s260 = sld [smem:[#allocation2 + $0x14]]
    %v261 = vstv %s260
    %v262 = vadd.f32 %v257, %v261
    %v263 = vadd.f32 %v258, %v261
    %v264 = vadd.f32 %v259, %v261
    %vm265 = vcmp.gt.f32.partialorder %v262, 0.0
    %vm266 = vcmp.gt.f32.partialorder %v263, 0.0
    %vm267 = vcmp.gt.f32.partialorder %v264, 0.0
    %v268 = vmin.f32 %v262, 0.0
    %v269 = vmin.f32 %v263, 0.0
    %v270 = vmin.f32 %v264, 0.0
    %v271 = vmul.f32 %v268, 1.442695
    %v272 = vpow.pop %v271
    %v273 = vmul.f32 %v269, 1.442695
    %v274 = vpow.pop %v273
    %v275 = vmul.f32 %v270, 1.442695
    %v276 = vpow.pop %v275
    %v277 = vsub.f32 %v272, 1.0
    %v278 = vsub.f32 %v274, 1.0
    %v279 = vsub.f32 %v276, 1.0
    %v280 = vsel %vm265, %v262, %v277
    %v281 = vsel %vm266, %v263, %v278
    %v282 = vsel %vm267, %v264, %v279
    %s283 = sld [smem:[#allocation2 + $0x9]]
    %v284 = vstv %s283
    %v285 = vmul.f32 %v284, %v28
    %v286 = vmul.f32 %v284, %v29
    %v287 = vmul.f32 %v284, %v30
    %s288 = sld [smem:[#allocation2 + $0x15]]
    %v289 = vstv %s288
    %v290 = vadd.f32 %v285, %v289
    %v291 = vadd.f32 %v286, %v289
    %v292 = vadd.f32 %v287, %v289
    %vm293 = vcmp.gt.f32.partialorder %v290, 0.0
    %vm294 = vcmp.gt.f32.partialorder %v291, 0.0
    %vm295 = vcmp.gt.f32.partialorder %v292, 0.0
    %v296 = vmin.f32 %v290, 0.0
    %v297 = vmin.f32 %v291, 0.0
    %v298 = vmin.f32 %v292, 0.0
    %v299 = vmul.f32 %v296, 1.442695
    %v300 = vpow.pop %v299
    %v301 = vmul.f32 %v297, 1.442695
    %v302 = vpow.pop %v301
    %v303 = vmul.f32 %v298, 1.442695
    %v304 = vpow.pop %v303
    %v305 = vsub.f32 %v300, 1.0
    %v306 = vsub.f32 %v302, 1.0
    %v307 = vsub.f32 %v304, 1.0
    %v308 = vsel %vm293, %v290, %v305
    %v309 = vsel %vm294, %v291, %v306
    %v310 = vsel %vm295, %v292, %v307
    %s311 = sld [smem:[#allocation2 + $0xa]]
    %v312 = vstv %s311
    %v313 = vmul.f32 %v312, %v28
    %v314 = vmul.f32 %v312, %v29
    %v315 = vmul.f32 %v312, %v30
    %s316 = sld [smem:[#allocation2 + $0x16]]
    %v317 = vstv %s316
    %v318 = vadd.f32 %v313, %v317
    %v319 = vadd.f32 %v314, %v317
    %v320 = vadd.f32 %v315, %v317
    %vm321 = vcmp.gt.f32.partialorder %v318, 0.0
    %vm322 = vcmp.gt.f32.partialorder %v319, 0.0
    %vm323 = vcmp.gt.f32.partialorder %v320, 0.0
    %v324 = vmin.f32 %v318, 0.0
    %v325 = vmin.f32 %v319, 0.0
    %v326 = vmin.f32 %v320, 0.0
    %v327 = vmul.f32 %v324, 1.442695
    %v328 = vpow.pop %v327
    %v329 = vmul.f32 %v325, 1.442695
    %v330 = vpow.pop %v329
    %v331 = vmul.f32 %v326, 1.442695
    %v332 = vpow.pop %v331
    %v333 = vsub.f32 %v328, 1.0
    %v334 = vsub.f32 %v330, 1.0
    %v335 = vsub.f32 %v332, 1.0
    %v336 = vsel %vm321, %v318, %v333
    %v337 = vsel %vm322, %v319, %v334
    %v338 = vsel %vm323, %v320, %v335
    %s339 = sld [smem:[#allocation2 + $0xb]]
    %v340 = vstv %s339
    %v341 = vmul.f32 %v340, %v28
    %v342 = vmul.f32 %v340, %v29
    %v343 = vmul.f32 %v340, %v30
    %s344 = sld [smem:[#allocation2 + $0x17]]
    %v345 = vstv %s344
    %v346 = vadd.f32 %v341, %v345
    %v347 = vadd.f32 %v342, %v345
    %v348 = vadd.f32 %v343, %v345
    %vm349 = vcmp.gt.f32.partialorder %v346, 0.0
    %vm350 = vcmp.gt.f32.partialorder %v347, 0.0
    %vm351 = vcmp.gt.f32.partialorder %v348, 0.0
    %v352 = vmin.f32 %v346, 0.0
    %v353 = vmin.f32 %v347, 0.0
    %v354 = vmin.f32 %v348, 0.0
    %v355 = vmul.f32 %v352, 1.442695
    %v356 = vpow.pop %v355
    %v357 = vmul.f32 %v353, 1.442695
    %v358 = vpow.pop %v357
    %v359 = vmul.f32 %v354, 1.442695
    %v360 = vpow.pop %v359
    %v361 = vsub.f32 %v356, 1.0
    %v362 = vsub.f32 %v358, 1.0
    %v363 = vsub.f32 %v360, 1.0
    %v364 = vsel %vm349, %v346, %v361
    %v365 = vsel %vm350, %v347, %v362
    %v366 = vsel %vm351, %v348, %v363
    %vm367 = vcmask 64512
    %v368 = vsel %vm367, %v56, 0.0
    %369 = vadd.xlane.f32.xlu0 %v368
    %v370 = vpop.xlane.xlu0 %369
    %v371 = vsel %vm367, %v57, 0.0
    %372 = vadd.xlane.f32.xlu0 %v371
    %v373 = vpop.xlane.xlu0 %372
    %vm374 = vcmask 58368
    %v375 = vsel %vm374, %v58, 0.0
    %376 = vadd.xlane.f32.xlu0 %v375
    %v377 = vpop.xlane.xlu0 %376
    %v378 = vadd.f32 %v370, %v373
    %vm379 = vcmask 1041408
    %v380 = vsel %vm379, %v377, 0.0
    %v381 = vadd.f32 %v378, %v380
    %v382 = vrot.slane %v381, 4
    %v383 = vadd.f32 %v381, %v382
    %v384 = vrot.slane %v383, 2
    %v385 = vadd.f32 %v383, %v384
    %v386 = vrot.slane %v385, 1
    %v387 = vadd.f32 %v385, %v386
    %v388 = vmul.f32 %v56, %v56
    %v389 = vmul.f32 %v57, %v57
    %v390 = vmul.f32 %v58, %v58
    %v391 = vsel %vm367, %v388, 0.0
    %392 = vadd.xlane.f32.xlu0 %v391
    %v393 = vpop.xlane.xlu0 %392
    %v394 = vsel %vm367, %v389, 0.0
    %395 = vadd.xlane.f32.xlu0 %v394
    %v396 = vpop.xlane.xlu0 %395
    %v397 = vsel %vm374, %v390, 0.0
    %398 = vadd.xlane.f32.xlu0 %v397
    %v399 = vpop.xlane.xlu0 %398
    %v400 = vadd.f32 %v393, %v396
    %v401 = vsel %vm379, %v399, 0.0
    %v402 = vadd.f32 %v400, %v401
    %v403 = vrot.slane %v402, 4
    %v404 = vadd.f32 %v402, %v403
    %v405 = vrot.slane %v404, 2
    %v406 = vadd.f32 %v404, %v405
    %v407 = vrot.slane %v406, 1
    %v408 = vadd.f32 %v406, %v407
    %v409 = vmul.f32 %v387, 0.0069444445
    %v410 = vmul.f32 %v408, 0.0069444445
    %v411 = vmul.f32 %v409, %v409
    %v412 = vsub.f32 %v410, %v411
    %v413 = vmax.f32 %v412, 0.0
    %v414 = vadd.f32 %v413, 1e-05
    %v415 = vrsqrt.pop %v414
    %v416 = vmul.f32 %v415, %v414
    %v417 = vmul.f32 %v416, %v415
    %v418 = vmul.f32 0.5, %v417
    %v419 = vsub.f32 1.5, %v418
    %v420 = vmul.f32 %v415, %v419
    %vm421 = vweird.f32 %v414
    %vm422 = vweird.f32 %v415
    %vm423 = vmor %vm421, %vm422
    %v424 = vsel %vm423, %v415, %v420
    %s425 = sld [smem:[#allocation2 + $0x18]]
    %v426 = vstv %s425
    %v427 = vmul.f32 %v424, %v426
    %s428 = sld [smem:[#allocation2 + $0x24]]
    %v429 = vmul.f32 %v409, %v427
    %v430 = vstv %s428
    %v431 = vsub.f32 %v430, %v429
    %v432 = vmul.f32 %v56, %v427
    %v433 = vmul.f32 %v57, %v427
    %v434 = vmul.f32 %v58, %v427
    %v435 = vadd.f32 %v432, %v431
    %v436 = vadd.f32 %v433, %v431
    %v437 = vadd.f32 %v434, %v431
    %v438 = vsel %vm367, %v84, 0.0
    %439 = vadd.xlane.f32.xlu0 %v438
    %v440 = vpop.xlane.xlu0 %439
    %v441 = vsel %vm367, %v85, 0.0
    %442 = vadd.xlane.f32.xlu0 %v441
    %v443 = vpop.xlane.xlu0 %442
    %v444 = vsel %vm374, %v86, 0.0
    %445 = vadd.xlane.f32.xlu0 %v444
    %v446 = vpop.xlane.xlu0 %445
    %v447 = vadd.f32 %v440, %v443
    %v448 = vsel %vm379, %v446, 0.0
    %v449 = vadd.f32 %v447, %v448
    %v450 = vrot.slane %v449, 4
    %v451 = vadd.f32 %v449, %v450
    %v452 = vrot.slane %v451, 2
    %v453 = vadd.f32 %v451, %v452
    %v454 = vrot.slane %v453, 1
    %v455 = vadd.f32 %v453, %v454
    %v456 = vmul.f32 %v84, %v84
    %v457 = vmul.f32 %v85, %v85
    %v458 = vmul.f32 %v86, %v86
    %v459 = vsel %vm367, %v456, 0.0
    %460 = vadd.xlane.f32.xlu0 %v459
    %v461 = vpop.xlane.xlu0 %460
    %v462 = vsel %vm367, %v457, 0.0
    %463 = vadd.xlane.f32.xlu0 %v462
    %v464 = vpop.xlane.xlu0 %463
    %v465 = vsel %vm374, %v458, 0.0
    %466 = vadd.xlane.f32.xlu0 %v465
    %v467 = vpop.xlane.xlu0 %466
    %v468 = vadd.f32 %v461, %v464
    %v469 = vsel %vm379, %v467, 0.0
    %v470 = vadd.f32 %v468, %v469
    %v471 = vrot.slane %v470, 4
    %v472 = vadd.f32 %v470, %v471
    %v473 = vrot.slane %v472, 2
    %v474 = vadd.f32 %v472, %v473
    %v475 = vrot.slane %v474, 1
    %v476 = vadd.f32 %v474, %v475
    %v477 = vmul.f32 %v455, 0.0069444445
    %v478 = vmul.f32 %v476, 0.0069444445
    %v479 = vmul.f32 %v477, %v477
    %v480 = vsub.f32 %v478, %v479
    %v481 = vmax.f32 %v480, 0.0
    %v482 = vadd.f32 %v481, 1e-05
    %v483 = vrsqrt.pop %v482
    %v484 = vmul.f32 %v483, %v482
    %v485 = vmul.f32 %v484, %v483
    %v486 = vmul.f32 0.5, %v485
    %v487 = vsub.f32 1.5, %v486
    %v488 = vmul.f32 %v483, %v487
    %vm489 = vweird.f32 %v482
    %vm490 = vweird.f32 %v483
    %vm491 = vmor %vm489, %vm490
    %v492 = vsel %vm491, %v483, %v488
    %s493 = sld [smem:[#allocation2 + $0x19]]
    %v494 = vstv %s493
    %v495 = vmul.f32 %v492, %v494
    %s496 = sld [smem:[#allocation2 + $0x25]]
    %v497 = vmul.f32 %v477, %v495
    %v498 = vstv %s496
    %v499 = vsub.f32 %v498, %v497
    %v500 = vmul.f32 %v84, %v495
    %v501 = vmul.f32 %v85, %v495
    %v502 = vmul.f32 %v86, %v495
    %v503 = vadd.f32 %v500, %v499
    %v504 = vadd.f32 %v501, %v499
    %v505 = vadd.f32 %v502, %v499
    %v506 = vsel %vm367, %v112, 0.0
    %507 = vadd.xlane.f32.xlu0 %v506
    %v508 = vpop.xlane.xlu0 %507
    %v509 = vsel %vm367, %v113, 0.0
    %510 = vadd.xlane.f32.xlu0 %v509
    %v511 = vpop.xlane.xlu0 %510
    %v512 = vsel %vm374, %v114, 0.0
    %513 = vadd.xlane.f32.xlu0 %v512
    %v514 = vpop.xlane.xlu0 %513
    %v515 = vadd.f32 %v508, %v511
    %v516 = vsel %vm379, %v514, 0.0
    %v517 = vadd.f32 %v515, %v516
    %v518 = vrot.slane %v517, 4
    %v519 = vadd.f32 %v517, %v518
    %v520 = vrot.slane %v519, 2
    %v521 = vadd.f32 %v519, %v520
    %v522 = vrot.slane %v521, 1
    %v523 = vadd.f32 %v521, %v522
    %v524 = vmul.f32 %v112, %v112
    %v525 = vmul.f32 %v113, %v113
    %v526 = vmul.f32 %v114, %v114
    %v527 = vsel %vm367, %v524, 0.0
    %528 = vadd.xlane.f32.xlu0 %v527
    %v529 = vpop.xlane.xlu0 %528
    %v530 = vsel %vm367, %v525, 0.0
    %531 = vadd.xlane.f32.xlu0 %v530
    %v532 = vpop.xlane.xlu0 %531
    %v533 = vsel %vm374, %v526, 0.0
    %534 = vadd.xlane.f32.xlu0 %v533
    %v535 = vpop.xlane.xlu0 %534
    %v536 = vadd.f32 %v529, %v532
    %v537 = vsel %vm379, %v535, 0.0
    %v538 = vadd.f32 %v536, %v537
    %v539 = vrot.slane %v538, 4
    %v540 = vadd.f32 %v538, %v539
    %v541 = vrot.slane %v540, 2
    %v542 = vadd.f32 %v540, %v541
    %v543 = vrot.slane %v542, 1
    %v544 = vadd.f32 %v542, %v543
    %v545 = vmul.f32 %v523, 0.0069444445
    %v546 = vmul.f32 %v544, 0.0069444445
    %v547 = vmul.f32 %v545, %v545
    %v548 = vsub.f32 %v546, %v547
    %v549 = vmax.f32 %v548, 0.0
    %v550 = vadd.f32 %v549, 1e-05
    %v551 = vrsqrt.pop %v550
    %v552 = vmul.f32 %v551, %v550
    %v553 = vmul.f32 %v552, %v551
    %v554 = vmul.f32 0.5, %v553
    %v555 = vsub.f32 1.5, %v554
    %v556 = vmul.f32 %v551, %v555
    %vm557 = vweird.f32 %v550
    %vm558 = vweird.f32 %v551
    %vm559 = vmor %vm557, %vm558
    %v560 = vsel %vm559, %v551, %v556
    %s561 = sld [smem:[#allocation2 + $0x1a]]
    %v562 = vstv %s561
    %v563 = vmul.f32 %v560, %v562
    %s564 = sld [smem:[#allocation2 + $0x26]]
    %v565 = vmul.f32 %v545, %v563
    %v566 = vstv %s564
    %v567 = vsub.f32 %v566, %v565
    %v568 = vmul.f32 %v112, %v563
    %v569 = vmul.f32 %v113, %v563
    %v570 = vmul.f32 %v114, %v563
    %v571 = vadd.f32 %v568, %v567
    %v572 = vadd.f32 %v569, %v567
    %v573 = vadd.f32 %v570, %v567
    %v574 = vsel %vm367, %v140, 0.0
    %575 = vadd.xlane.f32.xlu0 %v574
    %v576 = vpop.xlane.xlu0 %575
    %v577 = vsel %vm367, %v141, 0.0
    %578 = vadd.xlane.f32.xlu0 %v577
    %v579 = vpop.xlane.xlu0 %578
    %v580 = vsel %vm374, %v142, 0.0
    %581 = vadd.xlane.f32.xlu0 %v580
    %v582 = vpop.xlane.xlu0 %581
    %v583 = vadd.f32 %v576, %v579
    %v584 = vsel %vm379, %v582, 0.0
    %v585 = vadd.f32 %v583, %v584
    %v586 = vrot.slane %v585, 4
    %v587 = vadd.f32 %v585, %v586
    %v588 = vrot.slane %v587, 2
    %v589 = vadd.f32 %v587, %v588
    %v590 = vrot.slane %v589, 1
    %v591 = vadd.f32 %v589, %v590
    %v592 = vmul.f32 %v140, %v140
    %v593 = vmul.f32 %v141, %v141
    %v594 = vmul.f32 %v142, %v142
    %v595 = vsel %vm367, %v592, 0.0
    %596 = vadd.xlane.f32.xlu0 %v595
    %v597 = vpop.xlane.xlu0 %596
    %v598 = vsel %vm367, %v593, 0.0
    %599 = vadd.xlane.f32.xlu0 %v598
    %v600 = vpop.xlane.xlu0 %599
    %v601 = vsel %vm374, %v594, 0.0
    %602 = vadd.xlane.f32.xlu0 %v601
    %v603 = vpop.xlane.xlu0 %602
    %v604 = vadd.f32 %v597, %v600
    %v605 = vsel %vm379, %v603, 0.0
    %v606 = vadd.f32 %v604, %v605
    %v607 = vrot.slane %v606, 4
    %v608 = vadd.f32 %v606, %v607
    %v609 = vrot.slane %v608, 2
    %v610 = vadd.f32 %v608, %v609
    %v611 = vrot.slane %v610, 1
    %v612 = vadd.f32 %v610, %v611
    %v613 = vmul.f32 %v591, 0.0069444445
    %v614 = vmul.f32 %v612, 0.0069444445
    %v615 = vmul.f32 %v613, %v613
    %v616 = vsub.f32 %v614, %v615
    %v617 = vmax.f32 %v616, 0.0
    %v618 = vadd.f32 %v617, 1e-05
    %v619 = vrsqrt.pop %v618
    %v620 = vmul.f32 %v619, %v618
    %v621 = vmul.f32 %v620, %v619
    %v622 = vmul.f32 0.5, %v621
    %v623 = vsub.f32 1.5, %v622
    %v624 = vmul.f32 %v619, %v623
    %vm625 = vweird.f32 %v618
    %vm626 = vweird.f32 %v619
    %vm627 = vmor %vm625, %vm626
    %v628 = vsel %vm627, %v619, %v624
    %s629 = sld [smem:[#allocation2 + $0x1b]]
    %v630 = vstv %s629
    %v631 = vmul.f32 %v628, %v630
    %s632 = sld [smem:[#allocation2 + $0x27]]
    %v633 = vmul.f32 %v613, %v631
    %v634 = vstv %s632
    %v635 = vsub.f32 %v634, %v633
    %v636 = vmul.f32 %v140, %v631
    %v637 = vmul.f32 %v141, %v631
    %v638 = vmul.f32 %v142, %v631
    %v639 = vadd.f32 %v636, %v635
    %v640 = vadd.f32 %v637, %v635
    %v641 = vadd.f32 %v638, %v635
    %v642 = vsel %vm367, %v168, 0.0
    %643 = vadd.xlane.f32.xlu0 %v642
    %v644 = vpop.xlane.xlu0 %643
    %v645 = vsel %vm367, %v169, 0.0
    %646 = vadd.xlane.f32.xlu0 %v645
    %v647 = vpop.xlane.xlu0 %646
    %v648 = vsel %vm374, %v170, 0.0
    %649 = vadd.xlane.f32.xlu0 %v648
    %v650 = vpop.xlane.xlu0 %649
    %v651 = vadd.f32 %v644, %v647
    %v652 = vsel %vm379, %v650, 0.0
    %v653 = vadd.f32 %v651, %v652
    %v654 = vrot.slane %v653, 4
    %v655 = vadd.f32 %v653, %v654
    %v656 = vrot.slane %v655, 2
    %v657 = vadd.f32 %v655, %v656
    %v658 = vrot.slane %v657, 1
    %v659 = vadd.f32 %v657, %v658
    %v660 = vmul.f32 %v168, %v168
    %v661 = vmul.f32 %v169, %v169
    %v662 = vmul.f32 %v170, %v170
    %v663 = vsel %vm367, %v660, 0.0
    %664 = vadd.xlane.f32.xlu0 %v663
    %v665 = vpop.xlane.xlu0 %664
    %v666 = vsel %vm367, %v661, 0.0
    %667 = vadd.xlane.f32.xlu0 %v666
    %v668 = vpop.xlane.xlu0 %667
    %v669 = vsel %vm374, %v662, 0.0
    %670 = vadd.xlane.f32.xlu0 %v669
    %v671 = vpop.xlane.xlu0 %670
    %v672 = vadd.f32 %v665, %v668
    %v673 = vsel %vm379, %v671, 0.0
    %v674 = vadd.f32 %v672, %v673
    %v675 = vrot.slane %v674, 4
    %v676 = vadd.f32 %v674, %v675
    %v677 = vrot.slane %v676, 2
    %v678 = vadd.f32 %v676, %v677
    %v679 = vrot.slane %v678, 1
    %v680 = vadd.f32 %v678, %v679
    %v681 = vmul.f32 %v659, 0.0069444445
    %v682 = vmul.f32 %v680, 0.0069444445
    %v683 = vmul.f32 %v681, %v681
    %v684 = vsub.f32 %v682, %v683
    %v685 = vmax.f32 %v684, 0.0
    %v686 = vadd.f32 %v685, 1e-05
    %v687 = vrsqrt.pop %v686
    %v688 = vmul.f32 %v687, %v686
    %v689 = vmul.f32 %v688, %v687
    %v690 = vmul.f32 0.5, %v689
    %v691 = vsub.f32 1.5, %v690
    %v692 = vmul.f32 %v687, %v691
    %vm693 = vweird.f32 %v686
    %vm694 = vweird.f32 %v687
    %vm695 = vmor %vm693, %vm694
    %v696 = vsel %vm695, %v687, %v692
    %s697 = sld [smem:[#allocation2 + $0x1c]]
    %v698 = vstv %s697
    %v699 = vmul.f32 %v696, %v698
    %s700 = sld [smem:[#allocation2 + $0x28]]
    %v701 = vmul.f32 %v681, %v699
    %v702 = vstv %s700
    %v703 = vsub.f32 %v702, %v701
    %v704 = vmul.f32 %v168, %v699
    %v705 = vmul.f32 %v169, %v699
    %v706 = vmul.f32 %v170, %v699
    %v707 = vadd.f32 %v704, %v703
    %v708 = vadd.f32 %v705, %v703
    %v709 = vadd.f32 %v706, %v703
    %v710 = vsel %vm367, %v196, 0.0
    %711 = vadd.xlane.f32.xlu0 %v710
    %v712 = vpop.xlane.xlu0 %711
    %v713 = vsel %vm367, %v197, 0.0
    %714 = vadd.xlane.f32.xlu0 %v713
    %v715 = vpop.xlane.xlu0 %714
    %v716 = vsel %vm374, %v198, 0.0
    %717 = vadd.xlane.f32.xlu0 %v716
    %v718 = vpop.xlane.xlu0 %717
    %v719 = vadd.f32 %v712, %v715
    %v720 = vsel %vm379, %v718, 0.0
    %v721 = vadd.f32 %v719, %v720
    %v722 = vrot.slane %v721, 4
    %v723 = vadd.f32 %v721, %v722
    %v724 = vrot.slane %v723, 2
    %v725 = vadd.f32 %v723, %v724
    %v726 = vrot.slane %v725, 1
    %v727 = vadd.f32 %v725, %v726
    %v728 = vmul.f32 %v196, %v196
    %v729 = vmul.f32 %v197, %v197
    %v730 = vmul.f32 %v198, %v198
    %v731 = vsel %vm367, %v728, 0.0
    %732 = vadd.xlane.f32.xlu0 %v731
    %v733 = vpop.xlane.xlu0 %732
    %v734 = vsel %vm367, %v729, 0.0
    %735 = vadd.xlane.f32.xlu0 %v734
    %v736 = vpop.xlane.xlu0 %735
    %v737 = vsel %vm374, %v730, 0.0
    %738 = vadd.xlane.f32.xlu0 %v737
    %v739 = vpop.xlane.xlu0 %738
    %v740 = vadd.f32 %v733, %v736
    %v741 = vsel %vm379, %v739, 0.0
    %v742 = vadd.f32 %v740, %v741
    %v743 = vrot.slane %v742, 4
    %v744 = vadd.f32 %v742, %v743
    %v745 = vrot.slane %v744, 2
    %v746 = vadd.f32 %v744, %v745
    %v747 = vrot.slane %v746, 1
    %v748 = vadd.f32 %v746, %v747
    %v749 = vmul.f32 %v727, 0.0069444445
    %v750 = vmul.f32 %v748, 0.0069444445
    %v751 = vmul.f32 %v749, %v749
    %v752 = vsub.f32 %v750, %v751
    %v753 = vmax.f32 %v752, 0.0
    %v754 = vadd.f32 %v753, 1e-05
    %v755 = vrsqrt.pop %v754
    %v756 = vmul.f32 %v755, %v754
    %v757 = vmul.f32 %v756, %v755
    %v758 = vmul.f32 0.5, %v757
    %v759 = vsub.f32 1.5, %v758
    %v760 = vmul.f32 %v755, %v759
    %vm761 = vweird.f32 %v754
    %vm762 = vweird.f32 %v755
    %vm763 = vmor %vm761, %vm762
    %v764 = vsel %vm763, %v755, %v760
    %s765 = sld [smem:[#allocation2 + $0x1d]]
    %v766 = vstv %s765
    %v767 = vmul.f32 %v764, %v766
    %s768 = sld [smem:[#allocation2 + $0x29]]
    %v769 = vmul.f32 %v749, %v767
    %v770 = vstv %s768
    %v771 = vsub.f32 %v770, %v769
    %v772 = vmul.f32 %v196, %v767
    %v773 = vmul.f32 %v197, %v767
    %v774 = vmul.f32 %v198, %v767
    %v775 = vadd.f32 %v772, %v771
    %v776 = vadd.f32 %v773, %v771
    %v777 = vadd.f32 %v774, %v771
    %v778 = vsel %vm367, %v224, 0.0
    %779 = vadd.xlane.f32.xlu0 %v778
    %v780 = vpop.xlane.xlu0 %779
    %v781 = vsel %vm367, %v225, 0.0
    %782 = vadd.xlane.f32.xlu0 %v781
    %v783 = vpop.xlane.xlu0 %782
    %v784 = vsel %vm374, %v226, 0.0
    %785 = vadd.xlane.f32.xlu0 %v784
    %v786 = vpop.xlane.xlu0 %785
    %v787 = vadd.f32 %v780, %v783
    %v788 = vsel %vm379, %v786, 0.0
    %v789 = vadd.f32 %v787, %v788
    %v790 = vrot.slane %v789, 4
    %v791 = vadd.f32 %v789, %v790
    %v792 = vrot.slane %v791, 2
    %v793 = vadd.f32 %v791, %v792
    %v794 = vrot.slane %v793, 1
    %v795 = vadd.f32 %v793, %v794
    %v796 = vmul.f32 %v224, %v224
    %v797 = vmul.f32 %v225, %v225
    %v798 = vmul.f32 %v226, %v226
    %v799 = vsel %vm367, %v796, 0.0
    %800 = vadd.xlane.f32.xlu0 %v799
    %v801 = vpop.xlane.xlu0 %800
    %v802 = vsel %vm367, %v797, 0.0
    %803 = vadd.xlane.f32.xlu0 %v802
    %v804 = vpop.xlane.xlu0 %803
    %v805 = vsel %vm374, %v798, 0.0
    %806 = vadd.xlane.f32.xlu0 %v805
    %v807 = vpop.xlane.xlu0 %806
    %v808 = vadd.f32 %v801, %v804
    %v809 = vsel %vm379, %v807, 0.0
    %v810 = vadd.f32 %v808, %v809
    %v811 = vrot.slane %v810, 4
    %v812 = vadd.f32 %v810, %v811
    %v813 = vrot.slane %v812, 2
    %v814 = vadd.f32 %v812, %v813
    %v815 = vrot.slane %v814, 1
    %v816 = vadd.f32 %v814, %v815
    %v817 = vmul.f32 %v795, 0.0069444445
    %v818 = vmul.f32 %v816, 0.0069444445
    %v819 = vmul.f32 %v817, %v817
    %v820 = vsub.f32 %v818, %v819
    %v821 = vmax.f32 %v820, 0.0
    %v822 = vadd.f32 %v821, 1e-05
    %v823 = vrsqrt.pop %v822
    %v824 = vmul.f32 %v823, %v822
    %v825 = vmul.f32 %v824, %v823
    %v826 = vmul.f32 0.5, %v825
    %v827 = vsub.f32 1.5, %v826
    %v828 = vmul.f32 %v823, %v827
    %vm829 = vweird.f32 %v822
    %vm830 = vweird.f32 %v823
    %vm831 = vmor %vm829, %vm830
    %v832 = vsel %vm831, %v823, %v828
    %s833 = sld [smem:[#allocation2 + $0x1e]]
    %v834 = vstv %s833
    %v835 = vmul.f32 %v832, %v834
    %s836 = sld [smem:[#allocation2 + $0x2a]]
    %v837 = vmul.f32 %v817, %v835
    %v838 = vstv %s836
    %v839 = vsub.f32 %v838, %v837
    %v840 = vmul.f32 %v224, %v835
    %v841 = vmul.f32 %v225, %v835
    %v842 = vmul.f32 %v226, %v835
    %v843 = vadd.f32 %v840, %v839
    %v844 = vadd.f32 %v841, %v839
    %v845 = vadd.f32 %v842, %v839
    %v846 = vsel %vm367, %v252, 0.0
    %847 = vadd.xlane.f32.xlu0 %v846
    %v848 = vpop.xlane.xlu0 %847
    %v849 = vsel %vm367, %v253, 0.0
    %850 = vadd.xlane.f32.xlu0 %v849
    %v851 = vpop.xlane.xlu0 %850
    %v852 = vsel %vm374, %v254, 0.0
    %853 = vadd.xlane.f32.xlu0 %v852
    %v854 = vpop.xlane.xlu0 %853
    %v855 = vadd.f32 %v848, %v851
    %v856 = vsel %vm379, %v854, 0.0
    %v857 = vadd.f32 %v855, %v856
    %v858 = vrot.slane %v857, 4
    %v859 = vadd.f32 %v857, %v858
    %v860 = vrot.slane %v859, 2
    %v861 = vadd.f32 %v859, %v860
    %v862 = vrot.slane %v861, 1
    %v863 = vadd.f32 %v861, %v862
    %v864 = vmul.f32 %v252, %v252
    %v865 = vmul.f32 %v253, %v253
    %v866 = vmul.f32 %v254, %v254
    %v867 = vsel %vm367, %v864, 0.0
    %868 = vadd.xlane.f32.xlu0 %v867
    %v869 = vpop.xlane.xlu0 %868
    %v870 = vsel %vm367, %v865, 0.0
    %871 = vadd.xlane.f32.xlu0 %v870
    %v872 = vpop.xlane.xlu0 %871
    %v873 = vsel %vm374, %v866, 0.0
    %874 = vadd.xlane.f32.xlu0 %v873
    %v875 = vpop.xlane.xlu0 %874
    %v876 = vadd.f32 %v869, %v872
    %v877 = vsel %vm379, %v875, 0.0
    %v878 = vadd.f32 %v876, %v877
    %v879 = vrot.slane %v878, 4
    %v880 = vadd.f32 %v878, %v879
    %v881 = vrot.slane %v880, 2
    %v882 = vadd.f32 %v880, %v881
    %v883 = vrot.slane %v882, 1
    %v884 = vadd.f32 %v882, %v883
    %v885 = vmul.f32 %v863, 0.0069444445
    %v886 = vmul.f32 %v884, 0.0069444445
    %v887 = vmul.f32 %v885, %v885
    %v888 = vsub.f32 %v886, %v887
    %v889 = vmax.f32 %v888, 0.0
    %v890 = vadd.f32 %v889, 1e-05
    %v891 = vrsqrt.pop %v890
    %v892 = vmul.f32 %v891, %v890
    %v893 = vmul.f32 %v892, %v891
    %v894 = vmul.f32 0.5, %v893
    %v895 = vsub.f32 1.5, %v894
    %v896 = vmul.f32 %v891, %v895
    %vm897 = vweird.f32 %v890
    %vm898 = vweird.f32 %v891
    %vm899 = vmor %vm897, %vm898
    %v900 = vsel %vm899, %v891, %v896
    %s901 = sld [smem:[#allocation2 + $0x1f]]
    %v902 = vstv %s901
    %v903 = vmul.f32 %v900, %v902
    %s904 = sld [smem:[#allocation2 + $0x2b]]
    %v905 = vmul.f32 %v885, %v903
    %v906 = vstv %s904
    %v907 = vsub.f32 %v906, %v905
    %v908 = vmul.f32 %v252, %v903
    %v909 = vmul.f32 %v253, %v903
    %v910 = vmul.f32 %v254, %v903
    %v911 = vadd.f32 %v908, %v907
    %v912 = vadd.f32 %v909, %v907
    %v913 = vadd.f32 %v910, %v907
    %v914 = vsel %vm367, %v280, 0.0
    %915 = vadd.xlane.f32.xlu0 %v914
    %v916 = vpop.xlane.xlu0 %915
    %v917 = vsel %vm367, %v281, 0.0
    %918 = vadd.xlane.f32.xlu0 %v917
    %v919 = vpop.xlane.xlu0 %918
    %v920 = vsel %vm374, %v282, 0.0
    %921 = vadd.xlane.f32.xlu0 %v920
    %v922 = vpop.xlane.xlu0 %921
    %v923 = vadd.f32 %v916, %v919
    %v924 = vsel %vm379, %v922, 0.0
    %v925 = vadd.f32 %v923, %v924
    %v926 = vrot.slane %v925, 4
    %v927 = vadd.f32 %v925, %v926
    %v928 = vrot.slane %v927, 2
    %v929 = vadd.f32 %v927, %v928
    %v930 = vrot.slane %v929, 1
    %v931 = vadd.f32 %v929, %v930
    %v932 = vmul.f32 %v280, %v280
    %v933 = vmul.f32 %v281, %v281
    %v934 = vmul.f32 %v282, %v282
    %v935 = vsel %vm367, %v932, 0.0
    %936 = vadd.xlane.f32.xlu0 %v935
    %v937 = vpop.xlane.xlu0 %936
    %v938 = vsel %vm367, %v933, 0.0
    %939 = vadd.xlane.f32.xlu0 %v938
    %v940 = vpop.xlane.xlu0 %939
    %v941 = vsel %vm374, %v934, 0.0
    %942 = vadd.xlane.f32.xlu0 %v941
    %v943 = vpop.xlane.xlu0 %942
    %v944 = vadd.f32 %v937, %v940
    %v945 = vsel %vm379, %v943, 0.0
    %v946 = vadd.f32 %v944, %v945
    %v947 = vrot.slane %v946, 4
    %v948 = vadd.f32 %v946, %v947
    %v949 = vrot.slane %v948, 2
    %v950 = vadd.f32 %v948, %v949
    %v951 = vrot.slane %v950, 1
    %v952 = vadd.f32 %v950, %v951
    %v953 = vmul.f32 %v931, 0.0069444445
    %v954 = vmul.f32 %v952, 0.0069444445
    %v955 = vmul.f32 %v953, %v953
    %v956 = vsub.f32 %v954, %v955
    %v957 = vmax.f32 %v956, 0.0
    %v958 = vadd.f32 %v957, 1e-05
    %v959 = vrsqrt.pop %v958
    %v960 = vmul.f32 %v959, %v958
    %v961 = vmul.f32 %v960, %v959
    %v962 = vmul.f32 0.5, %v961
    %v963 = vsub.f32 1.5, %v962
    %v964 = vmul.f32 %v959, %v963
    %vm965 = vweird.f32 %v958
    %vm966 = vweird.f32 %v959
    %vm967 = vmor %vm965, %vm966
    %v968 = vsel %vm967, %v959, %v964
    %s969 = sld [smem:[#allocation2 + $0x20]]
    %v970 = vstv %s969
    %v971 = vmul.f32 %v968, %v970
    %s972 = sld [smem:[#allocation2 + $0x2c]]
    %v973 = vmul.f32 %v953, %v971
    %v974 = vstv %s972
    %v975 = vsub.f32 %v974, %v973
    %v976 = vmul.f32 %v280, %v971
    %v977 = vmul.f32 %v281, %v971
    %v978 = vmul.f32 %v282, %v971
    %v979 = vadd.f32 %v976, %v975
    %v980 = vadd.f32 %v977, %v975
    %v981 = vadd.f32 %v978, %v975
    %v982 = vsel %vm367, %v308, 0.0
    %983 = vadd.xlane.f32.xlu0 %v982
    %v984 = vpop.xlane.xlu0 %983
    %v985 = vsel %vm367, %v309, 0.0
    %986 = vadd.xlane.f32.xlu0 %v985
    %v987 = vpop.xlane.xlu0 %986
    %v988 = vsel %vm374, %v310, 0.0
    %989 = vadd.xlane.f32.xlu0 %v988
    %v990 = vpop.xlane.xlu0 %989
    %v991 = vadd.f32 %v984, %v987
    %v992 = vsel %vm379, %v990, 0.0
    %v993 = vadd.f32 %v991, %v992
    %v994 = vrot.slane %v993, 4
    %v995 = vadd.f32 %v993, %v994
    %v996 = vrot.slane %v995, 2
    %v997 = vadd.f32 %v995, %v996
    %v998 = vrot.slane %v997, 1
    %v999 = vadd.f32 %v997, %v998
    %v1000 = vmul.f32 %v308, %v308
    %v1001 = vmul.f32 %v309, %v309
    %v1002 = vmul.f32 %v310, %v310
    %v1003 = vsel %vm367, %v1000, 0.0
    %1004 = vadd.xlane.f32.xlu0 %v1003
    %v1005 = vpop.xlane.xlu0 %1004
    %v1006 = vsel %vm367, %v1001, 0.0
    %1007 = vadd.xlane.f32.xlu0 %v1006
    %v1008 = vpop.xlane.xlu0 %1007
    %v1009 = vsel %vm374, %v1002, 0.0
    %1010 = vadd.xlane.f32.xlu0 %v1009
    %v1011 = vpop.xlane.xlu0 %1010
    %v1012 = vadd.f32 %v1005, %v1008
    %v1013 = vsel %vm379, %v1011, 0.0
    %v1014 = vadd.f32 %v1012, %v1013
    %v1015 = vrot.slane %v1014, 4
    %v1016 = vadd.f32 %v1014, %v1015
    %v1017 = vrot.slane %v1016, 2
    %v1018 = vadd.f32 %v1016, %v1017
    %v1019 = vrot.slane %v1018, 1
    %v1020 = vadd.f32 %v1018, %v1019
    %v1021 = vmul.f32 %v999, 0.0069444445
    %v1022 = vmul.f32 %v1020, 0.0069444445
    %v1023 = vmul.f32 %v1021, %v1021
    %v1024 = vsub.f32 %v1022, %v1023
    %v1025 = vmax.f32 %v1024, 0.0
    %v1026 = vadd.f32 %v1025, 1e-05
    %v1027 = vrsqrt.pop %v1026
    %v1028 = vmul.f32 %v1027, %v1026
    %v1029 = vmul.f32 %v1028, %v1027
    %v1030 = vmul.f32 0.5, %v1029
    %v1031 = vsub.f32 1.5, %v1030
    %v1032 = vmul.f32 %v1027, %v1031
    %vm1033 = vweird.f32 %v1026
    %vm1034 = vweird.f32 %v1027
    %vm1035 = vmor %vm1033, %vm1034
    %v1036 = vsel %vm1035, %v1027, %v1032
    %s1037 = sld [smem:[#allocation2 + $0x21]]
    %v1038 = vstv %s1037
    %v1039 = vmul.f32 %v1036, %v1038
    %s1040 = sld [smem:[#allocation2 + $0x2d]]
    %v1041 = vmul.f32 %v1021, %v1039
    %v1042 = vstv %s1040
    %v1043 = vsub.f32 %v1042, %v1041
    %v1044 = vmul.f32 %v308, %v1039
    %v1045 = vmul.f32 %v309, %v1039
    %v1046 = vmul.f32 %v310, %v1039
    %v1047 = vadd.f32 %v1044, %v1043
    %v1048 = vadd.f32 %v1045, %v1043
    %v1049 = vadd.f32 %v1046, %v1043
    %v1050 = vsel %vm367, %v336, 0.0
    %1051 = vadd.xlane.f32.xlu0 %v1050
    %v1052 = vpop.xlane.xlu0 %1051
    %v1053 = vsel %vm367, %v337, 0.0
    %1054 = vadd.xlane.f32.xlu0 %v1053
    %v1055 = vpop.xlane.xlu0 %1054
    %v1056 = vsel %vm374, %v338, 0.0
    %1057 = vadd.xlane.f32.xlu0 %v1056
    %v1058 = vpop.xlane.xlu0 %1057
    %v1059 = vadd.f32 %v1052, %v1055
    %v1060 = vsel %vm379, %v1058, 0.0
    %v1061 = vadd.f32 %v1059, %v1060
    %v1062 = vrot.slane %v1061, 4
    %v1063 = vadd.f32 %v1061, %v1062
    %v1064 = vrot.slane %v1063, 2
    %v1065 = vadd.f32 %v1063, %v1064
    %v1066 = vrot.slane %v1065, 1
    %v1067 = vadd.f32 %v1065, %v1066
    %v1068 = vmul.f32 %v336, %v336
    %v1069 = vmul.f32 %v337, %v337
    %v1070 = vmul.f32 %v338, %v338
    %v1071 = vsel %vm367, %v1068, 0.0
    %1072 = vadd.xlane.f32.xlu0 %v1071
    %v1073 = vpop.xlane.xlu0 %1072
    %v1074 = vsel %vm367, %v1069, 0.0
    %1075 = vadd.xlane.f32.xlu0 %v1074
    %v1076 = vpop.xlane.xlu0 %1075
    %v1077 = vsel %vm374, %v1070, 0.0
    %1078 = vadd.xlane.f32.xlu0 %v1077
    %v1079 = vpop.xlane.xlu0 %1078
    %v1080 = vadd.f32 %v1073, %v1076
    %v1081 = vsel %vm379, %v1079, 0.0
    %v1082 = vadd.f32 %v1080, %v1081
    %v1083 = vrot.slane %v1082, 4
    %v1084 = vadd.f32 %v1082, %v1083
    %v1085 = vrot.slane %v1084, 2
    %v1086 = vadd.f32 %v1084, %v1085
    %v1087 = vrot.slane %v1086, 1
    %v1088 = vadd.f32 %v1086, %v1087
    %v1089 = vmul.f32 %v1067, 0.0069444445
    %v1090 = vmul.f32 %v1088, 0.0069444445
    %v1091 = vmul.f32 %v1089, %v1089
    %v1092 = vsub.f32 %v1090, %v1091
    %v1093 = vmax.f32 %v1092, 0.0
    %v1094 = vadd.f32 %v1093, 1e-05
    %v1095 = vrsqrt.pop %v1094
    %v1096 = vmul.f32 %v1095, %v1094
    %v1097 = vmul.f32 %v1096, %v1095
    %v1098 = vmul.f32 0.5, %v1097
    %v1099 = vsub.f32 1.5, %v1098
    %v1100 = vmul.f32 %v1095, %v1099
    %vm1101 = vweird.f32 %v1094
    %vm1102 = vweird.f32 %v1095
    %vm1103 = vmor %vm1101, %vm1102
    %v1104 = vsel %vm1103, %v1095, %v1100
    %s1105 = sld [smem:[#allocation2 + $0x22]]
    %v1106 = vstv %s1105
    %v1107 = vmul.f32 %v1104, %v1106
    %s1108 = sld [smem:[#allocation2 + $0x2e]]
    %v1109 = vmul.f32 %v1089, %v1107
    %v1110 = vstv %s1108
    %v1111 = vsub.f32 %v1110, %v1109
    %v1112 = vmul.f32 %v336, %v1107
    %v1113 = vmul.f32 %v337, %v1107
    %v1114 = vmul.f32 %v338, %v1107
    %v1115 = vadd.f32 %v1112, %v1111
    %v1116 = vadd.f32 %v1113, %v1111
    %v1117 = vadd.f32 %v1114, %v1111
    %v1118 = vsel %vm367, %v364, 0.0
    %1119 = vadd.xlane.f32.xlu0 %v1118
    %v1120 = vpop.xlane.xlu0 %1119
    %v1121 = vsel %vm367, %v365, 0.0
    %1122 = vadd.xlane.f32.xlu0 %v1121
    %v1123 = vpop.xlane.xlu0 %1122
    %v1124 = vsel %vm374, %v366, 0.0
    %1125 = vadd.xlane.f32.xlu0 %v1124
    %v1126 = vpop.xlane.xlu0 %1125
    %v1127 = vadd.f32 %v1120, %v1123
    %v1128 = vsel %vm379, %v1126, 0.0
    %v1129 = vadd.f32 %v1127, %v1128
    %v1130 = vrot.slane %v1129, 4
    %v1131 = vadd.f32 %v1129, %v1130
    %v1132 = vrot.slane %v1131, 2
    %v1133 = vadd.f32 %v1131, %v1132
    %v1134 = vrot.slane %v1133, 1
    %v1135 = vadd.f32 %v1133, %v1134
    %v1136 = vmul.f32 %v364, %v364
    %v1137 = vmul.f32 %v365, %v365
    %v1138 = vmul.f32 %v366, %v366
    %v1139 = vsel %vm367, %v1136, 0.0
    %1140 = vadd.xlane.f32.xlu0 %v1139
    %v1141 = vpop.xlane.xlu0 %1140
    %v1142 = vsel %vm367, %v1137, 0.0
    %1143 = vadd.xlane.f32.xlu0 %v1142
    %v1144 = vpop.xlane.xlu0 %1143
    %v1145 = vsel %vm374, %v1138, 0.0
    %1146 = vadd.xlane.f32.xlu0 %v1145
    %v1147 = vpop.xlane.xlu0 %1146
    %v1148 = vadd.f32 %v1141, %v1144
    %v1149 = vsel %vm379, %v1147, 0.0
    %v1150 = vadd.f32 %v1148, %v1149
    %v1151 = vrot.slane %v1150, 4
    %v1152 = vadd.f32 %v1150, %v1151
    %v1153 = vrot.slane %v1152, 2
    %v1154 = vadd.f32 %v1152, %v1153
    %v1155 = vrot.slane %v1154, 1
    %v1156 = vadd.f32 %v1154, %v1155
    %v1157 = vmul.f32 %v1135, 0.0069444445
    %v1158 = vmul.f32 %v1156, 0.0069444445
    %v1159 = vmul.f32 %v1157, %v1157
    %v1160 = vsub.f32 %v1158, %v1159
    %v1161 = vmax.f32 %v1160, 0.0
    %v1162 = vadd.f32 %v1161, 1e-05
    %v1163 = vrsqrt.pop %v1162
    %v1164 = vmul.f32 %v1163, %v1162
    %v1165 = vmul.f32 %v1164, %v1163
    %v1166 = vmul.f32 0.5, %v1165
    %v1167 = vsub.f32 1.5, %v1166
    %v1168 = vmul.f32 %v1163, %v1167
    %vm1169 = vweird.f32 %v1162
    %vm1170 = vweird.f32 %v1163
    %vm1171 = vmor %vm1169, %vm1170
    %v1172 = vsel %vm1171, %v1163, %v1168
    %s1173 = sld [smem:[#allocation2 + $0x23]]
    %v1174 = vstv %s1173
    %v1175 = vmul.f32 %v1172, %v1174
    %s1176 = sld [smem:[#allocation2 + $0x2f]]
    %v1177 = vmul.f32 %v1157, %v1175
    %v1178 = vstv %s1176
    %v1179 = vsub.f32 %v1178, %v1177
    %v1180 = vmul.f32 %v364, %v1175
    %v1181 = vmul.f32 %v365, %v1175
    %v1182 = vmul.f32 %v366, %v1175
    %v1183 = vadd.f32 %v1180, %v1179
    %v1184 = vadd.f32 %v1181, %v1179
    %v1185 = vadd.f32 %v1182, %v1179
    %s1186 = sld [smem:[#allocation2 + $0x30]]
    %v1187 = vstv %s1186
    %v1188 = vmul.f32 %v1187, %v435
    %v1189 = vmul.f32 %v1187, %v436
    %v1190 = vmul.f32 %v1187, %v437
    %s1191 = sld [smem:[#allocation2 + $0x31]]
    %v1192 = vstv %s1191
    %v1193 = vmul.f32 %v1192, %v503
    %v1194 = vmul.f32 %v1192, %v504
    %v1195 = vmul.f32 %v1192, %v505
    %v1196 = vadd.f32 %v1188, %v1193
    %v1197 = vadd.f32 %v1189, %v1194
    %v1198 = vadd.f32 %v1190, %v1195
    %s1199 = sld [smem:[#allocation2 + $0x32]]
    %v1200 = vstv %s1199
    %v1201 = vmul.f32 %v1200, %v571
    %v1202 = vmul.f32 %v1200, %v572
    %v1203 = vmul.f32 %v1200, %v573
    %v1204 = vadd.f32 %v1196, %v1201
    %v1205 = vadd.f32 %v1197, %v1202
    %v1206 = vadd.f32 %v1198, %v1203
    %s1207 = sld [smem:[#allocation2 + $0x33]]
    %v1208 = vstv %s1207
    %v1209 = vmul.f32 %v1208, %v639
    %v1210 = vmul.f32 %v1208, %v640
    %v1211 = vmul.f32 %v1208, %v641
    %v1212 = vadd.f32 %v1204, %v1209
    %v1213 = vadd.f32 %v1205, %v1210
    %v1214 = vadd.f32 %v1206, %v1211
    %s1215 = sld [smem:[#allocation2 + $0x34]]
    %v1216 = vstv %s1215
    %v1217 = vmul.f32 %v1216, %v707
    %v1218 = vmul.f32 %v1216, %v708
    %v1219 = vmul.f32 %v1216, %v709
    %v1220 = vadd.f32 %v1212, %v1217
    %v1221 = vadd.f32 %v1213, %v1218
    %v1222 = vadd.f32 %v1214, %v1219
    %s1223 = sld [smem:[#allocation2 + $0x35]]
    %v1224 = vstv %s1223
    %v1225 = vmul.f32 %v1224, %v775
    %v1226 = vmul.f32 %v1224, %v776
    %v1227 = vmul.f32 %v1224, %v777
    %v1228 = vadd.f32 %v1220, %v1225
    %v1229 = vadd.f32 %v1221, %v1226
    %v1230 = vadd.f32 %v1222, %v1227
    %s1231 = sld [smem:[#allocation2 + $0x36]]
    %v1232 = vstv %s1231
    %v1233 = vmul.f32 %v1232, %v843
    %v1234 = vmul.f32 %v1232, %v844
    %v1235 = vmul.f32 %v1232, %v845
    %v1236 = vadd.f32 %v1228, %v1233
    %v1237 = vadd.f32 %v1229, %v1234
    %v1238 = vadd.f32 %v1230, %v1235
    %s1239 = sld [smem:[#allocation2 + $0x37]]
    %v1240 = vstv %s1239
    %v1241 = vmul.f32 %v1240, %v911
    %v1242 = vmul.f32 %v1240, %v912
    %v1243 = vmul.f32 %v1240, %v913
    %v1244 = vadd.f32 %v1236, %v1241
    %v1245 = vadd.f32 %v1237, %v1242
    %v1246 = vadd.f32 %v1238, %v1243
    %s1247 = sld [smem:[#allocation2 + $0x38]]
    %v1248 = vstv %s1247
    %v1249 = vmul.f32 %v1248, %v979
    %v1250 = vmul.f32 %v1248, %v980
    %v1251 = vmul.f32 %v1248, %v981
    %v1252 = vadd.f32 %v1244, %v1249
    %v1253 = vadd.f32 %v1245, %v1250
    %v1254 = vadd.f32 %v1246, %v1251
    %s1255 = sld [smem:[#allocation2 + $0x39]]
    %v1256 = vstv %s1255
    %v1257 = vmul.f32 %v1256, %v1047
    %v1258 = vmul.f32 %v1256, %v1048
    %v1259 = vmul.f32 %v1256, %v1049
    %v1260 = vadd.f32 %v1252, %v1257
    %v1261 = vadd.f32 %v1253, %v1258
    %v1262 = vadd.f32 %v1254, %v1259
    %s1263 = sld [smem:[#allocation2 + $0x3a]]
    %v1264 = vstv %s1263
    %v1265 = vmul.f32 %v1264, %v1115
    %v1266 = vmul.f32 %v1264, %v1116
    %v1267 = vmul.f32 %v1264, %v1117
    %v1268 = vadd.f32 %v1260, %v1265
    %v1269 = vadd.f32 %v1261, %v1266
    %v1270 = vadd.f32 %v1262, %v1267
    %s1271 = sld [smem:[#allocation2 + $0x3b]]
    %v1272 = vstv %s1271
    %v1273 = vmul.f32 %v1272, %v1183
    %v1274 = vmul.f32 %v1272, %v1184
    %v1275 = vmul.f32 %v1272, %v1185
    %v1276 = vadd.f32 %v1268, %v1273
    %v1277 = vadd.f32 %v1269, %v1274
    %v1278 = vadd.f32 %v1270, %v1275
    %s1279 = sld [smem:[#allocation2 + $0x60]]
    %v1280 = vstv %s1279
    %v1281 = vadd.f32 %v1276, %v1280
    %v1282 = vadd.f32 %v1277, %v1280
    %v1283 = vadd.f32 %v1278, %v1280
    %vm1284 = vcmp.gt.f32.partialorder %v1281, 0.0
    %vm1285 = vcmp.gt.f32.partialorder %v1282, 0.0
    %vm1286 = vcmp.gt.f32.partialorder %v1283, 0.0
    %v1287 = vmin.f32 %v1281, 0.0
    %v1288 = vmin.f32 %v1282, 0.0
    %v1289 = vmin.f32 %v1283, 0.0
    %v1290 = vmul.f32 %v1287, 1.442695
    %v1291 = vpow.pop %v1290
    %v1292 = vmul.f32 %v1288, 1.442695
    %v1293 = vpow.pop %v1292
    %v1294 = vmul.f32 %v1289, 1.442695
    %v1295 = vpow.pop %v1294
    %v1296 = vsub.f32 %v1291, 1.0
    %v1297 = vsub.f32 %v1293, 1.0
    %v1298 = vsub.f32 %v1295, 1.0
    %v1299 = vsel %vm1284, %v1281, %v1296
    %v1300 = vsel %vm1285, %v1282, %v1297
    %v1301 = vsel %vm1286, %v1283, %v1298
    %s1302 = sld [smem:[#allocation2 + $0x3c]]
    %v1303 = vstv %s1302
    %v1304 = vmul.f32 %v1303, %v435
    %v1305 = vmul.f32 %v1303, %v436
    %v1306 = vmul.f32 %v1303, %v437
    %s1307 = sld [smem:[#allocation2 + $0x3d]]
    %v1308 = vstv %s1307
    %v1309 = vmul.f32 %v1308, %v503
    %v1310 = vmul.f32 %v1308, %v504
    %v1311 = vmul.f32 %v1308, %v505
    %v1312 = vadd.f32 %v1304, %v1309
    %v1313 = vadd.f32 %v1305, %v1310
    %v1314 = vadd.f32 %v1306, %v1311
    %s1315 = sld [smem:[#allocation2 + $0x3e]]
    %v1316 = vstv %s1315
    %v1317 = vmul.f32 %v1316, %v571
    %v1318 = vmul.f32 %v1316, %v572
    %v1319 = vmul.f32 %v1316, %v573
    %v1320 = vadd.f32 %v1312, %v1317
    %v1321 = vadd.f32 %v1313, %v1318
    %v1322 = vadd.f32 %v1314, %v1319
    %s1323 = sld [smem:[#allocation2 + $0x3f]]
    %v1324 = vstv %s1323
    %v1325 = vmul.f32 %v1324, %v639
    %v1326 = vmul.f32 %v1324, %v640
    %v1327 = vmul.f32 %v1324, %v641
    %v1328 = vadd.f32 %v1320, %v1325
    %v1329 = vadd.f32 %v1321, %v1326
    %v1330 = vadd.f32 %v1322, %v1327
    %s1331 = sld [smem:[#allocation2 + $0x40]]
    %v1332 = vstv %s1331
    %v1333 = vmul.f32 %v1332, %v707
    %v1334 = vmul.f32 %v1332, %v708
    %v1335 = vmul.f32 %v1332, %v709
    %v1336 = vadd.f32 %v1328, %v1333
    %v1337 = vadd.f32 %v1329, %v1334
    %v1338 = vadd.f32 %v1330, %v1335
    %s1339 = sld [smem:[#allocation2 + $0x41]]
    %v1340 = vstv %s1339
    %v1341 = vmul.f32 %v1340, %v775
    %v1342 = vmul.f32 %v1340, %v776
    %v1343 = vmul.f32 %v1340, %v777
    %v1344 = vadd.f32 %v1336, %v1341
    %v1345 = vadd.f32 %v1337, %v1342
    %v1346 = vadd.f32 %v1338, %v1343
    %s1347 = sld [smem:[#allocation2 + $0x42]]
    %v1348 = vstv %s1347
    %v1349 = vmul.f32 %v1348, %v843
    %v1350 = vmul.f32 %v1348, %v844
    %v1351 = vmul.f32 %v1348, %v845
    %v1352 = vadd.f32 %v1344, %v1349
    %v1353 = vadd.f32 %v1345, %v1350
    %v1354 = vadd.f32 %v1346, %v1351
    %s1355 = sld [smem:[#allocation2 + $0x43]]
    %v1356 = vstv %s1355
    %v1357 = vmul.f32 %v1356, %v911
    %v1358 = vmul.f32 %v1356, %v912
    %v1359 = vmul.f32 %v1356, %v913
    %v1360 = vadd.f32 %v1352, %v1357
    %v1361 = vadd.f32 %v1353, %v1358
    %v1362 = vadd.f32 %v1354, %v1359
    %s1363 = sld [smem:[#allocation2 + $0x44]]
    %v1364 = vstv %s1363
    %v1365 = vmul.f32 %v1364, %v979
    %v1366 = vmul.f32 %v1364, %v980
    %v1367 = vmul.f32 %v1364, %v981
    %v1368 = vadd.f32 %v1360, %v1365
    %v1369 = vadd.f32 %v1361, %v1366
    %v1370 = vadd.f32 %v1362, %v1367
    %s1371 = sld [smem:[#allocation2 + $0x45]]
    %v1372 = vstv %s1371
    %v1373 = vmul.f32 %v1372, %v1047
    %v1374 = vmul.f32 %v1372, %v1048
    %v1375 = vmul.f32 %v1372, %v1049
    %v1376 = vadd.f32 %v1368, %v1373
    %v1377 = vadd.f32 %v1369, %v1374
    %v1378 = vadd.f32 %v1370, %v1375
    %s1379 = sld [smem:[#allocation2 + $0x46]]
    %v1380 = vstv %s1379
    %v1381 = vmul.f32 %v1380, %v1115
    %v1382 = vmul.f32 %v1380, %v1116
    %v1383 = vmul.f32 %v1380, %v1117
    %v1384 = vadd.f32 %v1376, %v1381
    %v1385 = vadd.f32 %v1377, %v1382
    %v1386 = vadd.f32 %v1378, %v1383
    %s1387 = sld [smem:[#allocation2 + $0x47]]
    %v1388 = vstv %s1387
    %v1389 = vmul.f32 %v1388, %v1183
    %v1390 = vmul.f32 %v1388, %v1184
    %v1391 = vmul.f32 %v1388, %v1185
    %v1392 = vadd.f32 %v1384, %v1389
    %v1393 = vadd.f32 %v1385, %v1390
    %v1394 = vadd.f32 %v1386, %v1391
    %s1395 = sld [smem:[#allocation2 + $0x61]]
    %v1396 = vstv %s1395
    %v1397 = vadd.f32 %v1392, %v1396
    %v1398 = vadd.f32 %v1393, %v1396
    %v1399 = vadd.f32 %v1394, %v1396
    %vm1400 = vcmp.gt.f32.partialorder %v1397, 0.0
    %vm1401 = vcmp.gt.f32.partialorder %v1398, 0.0
    %vm1402 = vcmp.gt.f32.partialorder %v1399, 0.0
    %v1403 = vmin.f32 %v1397, 0.0
    %v1404 = vmin.f32 %v1398, 0.0
    %v1405 = vmin.f32 %v1399, 0.0
    %v1406 = vmul.f32 %v1403, 1.442695
    %v1407 = vpow.pop %v1406
    %v1408 = vmul.f32 %v1404, 1.442695
    %v1409 = vpow.pop %v1408
    %v1410 = vmul.f32 %v1405, 1.442695
    %v1411 = vpow.pop %v1410
    %v1412 = vsub.f32 %v1407, 1.0
    %v1413 = vsub.f32 %v1409, 1.0
    %v1414 = vsub.f32 %v1411, 1.0
    %v1415 = vsel %vm1400, %v1397, %v1412
    %v1416 = vsel %vm1401, %v1398, %v1413
    %v1417 = vsel %vm1402, %v1399, %v1414
    %s1418 = sld [smem:[#allocation2 + $0x48]]
    %v1419 = vstv %s1418
    %v1420 = vmul.f32 %v1419, %v435
    %v1421 = vmul.f32 %v1419, %v436
    %v1422 = vmul.f32 %v1419, %v437
    %s1423 = sld [smem:[#allocation2 + $0x49]]
    %v1424 = vstv %s1423
    %v1425 = vmul.f32 %v1424, %v503
    %v1426 = vmul.f32 %v1424, %v504
    %v1427 = vmul.f32 %v1424, %v505
    %v1428 = vadd.f32 %v1420, %v1425
    %v1429 = vadd.f32 %v1421, %v1426
    %v1430 = vadd.f32 %v1422, %v1427
    %s1431 = sld [smem:[#allocation2 + $0x4a]]
    %v1432 = vstv %s1431
    %v1433 = vmul.f32 %v1432, %v571
    %v1434 = vmul.f32 %v1432, %v572
    %v1435 = vmul.f32 %v1432, %v573
    %v1436 = vadd.f32 %v1428, %v1433
    %v1437 = vadd.f32 %v1429, %v1434
    %v1438 = vadd.f32 %v1430, %v1435
    %s1439 = sld [smem:[#allocation2 + $0x4b]]
    %v1440 = vstv %s1439
    %v1441 = vmul.f32 %v1440, %v639
    %v1442 = vmul.f32 %v1440, %v640
    %v1443 = vmul.f32 %v1440, %v641
    %v1444 = vadd.f32 %v1436, %v1441
    %v1445 = vadd.f32 %v1437, %v1442
    %v1446 = vadd.f32 %v1438, %v1443
    %s1447 = sld [smem:[#allocation2 + $0x4c]]
    %v1448 = vstv %s1447
    %v1449 = vmul.f32 %v1448, %v707
    %v1450 = vmul.f32 %v1448, %v708
    %v1451 = vmul.f32 %v1448, %v709
    %v1452 = vadd.f32 %v1444, %v1449
    %v1453 = vadd.f32 %v1445, %v1450
    %v1454 = vadd.f32 %v1446, %v1451
    %s1455 = sld [smem:[#allocation2 + $0x4d]]
    %v1456 = vstv %s1455
    %v1457 = vmul.f32 %v1456, %v775
    %v1458 = vmul.f32 %v1456, %v776
    %v1459 = vmul.f32 %v1456, %v777
    %v1460 = vadd.f32 %v1452, %v1457
    %v1461 = vadd.f32 %v1453, %v1458
    %v1462 = vadd.f32 %v1454, %v1459
    %s1463 = sld [smem:[#allocation2 + $0x4e]]
    %v1464 = vstv %s1463
    %v1465 = vmul.f32 %v1464, %v843
    %v1466 = vmul.f32 %v1464, %v844
    %v1467 = vmul.f32 %v1464, %v845
    %v1468 = vadd.f32 %v1460, %v1465
    %v1469 = vadd.f32 %v1461, %v1466
    %v1470 = vadd.f32 %v1462, %v1467
    %s1471 = sld [smem:[#allocation2 + $0x4f]]
    %v1472 = vstv %s1471
    %v1473 = vmul.f32 %v1472, %v911
    %v1474 = vmul.f32 %v1472, %v912
    %v1475 = vmul.f32 %v1472, %v913
    %v1476 = vadd.f32 %v1468, %v1473
    %v1477 = vadd.f32 %v1469, %v1474
    %v1478 = vadd.f32 %v1470, %v1475
    %s1479 = sld [smem:[#allocation2 + $0x50]]
    %v1480 = vstv %s1479
    %v1481 = vmul.f32 %v1480, %v979
    %v1482 = vmul.f32 %v1480, %v980
    %v1483 = vmul.f32 %v1480, %v981
    %v1484 = vadd.f32 %v1476, %v1481
    %v1485 = vadd.f32 %v1477, %v1482
    %v1486 = vadd.f32 %v1478, %v1483
    %s1487 = sld [smem:[#allocation2 + $0x51]]
    %v1488 = vstv %s1487
    %v1489 = vmul.f32 %v1488, %v1047
    %v1490 = vmul.f32 %v1488, %v1048
    %v1491 = vmul.f32 %v1488, %v1049
    %v1492 = vadd.f32 %v1484, %v1489
    %v1493 = vadd.f32 %v1485, %v1490
    %v1494 = vadd.f32 %v1486, %v1491
    %s1495 = sld [smem:[#allocation2 + $0x52]]
    %v1496 = vstv %s1495
    %v1497 = vmul.f32 %v1496, %v1115
    %v1498 = vmul.f32 %v1496, %v1116
    %v1499 = vmul.f32 %v1496, %v1117
    %v1500 = vadd.f32 %v1492, %v1497
    %v1501 = vadd.f32 %v1493, %v1498
    %v1502 = vadd.f32 %v1494, %v1499
    %s1503 = sld [smem:[#allocation2 + $0x53]]
    %v1504 = vstv %s1503
    %v1505 = vmul.f32 %v1504, %v1183
    %v1506 = vmul.f32 %v1504, %v1184
    %v1507 = vmul.f32 %v1504, %v1185
    %v1508 = vadd.f32 %v1500, %v1505
    %v1509 = vadd.f32 %v1501, %v1506
    %v1510 = vadd.f32 %v1502, %v1507
    %s1511 = sld [smem:[#allocation2 + $0x62]]
    %v1512 = vstv %s1511
    %v1513 = vadd.f32 %v1508, %v1512
    %v1514 = vadd.f32 %v1509, %v1512
    %v1515 = vadd.f32 %v1510, %v1512
    %vm1516 = vcmp.gt.f32.partialorder %v1513, 0.0
    %vm1517 = vcmp.gt.f32.partialorder %v1514, 0.0
    %vm1518 = vcmp.gt.f32.partialorder %v1515, 0.0
    %v1519 = vmin.f32 %v1513, 0.0
    %v1520 = vmin.f32 %v1514, 0.0
    %v1521 = vmin.f32 %v1515, 0.0
    %v1522 = vmul.f32 %v1519, 1.442695
    %v1523 = vpow.pop %v1522
    %v1524 = vmul.f32 %v1520, 1.442695
    %v1525 = vpow.pop %v1524
    %v1526 = vmul.f32 %v1521, 1.442695
    %v1527 = vpow.pop %v1526
    %v1528 = vsub.f32 %v1523, 1.0
    %v1529 = vsub.f32 %v1525, 1.0
    %v1530 = vsub.f32 %v1527, 1.0
    %v1531 = vsel %vm1516, %v1513, %v1528
    %v1532 = vsel %vm1517, %v1514, %v1529
    %v1533 = vsel %vm1518, %v1515, %v1530
    %s1534 = sld [smem:[#allocation2 + $0x54]]
    %v1535 = vstv %s1534
    %v1536 = vmul.f32 %v1535, %v435
    %v1537 = vmul.f32 %v1535, %v436
    %v1538 = vmul.f32 %v1535, %v437
    %s1539 = sld [smem:[#allocation2 + $0x55]]
    %v1540 = vstv %s1539
    %v1541 = vmul.f32 %v1540, %v503
    %v1542 = vmul.f32 %v1540, %v504
    %v1543 = vmul.f32 %v1540, %v505
    %v1544 = vadd.f32 %v1536, %v1541
    %v1545 = vadd.f32 %v1537, %v1542
    %v1546 = vadd.f32 %v1538, %v1543
    %s1547 = sld [smem:[#allocation2 + $0x56]]
    %v1548 = vstv %s1547
    %v1549 = vmul.f32 %v1548, %v571
    %v1550 = vmul.f32 %v1548, %v572
    %v1551 = vmul.f32 %v1548, %v573
    %v1552 = vadd.f32 %v1544, %v1549
    %v1553 = vadd.f32 %v1545, %v1550
    %v1554 = vadd.f32 %v1546, %v1551
    %s1555 = sld [smem:[#allocation2 + $0x57]]
    %v1556 = vstv %s1555
    %v1557 = vmul.f32 %v1556, %v639
    %v1558 = vmul.f32 %v1556, %v640
    %v1559 = vmul.f32 %v1556, %v641
    %v1560 = vadd.f32 %v1552, %v1557
    %v1561 = vadd.f32 %v1553, %v1558
    %v1562 = vadd.f32 %v1554, %v1559
    %s1563 = sld [smem:[#allocation2 + $0x58]]
    %v1564 = vstv %s1563
    %v1565 = vmul.f32 %v1564, %v707
    %v1566 = vmul.f32 %v1564, %v708
    %v1567 = vmul.f32 %v1564, %v709
    %v1568 = vadd.f32 %v1560, %v1565
    %v1569 = vadd.f32 %v1561, %v1566
    %v1570 = vadd.f32 %v1562, %v1567
    %s1571 = sld [smem:[#allocation2 + $0x59]]
    %v1572 = vstv %s1571
    %v1573 = vmul.f32 %v1572, %v775
    %v1574 = vmul.f32 %v1572, %v776
    %v1575 = vmul.f32 %v1572, %v777
    %v1576 = vadd.f32 %v1568, %v1573
    %v1577 = vadd.f32 %v1569, %v1574
    %v1578 = vadd.f32 %v1570, %v1575
    %s1579 = sld [smem:[#allocation2 + $0x5a]]
    %v1580 = vstv %s1579
    %v1581 = vmul.f32 %v1580, %v843
    %v1582 = vmul.f32 %v1580, %v844
    %v1583 = vmul.f32 %v1580, %v845
    %v1584 = vadd.f32 %v1576, %v1581
    %v1585 = vadd.f32 %v1577, %v1582
    %v1586 = vadd.f32 %v1578, %v1583
    %s1587 = sld [smem:[#allocation2 + $0x5b]]
    %v1588 = vstv %s1587
    %v1589 = vmul.f32 %v1588, %v911
    %v1590 = vmul.f32 %v1588, %v912
    %v1591 = vmul.f32 %v1588, %v913
    %v1592 = vadd.f32 %v1584, %v1589
    %v1593 = vadd.f32 %v1585, %v1590
    %v1594 = vadd.f32 %v1586, %v1591
    %s1595 = sld [smem:[#allocation2 + $0x5c]]
    %v1596 = vstv %s1595
    %v1597 = vmul.f32 %v1596, %v979
    %v1598 = vmul.f32 %v1596, %v980
    %v1599 = vmul.f32 %v1596, %v981
    %v1600 = vadd.f32 %v1592, %v1597
    %v1601 = vadd.f32 %v1593, %v1598
    %v1602 = vadd.f32 %v1594, %v1599
    %s1603 = sld [smem:[#allocation2 + $0x5d]]
    %v1604 = vstv %s1603
    %v1605 = vmul.f32 %v1604, %v1047
    %v1606 = vmul.f32 %v1604, %v1048
    %v1607 = vmul.f32 %v1604, %v1049
    %v1608 = vadd.f32 %v1600, %v1605
    %v1609 = vadd.f32 %v1601, %v1606
    %v1610 = vadd.f32 %v1602, %v1607
    %s1611 = sld [smem:[#allocation2 + $0x5e]]
    %v1612 = vstv %s1611
    %v1613 = vmul.f32 %v1612, %v1115
    %v1614 = vmul.f32 %v1612, %v1116
    %v1615 = vmul.f32 %v1612, %v1117
    %v1616 = vadd.f32 %v1608, %v1613
    %v1617 = vadd.f32 %v1609, %v1614
    %v1618 = vadd.f32 %v1610, %v1615
    %s1619 = sld [smem:[#allocation2 + $0x5f]]
    %v1620 = vstv %s1619
    %v1621 = vmul.f32 %v1620, %v1183
    %v1622 = vmul.f32 %v1620, %v1184
    %v1623 = vmul.f32 %v1620, %v1185
    %v1624 = vadd.f32 %v1616, %v1621
    %v1625 = vadd.f32 %v1617, %v1622
    %v1626 = vadd.f32 %v1618, %v1623
    %s1627 = sld [smem:[#allocation2 + $0x63]]
    %v1628 = vstv %s1627
    %v1629 = vadd.f32 %v1624, %v1628
    %v1630 = vadd.f32 %v1625, %v1628
    %v1631 = vadd.f32 %v1626, %v1628
    %vm1632 = vcmp.gt.f32.partialorder %v1629, 0.0
    %vm1633 = vcmp.gt.f32.partialorder %v1630, 0.0
    %vm1634 = vcmp.gt.f32.partialorder %v1631, 0.0
    %v1635 = vmin.f32 %v1629, 0.0
    %v1636 = vmin.f32 %v1630, 0.0
    %v1637 = vmin.f32 %v1631, 0.0
    %v1638 = vmul.f32 %v1635, 1.442695
    %v1639 = vpow.pop %v1638
    %v1640 = vmul.f32 %v1636, 1.442695
    %v1641 = vpow.pop %v1640
    %v1642 = vmul.f32 %v1637, 1.442695
    %v1643 = vpow.pop %v1642
    %v1644 = vsub.f32 %v1639, 1.0
    %v1645 = vsub.f32 %v1641, 1.0
    %v1646 = vsub.f32 %v1643, 1.0
    %v1647 = vsel %vm1632, %v1629, %v1644
    %v1648 = vsel %vm1633, %v1630, %v1645
    %v1649 = vsel %vm1634, %v1631, %v1646
    %v1650 = vsel %vm367, %v1299, 0.0
    %1651 = vadd.xlane.f32.xlu0 %v1650
    %v1652 = vpop.xlane.xlu0 %1651
    %v1653 = vsel %vm367, %v1300, 0.0
    %1654 = vadd.xlane.f32.xlu0 %v1653
    %v1655 = vpop.xlane.xlu0 %1654
    %v1656 = vsel %vm374, %v1301, 0.0
    %1657 = vadd.xlane.f32.xlu0 %v1656
    %v1658 = vpop.xlane.xlu0 %1657
    %v1659 = vadd.f32 %v1652, %v1655
    %v1660 = vsel %vm379, %v1658, 0.0
    %v1661 = vadd.f32 %v1659, %v1660
    %v1662 = vrot.slane %v1661, 4
    %v1663 = vadd.f32 %v1661, %v1662
    %v1664 = vrot.slane %v1663, 2
    %v1665 = vadd.f32 %v1663, %v1664
    %v1666 = vrot.slane %v1665, 1
    %v1667 = vadd.f32 %v1665, %v1666
    %v1668 = vmul.f32 %v1299, %v1299
    %v1669 = vmul.f32 %v1300, %v1300
    %v1670 = vmul.f32 %v1301, %v1301
    %v1671 = vsel %vm367, %v1668, 0.0
    %1672 = vadd.xlane.f32.xlu0 %v1671
    %v1673 = vpop.xlane.xlu0 %1672
    %v1674 = vsel %vm367, %v1669, 0.0
    %1675 = vadd.xlane.f32.xlu0 %v1674
    %v1676 = vpop.xlane.xlu0 %1675
    %v1677 = vsel %vm374, %v1670, 0.0
    %1678 = vadd.xlane.f32.xlu0 %v1677
    %v1679 = vpop.xlane.xlu0 %1678
    %v1680 = vadd.f32 %v1673, %v1676
    %v1681 = vsel %vm379, %v1679, 0.0
    %v1682 = vadd.f32 %v1680, %v1681
    %v1683 = vrot.slane %v1682, 4
    %v1684 = vadd.f32 %v1682, %v1683
    %v1685 = vrot.slane %v1684, 2
    %v1686 = vadd.f32 %v1684, %v1685
    %v1687 = vrot.slane %v1686, 1
    %v1688 = vadd.f32 %v1686, %v1687
    %v1689 = vmul.f32 %v1667, 0.0069444445
    %v1690 = vmul.f32 %v1688, 0.0069444445
    %v1691 = vmul.f32 %v1689, %v1689
    %v1692 = vsub.f32 %v1690, %v1691
    %v1693 = vmax.f32 %v1692, 0.0
    %v1694 = vadd.f32 %v1693, 1e-05
    %v1695 = vrsqrt.pop %v1694
    %v1696 = vmul.f32 %v1695, %v1694
    %v1697 = vmul.f32 %v1696, %v1695
    %v1698 = vmul.f32 0.5, %v1697
    %v1699 = vsub.f32 1.5, %v1698
    %v1700 = vmul.f32 %v1695, %v1699
    %vm1701 = vweird.f32 %v1694
    %vm1702 = vweird.f32 %v1695
    %vm1703 = vmor %vm1701, %vm1702
    %v1704 = vsel %vm1703, %v1695, %v1700
    %s1705 = sld [smem:[#allocation2 + $0x64]]
    %v1706 = vstv %s1705
    %v1707 = vmul.f32 %v1704, %v1706
    %s1708 = sld [smem:[#allocation2 + $0x68]]
    %v1709 = vmul.f32 %v1689, %v1707
    %v1710 = vstv %s1708
    %v1711 = vsub.f32 %v1710, %v1709
    %v1712 = vmul.f32 %v1299, %v1707
    %v1713 = vmul.f32 %v1300, %v1707
    %v1714 = vmul.f32 %v1301, %v1707
    %v1715 = vadd.f32 %v1712, %v1711
    %v1716 = vadd.f32 %v1713, %v1711
    %v1717 = vadd.f32 %v1714, %v1711
    %v1718 = vsel %vm367, %v1415, 0.0
    %1719 = vadd.xlane.f32.xlu0 %v1718
    %v1720 = vpop.xlane.xlu0 %1719
    %v1721 = vsel %vm367, %v1416, 0.0
    %1722 = vadd.xlane.f32.xlu0 %v1721
    %v1723 = vpop.xlane.xlu0 %1722
    %v1724 = vsel %vm374, %v1417, 0.0
    %1725 = vadd.xlane.f32.xlu0 %v1724
    %v1726 = vpop.xlane.xlu0 %1725
    %v1727 = vadd.f32 %v1720, %v1723
    %v1728 = vsel %vm379, %v1726, 0.0
    %v1729 = vadd.f32 %v1727, %v1728
    %v1730 = vrot.slane %v1729, 4
    %v1731 = vadd.f32 %v1729, %v1730
    %v1732 = vrot.slane %v1731, 2
    %v1733 = vadd.f32 %v1731, %v1732
    %v1734 = vrot.slane %v1733, 1
    %v1735 = vadd.f32 %v1733, %v1734
    %v1736 = vmul.f32 %v1415, %v1415
    %v1737 = vmul.f32 %v1416, %v1416
    %v1738 = vmul.f32 %v1417, %v1417
    %v1739 = vsel %vm367, %v1736, 0.0
    %1740 = vadd.xlane.f32.xlu0 %v1739
    %v1741 = vpop.xlane.xlu0 %1740
    %v1742 = vsel %vm367, %v1737, 0.0
    %1743 = vadd.xlane.f32.xlu0 %v1742
    %v1744 = vpop.xlane.xlu0 %1743
    %v1745 = vsel %vm374, %v1738, 0.0
    %1746 = vadd.xlane.f32.xlu0 %v1745
    %v1747 = vpop.xlane.xlu0 %1746
    %v1748 = vadd.f32 %v1741, %v1744
    %v1749 = vsel %vm379, %v1747, 0.0
    %v1750 = vadd.f32 %v1748, %v1749
    %v1751 = vrot.slane %v1750, 4
    %v1752 = vadd.f32 %v1750, %v1751
    %v1753 = vrot.slane %v1752, 2
    %v1754 = vadd.f32 %v1752, %v1753
    %v1755 = vrot.slane %v1754, 1
    %v1756 = vadd.f32 %v1754, %v1755
    %v1757 = vmul.f32 %v1735, 0.0069444445
    %v1758 = vmul.f32 %v1756, 0.0069444445
    %v1759 = vmul.f32 %v1757, %v1757
    %v1760 = vsub.f32 %v1758, %v1759
    %v1761 = vmax.f32 %v1760, 0.0
    %v1762 = vadd.f32 %v1761, 1e-05
    %v1763 = vrsqrt.pop %v1762
    %v1764 = vmul.f32 %v1763, %v1762
    %v1765 = vmul.f32 %v1764, %v1763
    %v1766 = vmul.f32 0.5, %v1765
    %v1767 = vsub.f32 1.5, %v1766
    %v1768 = vmul.f32 %v1763, %v1767
    %vm1769 = vweird.f32 %v1762
    %vm1770 = vweird.f32 %v1763
    %vm1771 = vmor %vm1769, %vm1770
    %v1772 = vsel %vm1771, %v1763, %v1768
    %s1773 = sld [smem:[#allocation2 + $0x65]]
    %v1774 = vstv %s1773
    %v1775 = vmul.f32 %v1772, %v1774
    %s1776 = sld [smem:[#allocation2 + $0x69]]
    %v1777 = vmul.f32 %v1757, %v1775
    %v1778 = vstv %s1776
    %v1779 = vsub.f32 %v1778, %v1777
    %v1780 = vmul.f32 %v1415, %v1775
    %v1781 = vmul.f32 %v1416, %v1775
    %v1782 = vmul.f32 %v1417, %v1775
    %v1783 = vadd.f32 %v1780, %v1779
    %v1784 = vadd.f32 %v1781, %v1779
    %v1785 = vadd.f32 %v1782, %v1779
    %v1786 = vsel %vm367, %v1531, 0.0
    %1787 = vadd.xlane.f32.xlu0 %v1786
    %v1788 = vpop.xlane.xlu0 %1787
    %v1789 = vsel %vm367, %v1532, 0.0
    %1790 = vadd.xlane.f32.xlu0 %v1789
    %v1791 = vpop.xlane.xlu0 %1790
    %v1792 = vsel %vm374, %v1533, 0.0
    %1793 = vadd.xlane.f32.xlu0 %v1792
    %v1794 = vpop.xlane.xlu0 %1793
    %v1795 = vadd.f32 %v1788, %v1791
    %v1796 = vsel %vm379, %v1794, 0.0
    %v1797 = vadd.f32 %v1795, %v1796
    %v1798 = vrot.slane %v1797, 4
    %v1799 = vadd.f32 %v1797, %v1798
    %v1800 = vrot.slane %v1799, 2
    %v1801 = vadd.f32 %v1799, %v1800
    %v1802 = vrot.slane %v1801, 1
    %v1803 = vadd.f32 %v1801, %v1802
    %v1804 = vmul.f32 %v1531, %v1531
    %v1805 = vmul.f32 %v1532, %v1532
    %v1806 = vmul.f32 %v1533, %v1533
    %v1807 = vsel %vm367, %v1804, 0.0
    %1808 = vadd.xlane.f32.xlu0 %v1807
    %v1809 = vpop.xlane.xlu0 %1808
    %v1810 = vsel %vm367, %v1805, 0.0
    %1811 = vadd.xlane.f32.xlu0 %v1810
    %v1812 = vpop.xlane.xlu0 %1811
    %v1813 = vsel %vm374, %v1806, 0.0
    %1814 = vadd.xlane.f32.xlu0 %v1813
    %v1815 = vpop.xlane.xlu0 %1814
    %v1816 = vadd.f32 %v1809, %v1812
    %v1817 = vsel %vm379, %v1815, 0.0
    %v1818 = vadd.f32 %v1816, %v1817
    %v1819 = vrot.slane %v1818, 4
    %v1820 = vadd.f32 %v1818, %v1819
    %v1821 = vrot.slane %v1820, 2
    %v1822 = vadd.f32 %v1820, %v1821
    %v1823 = vrot.slane %v1822, 1
    %v1824 = vadd.f32 %v1822, %v1823
    %v1825 = vmul.f32 %v1803, 0.0069444445
    %v1826 = vmul.f32 %v1824, 0.0069444445
    %v1827 = vmul.f32 %v1825, %v1825
    %v1828 = vsub.f32 %v1826, %v1827
    %v1829 = vmax.f32 %v1828, 0.0
    %v1830 = vadd.f32 %v1829, 1e-05
    %v1831 = vrsqrt.pop %v1830
    %v1832 = vmul.f32 %v1831, %v1830
    %v1833 = vmul.f32 %v1832, %v1831
    %v1834 = vmul.f32 0.5, %v1833
    %v1835 = vsub.f32 1.5, %v1834
    %v1836 = vmul.f32 %v1831, %v1835
    %vm1837 = vweird.f32 %v1830
    %vm1838 = vweird.f32 %v1831
    %vm1839 = vmor %vm1837, %vm1838
    %v1840 = vsel %vm1839, %v1831, %v1836
    %s1841 = sld [smem:[#allocation2 + $0x66]]
    %v1842 = vstv %s1841
    %v1843 = vmul.f32 %v1840, %v1842
    %s1844 = sld [smem:[#allocation2 + $0x6a]]
    %v1845 = vmul.f32 %v1825, %v1843
    %v1846 = vstv %s1844
    %v1847 = vsub.f32 %v1846, %v1845
    %v1848 = vmul.f32 %v1531, %v1843
    %v1849 = vmul.f32 %v1532, %v1843
    %v1850 = vmul.f32 %v1533, %v1843
    %v1851 = vadd.f32 %v1848, %v1847
    %v1852 = vadd.f32 %v1849, %v1847
    %v1853 = vadd.f32 %v1850, %v1847
    %v1854 = vsel %vm367, %v1647, 0.0
    %1855 = vadd.xlane.f32.xlu0 %v1854
    %v1856 = vpop.xlane.xlu0 %1855
    %v1857 = vsel %vm367, %v1648, 0.0
    %1858 = vadd.xlane.f32.xlu0 %v1857
    %v1859 = vpop.xlane.xlu0 %1858
    %v1860 = vsel %vm374, %v1649, 0.0
    %1861 = vadd.xlane.f32.xlu0 %v1860
    %v1862 = vpop.xlane.xlu0 %1861
    %v1863 = vadd.f32 %v1856, %v1859
    %v1864 = vsel %vm379, %v1862, 0.0
    %v1865 = vadd.f32 %v1863, %v1864
    %v1866 = vrot.slane %v1865, 4
    %v1867 = vadd.f32 %v1865, %v1866
    %v1868 = vrot.slane %v1867, 2
    %v1869 = vadd.f32 %v1867, %v1868
    %v1870 = vrot.slane %v1869, 1
    %v1871 = vadd.f32 %v1869, %v1870
    %v1872 = vmul.f32 %v1647, %v1647
    %v1873 = vmul.f32 %v1648, %v1648
    %v1874 = vmul.f32 %v1649, %v1649
    %v1875 = vsel %vm367, %v1872, 0.0
    %1876 = vadd.xlane.f32.xlu0 %v1875
    %v1877 = vpop.xlane.xlu0 %1876
    %v1878 = vsel %vm367, %v1873, 0.0
    %1879 = vadd.xlane.f32.xlu0 %v1878
    %v1880 = vpop.xlane.xlu0 %1879
    %v1881 = vsel %vm374, %v1874, 0.0
    %1882 = vadd.xlane.f32.xlu0 %v1881
    %v1883 = vpop.xlane.xlu0 %1882
    %v1884 = vadd.f32 %v1877, %v1880
    %v1885 = vsel %vm379, %v1883, 0.0
    %v1886 = vadd.f32 %v1884, %v1885
    %v1887 = vrot.slane %v1886, 4
    %v1888 = vadd.f32 %v1886, %v1887
    %v1889 = vrot.slane %v1888, 2
    %v1890 = vadd.f32 %v1888, %v1889
    %v1891 = vrot.slane %v1890, 1
    %v1892 = vadd.f32 %v1890, %v1891
    %v1893 = vmul.f32 %v1871, 0.0069444445
    %v1894 = vmul.f32 %v1892, 0.0069444445
    %v1895 = vmul.f32 %v1893, %v1893
    %v1896 = vsub.f32 %v1894, %v1895
    %v1897 = vmax.f32 %v1896, 0.0
    %v1898 = vadd.f32 %v1897, 1e-05
    %v1899 = vrsqrt.pop %v1898
    %v1900 = vmul.f32 %v1899, %v1898
    %v1901 = vmul.f32 %v1900, %v1899
    %v1902 = vmul.f32 0.5, %v1901
    %v1903 = vsub.f32 1.5, %v1902
    %v1904 = vmul.f32 %v1899, %v1903
    %vm1905 = vweird.f32 %v1898
    %vm1906 = vweird.f32 %v1899
    %vm1907 = vmor %vm1905, %vm1906
    %v1908 = vsel %vm1907, %v1899, %v1904
    %s1909 = sld [smem:[#allocation2 + $0x67]]
    %v1910 = vstv %s1909
    %v1911 = vmul.f32 %v1908, %v1910
    %s1912 = sld [smem:[#allocation2 + $0x6b]]
    %v1913 = vmul.f32 %v1893, %v1911
    %v1914 = vstv %s1912
    %v1915 = vsub.f32 %v1914, %v1913
    %v1916 = vmul.f32 %v1647, %v1911
    %v1917 = vmul.f32 %v1648, %v1911
    %v1918 = vmul.f32 %v1649, %v1911
    %v1919 = vadd.f32 %v1916, %v1915
    %v1920 = vadd.f32 %v1917, %v1915
    %v1921 = vadd.f32 %v1918, %v1915
    %v1922 = vld [vmem:[%s2] sm:$0xff]
    %v1923 = vld [vmem:[%s2 + $0x8] sm:$0xff]
    %v1924 = vld [vmem:[%s2 + $0x10] sm:$0x3]
    %1926 = vset.pattern.permute.xlu0 0
    %1927 = vperm.xlu0 %1926, %v1922
    %v1928 = vpop.permute.xlu0 %1927
    %1931 = vset.pattern.permute.xlu0 0
    %1932 = vperm.xlu0 %1931, %v1923
    %v1933 = vpop.permute.xlu0 %1932
    %1936 = vset.pattern.permute.xlu0 0
    %1937 = vperm.xlu0 %1936, %v1924
    %v1938 = vpop.permute.xlu0 %1937
    %v1940 = vmul.f32 %v1715, %v1928
    %v1941 = vmul.f32 %v1716, %v1933
    %v1942 = vmul.f32 %v1717, %v1938
    %v1943 = vsel %vm367, %v1940, 0.0
    %v1944 = vsel %vm367, %v1941, 0.0
    %v1945 = vadd.f32 %v1943, %v1944
    %v1946 = vsel %vm374, %v1942, 0.0
    %v1947 = vadd.f32 %v1945, %v1946
    %v1948 = vrot.slane %v1947, 4
    %v1949 = vadd.f32 %v1947, %v1948
    %v1950 = vrot.slane %v1949, 2
    %v1951 = vadd.f32 %v1949, %v1950
    %v1952 = vrot.slane %v1951, 1
    %v1953 = vadd.f32 %v1951, %v1952
    %1954 = vset.pattern.permute.xlu0 1
    %1955 = vperm.xlu0 %1954, %v1922
    %v1956 = vpop.permute.xlu0 %1955
    %1958 = vset.pattern.permute.xlu0 1
    %1959 = vperm.xlu0 %1958, %v1923
    %v1960 = vpop.permute.xlu0 %1959
    %1962 = vset.pattern.permute.xlu0 1
    %1963 = vperm.xlu0 %1962, %v1924
    %v1964 = vpop.permute.xlu0 %1963
    %v1966 = vmul.f32 %v1783, %v1956
    %v1967 = vmul.f32 %v1784, %v1960
    %v1968 = vmul.f32 %v1785, %v1964
    %v1969 = vsel %vm367, %v1966, 0.0
    %v1970 = vsel %vm367, %v1967, 0.0
    %v1971 = vadd.f32 %v1969, %v1970
    %v1972 = vsel %vm374, %v1968, 0.0
    %v1973 = vadd.f32 %v1971, %v1972
    %v1974 = vrot.slane %v1973, 4
    %v1975 = vadd.f32 %v1973, %v1974
    %v1976 = vrot.slane %v1975, 2
    %v1977 = vadd.f32 %v1975, %v1976
    %v1978 = vrot.slane %v1977, 1
    %v1979 = vadd.f32 %v1977, %v1978
    %v1980 = vadd.f32 %v1953, %v1979
    %1981 = vset.pattern.permute.xlu0 2
    %1982 = vperm.xlu0 %1981, %v1922
    %v1983 = vpop.permute.xlu0 %1982
    %1985 = vset.pattern.permute.xlu0 2
    %1986 = vperm.xlu0 %1985, %v1923
    %v1987 = vpop.permute.xlu0 %1986
    %1989 = vset.pattern.permute.xlu0 2
    %1990 = vperm.xlu0 %1989, %v1924
    %v1991 = vpop.permute.xlu0 %1990
    %v1993 = vmul.f32 %v1851, %v1983
    %v1994 = vmul.f32 %v1852, %v1987
    %v1995 = vmul.f32 %v1853, %v1991
    %v1996 = vsel %vm367, %v1993, 0.0
    %v1997 = vsel %vm367, %v1994, 0.0
    %v1998 = vadd.f32 %v1996, %v1997
    %v1999 = vsel %vm374, %v1995, 0.0
    %v2000 = vadd.f32 %v1998, %v1999
    %v2001 = vrot.slane %v2000, 4
    %v2002 = vadd.f32 %v2000, %v2001
    %v2003 = vrot.slane %v2002, 2
    %v2004 = vadd.f32 %v2002, %v2003
    %v2005 = vrot.slane %v2004, 1
    %v2006 = vadd.f32 %v2004, %v2005
    %v2007 = vadd.f32 %v1980, %v2006
    %2008 = vset.pattern.permute.xlu0 3
    %2009 = vperm.xlu0 %2008, %v1922
    %v2010 = vpop.permute.xlu0 %2009
    %2012 = vset.pattern.permute.xlu0 3
    %2013 = vperm.xlu0 %2012, %v1923
    %v2014 = vpop.permute.xlu0 %2013
    %2016 = vset.pattern.permute.xlu0 3
    %2017 = vperm.xlu0 %2016, %v1924
    %v2018 = vpop.permute.xlu0 %2017
    %v2020 = vmul.f32 %v1919, %v2010
    %v2021 = vmul.f32 %v1920, %v2014
    %v2022 = vmul.f32 %v1921, %v2018
    %v2023 = vsel %vm367, %v2020, 0.0
    %v2024 = vsel %vm367, %v2021, 0.0
    %v2025 = vadd.f32 %v2023, %v2024
    %v2026 = vsel %vm374, %v2022, 0.0
    %v2027 = vadd.f32 %v2025, %v2026
    %v2028 = vrot.slane %v2027, 4
    %v2029 = vadd.f32 %v2027, %v2028
    %v2030 = vrot.slane %v2029, 2
    %v2031 = vadd.f32 %v2029, %v2030
    %v2032 = vrot.slane %v2031, 1
    %v2033 = vadd.f32 %v2031, %v2032
    %v2034 = vadd.f32 %v2007, %v2033
    %s2035 = sld [smem:[#allocation2 + $0x6c]]
    %v2036 = vstv %s2035
    %v2037 = vadd.f32 %v2034, %v2036
    %v2038 = vxor.u32 %v2037, 2147483648
    %v2039 = vmul.f32 %v2038, 1.442695
    %v2040 = vpow.pop %v2039
    %v2041 = vadd.f32 %v2040, 1.0
    %v2042 = vrcp.pop %v2041
    %v2043 = vmul.f32 %v2041, %v2042
    %v2044 = vsub.f32 1.0, %v2043
    %v2045 = vmul.f32 %v2042, %v2044
    %v2046 = vadd.f32 %v2042, %v2045
    %vm2047 = vweird.f32 %v2041
    %vm2048 = vweird.f32 %v2042
    %vm2049 = vmor %vm2047, %vm2048
    %v2050 = vsel %vm2049, %v2042, %v2046
    %v2051 = vand.u32 2147483647, %v2041
    %vm2052 = vcmp.eq.f32.partialorder %v2051, 8.507059e+37
    %v2053 = vand.u32 %v2041, 2147483648
    %v2054 = vor.u32 1.1754944e-38, %v2053
    %v2055 = vsel %vm2052, %v2054, %v2050
    %v2056 = vmul.f32 1.0, %v2055
    %vm2057 = vcmask 57344
    %2058 = vst.msk [vmem:[#allocation5] sm:$0x1] %vm2057, %v2056
    // Predicated region
    $region18: #{tpu_custom_call.1} parent=1 // pred_check
      _
    $region19: #{tpu_custom_call.1} parent=1 // pred_check_branch
      %2060 = sbr.rel (0) target = $region21
    $region20: #{tpu_custom_call.1} parent=1 // pred_region
      %2062 = vsyncadd [#allocation3], 0
      %s2064 = sshll.u32 [#allocation5], 4
      %s2065 = int_to_ptr.vmem [resolvable:$true] %s2064
      %s2066 = sshll.u32 %s3, 4
      %s2067 = int_to_ptr.hbm [resolvable:$true] %s2066
      %2069 = dma.vmem_to_hbm [thread:$0]  %s2065, 16, %s2067, [#allocation3]
    $region21: #{tpu_custom_call.1} parent=1 // pred_fallthru
      _
    // Predicated region
    $region22: #{tpu_custom_call.1} parent=1 // pred_check
      _
    $region23: #{tpu_custom_call.1} parent=1 // pred_check_branch
      %2071 = sbr.rel (0) target = $region25
    $region24: #{tpu_custom_call.1} parent=1 // pred_region
      %2073 = dma.done [#allocation3], 16
    $region25: #{tpu_custom_call.1} parent=1 // pred_fallthru
      _
    %2074 = vsyncpa [#allocation3], 1
    %2075 = vsyncpa [#allocation4], 1

</llo_original>
